<compile_context>
chip_gen: v5e
topology: v5e:2x2
jax: 0.10.0
libtpu: 0.0.40
codegen_flags: <defaults>
</compile_context>

<pallas_src>
import jax
import jax.numpy as jnp
from jax.experimental import pallas as pl
from jax.experimental.pallas import tpu as pltpu

EPS = 1e-5


def resblock_kernel(x_ref, w1t_ref, w2t_ref, g1_ref, b1_ref, g2_ref, b2_ref,
                    o_ref, h_ref):
    """x_ref: (N, C, L) f32 NCL. w*t_ref: (Cout, 3*Cin). g/b: (C, 1).
    o_ref: (N, C, L). h_ref: (N, C, L) VMEM scratch (holds h1, then h2)."""
    N, C, L = x_ref.shape
    inv_cnt = 1.0 / float(N * L)

    # Boundary masks for the 'same' padding, computed once (L on lanes).
    lane = jax.lax.broadcasted_iota(jnp.int32, (C, L), 1)
    m_prev = lane >= 1           # valid positions for the x[l-1] tap
    m_next = lane <= L - 2       # valid positions for the x[l+1] tap

    w1t = w1t_ref[...]
    w2t = w2t_ref[...]

    def conv3(x_cl, wt):
        # x_cl: (C, L); wt: (Cout, 3C). Taps roll along the lane axis, so they
        # never cross samples. im2col rows are tap-major: [k=0 | k=1 | k=2].
        x_m1 = jnp.where(m_prev, pltpu.roll(x_cl, shift=1, axis=1), 0.0)      # x[l-1]
        x_p1 = jnp.where(m_next, pltpu.roll(x_cl, shift=L - 1, axis=1), 0.0)  # x[l+1]
        x_cat = jnp.concatenate([x_m1, x_cl, x_p1], axis=0)                   # (3C, L)
        return jnp.dot(wt, x_cat, preferred_element_type=jnp.float32)         # (Cout, L)

    # ---- Pass A: conv1 for every sample; accumulate BN1 per-channel stats. ----
    s1 = jnp.zeros((C, 1), jnp.float32)
    ss1 = jnp.zeros((C, 1), jnp.float32)
    for n in range(N):
        h = conv3(x_ref[n], w1t)
        h_ref[n] = h
        s1 = s1 + jnp.sum(h, axis=1, keepdims=True)
        ss1 = ss1 + jnp.sum(h * h, axis=1, keepdims=True)
    mu1 = s1 * inv_cnt
    var1 = ss1 * inv_cnt - mu1 * mu1          # one-pass (fine for standardized data)
    sc1 = g1_ref[...] * jax.lax.rsqrt(var1 + EPS)
    bi1 = b1_ref[...] - mu1 * sc1

    # ---- Pass B: bn1 (folded FMA) + ReLU + conv2; accumulate BN2 stats. ----
    s2 = jnp.zeros((C, 1), jnp.float32)
    ss2 = jnp.zeros((C, 1), jnp.float32)
    for n in range(N):
        a = jnp.maximum(h_ref[n] * sc1 + bi1, 0.0)
        h = conv3(a, w2t)
        h_ref[n] = h                           # overwrite h1[n] with h2[n]
        s2 = s2 + jnp.sum(h, axis=1, keepdims=True)
        ss2 = ss2 + jnp.sum(h * h, axis=1, keepdims=True)
    mu2 = s2 * inv_cnt
    var2 = ss2 * inv_cnt - mu2 * mu2
    sc2 = g2_ref[...] * jax.lax.rsqrt(var2 + EPS)
    bi2 = b2_ref[...] - mu2 * sc2

    # ---- Pass C: bn2 (folded FMA) + residual add + ReLU. ----
    for n in range(N):
        o_ref[n] = jnp.maximum(h_ref[n] * sc2 + bi2 + x_ref[n], 0.0)


def resblock_forward(x_ncl, w1, w2, g1, b1, g2, b2):
    """x_ncl: (N, C, L) float32 (PyTorch layout). Returns (N, C, L)."""
    N, C, L = x_ncl.shape
    # Conv weights stored as (3, Cin, Cout). Pre-reshape to (Cout, 3*Cin),
    # tap-major columns, so the in-kernel conv is a single (Cout,3C)x(3C,L) matmul.
    w1t = jnp.transpose(w1.reshape(3 * C, C))
    w2t = jnp.transpose(w2.reshape(3 * C, C))
    g1c, b1c = g1.reshape(C, 1), b1.reshape(C, 1)
    g2c, b2c = g2.reshape(C, 1), b2.reshape(C, 1)

    vmem = pl.BlockSpec(memory_space=pltpu.MemorySpace.VMEM)
    flops = 2 * (2 * N * L * (3 * C) * C)                       # two convs
    bytes_accessed = 4 * (2 * N * C * L + 2 * 3 * C * C + 4 * C)

    return pl.pallas_call(
        resblock_kernel,
        out_shape=jax.ShapeDtypeStruct((N, C, L), jnp.float32),
        in_specs=[vmem] * 7,
        out_specs=vmem,
        scratch_shapes=[pltpu.VMEM((N, C, L), jnp.float32)],
        cost_estimate=pl.CostEstimate(flops=flops, transcendentals=2 * C,
                                      bytes_accessed=bytes_accessed),
    )(x_ncl, w1t, w2t, g1c, b1c, g2c, b2c)


def resblock_ref(x_ncl, w1, w2, g1, b1, g2, b2):
    """Pure-JAX reference (NCL layout), mirrors the PyTorch forward."""
    def conv(x, w):                          # w: (3, Cin, Cout) -> (Cout, Cin, 3)
        w_oik = jnp.transpose(w, (2, 1, 0))
        return jax.lax.conv_general_dilated(
            x, w_oik, window_strides=(1,), padding=[(1, 1)],
            dimension_numbers=("NCH", "OIH", "NCH"),
            precision=jax.lax.Precision.HIGHEST)

    def bn(y, gamma, beta):
        mu = jnp.mean(y, axis=(0, 2), keepdims=True)
        var = jnp.mean(jnp.square(y - mu), axis=(0, 2), keepdims=True)
        return (y - mu) / jnp.sqrt(var + EPS) * gamma.reshape(1, -1, 1) + beta.reshape(1, -1, 1)

    h = jnp.maximum(bn(conv(x_ncl, w1), g1, b1), 0.0)
    h = bn(conv(h, w2), g2, b2)
    return jnp.maximum(h + x_ncl, 0.0)


if __name__ == "__main__":
    # Module defaults imply inplanes = planes = 128 (lane-dense channel dim).
    N, C, L = 4, 128, 128
    key = jax.random.PRNGKey(0)
    kx, kw1, kw2, kg1, kb1, kg2, kb2 = jax.random.split(key, 7)

    x = jax.random.normal(kx, (N, C, L), dtype=jnp.float32)
    # Conv weights stored as (3, Cin, Cout) == PyTorch (Cout, Cin, 3) transposed.
    w1 = jax.random.normal(kw1, (3, C, C), dtype=jnp.float32) * 0.1
    w2 = jax.random.normal(kw2, (3, C, C), dtype=jnp.float32) * 0.1
    g1 = 1.0 + 0.1 * jax.random.normal(kg1, (C,), dtype=jnp.float32)
    b1 = 0.1 * jax.random.normal(kb1, (C,), dtype=jnp.float32)
    g2 = 1.0 + 0.1 * jax.random.normal(kg2, (C,), dtype=jnp.float32)
    b2 = 0.1 * jax.random.normal(kb2, (C,), dtype=jnp.float32)

    out = jax.block_until_ready(resblock_forward(x, w1, w2, g1, b1, g2, b2))
    ref = jax.block_until_ready(resblock_ref(x, w1, w2, g1, b1, g2, b2))

    assert out.shape == (N, C, L)
    assert jnp.allclose(out, ref, atol=5e-4, rtol=5e-4), "mismatch vs JAX reference"
    print("KERNEL_OK")
</pallas_src>

<mosaic_0001>
module attributes {stable_mosaic.version = 11 : i64} {
  func.func @resblock_kernel(%arg0: memref<4x128x128xf32, #tpu.memory_space<vmem>>, %arg1: memref<128x384xf32, #tpu.memory_space<vmem>>, %arg2: memref<128x384xf32, #tpu.memory_space<vmem>>, %arg3: memref<128x1xf32, #tpu.memory_space<vmem>>, %arg4: memref<128x1xf32, #tpu.memory_space<vmem>>, %arg5: memref<128x1xf32, #tpu.memory_space<vmem>>, %arg6: memref<128x1xf32, #tpu.memory_space<vmem>>, %arg7: memref<4x128x128xf32, #tpu.memory_space<vmem>>, %arg8: memref<4x128x128xf32, #tpu.memory_space<vmem>>) attributes {dimension_semantics = [], scalar_prefetch = 0 : i64, scratch_operands = 1 : i64, tpu.core_type = #tpu.core_type<tc>} {
    %0 = tpu.iota {dimensions = array<i32: 1>} : vector<128x128xi32>
    %c1_i32 = arith.constant 1 : i32
    %1 = vector.broadcast %c1_i32 : i32 to vector<128x128xi32>
    %2 = arith.cmpi sge, %0, %1 : vector<128x128xi32>
    %c126_i32 = arith.constant 126 : i32
    %3 = vector.broadcast %c126_i32 : i32 to vector<128x128xi32>
    %4 = arith.cmpi sle, %0, %3 : vector<128x128xi32>
    %c0 = arith.constant 0 : index
    %c0_0 = arith.constant 0 : index
    %5 = vector.load %arg1[%c0, %c0_0] : memref<128x384xf32, #tpu.memory_space<vmem>>, vector<128x384xf32>
    %c0_1 = arith.constant 0 : index
    %c0_2 = arith.constant 0 : index
    %6 = vector.load %arg2[%c0_1, %c0_2] : memref<128x384xf32, #tpu.memory_space<vmem>>, vector<128x384xf32>
    %cst = arith.constant 0.000000e+00 : f32
    %7 = vector.broadcast %cst : f32 to vector<128x1xf32>
    %cst_3 = arith.constant 0.000000e+00 : f32
    %8 = vector.broadcast %cst_3 : f32 to vector<128x1xf32>
    %c0_4 = arith.constant 0 : index
    %c0_5 = arith.constant 0 : index
    %c0_6 = arith.constant 0 : index
    %9 = vector.load %arg0[%c0_4, %c0_5, %c0_6] : memref<4x128x128xf32, #tpu.memory_space<vmem>>, vector<1x128x128xf32>
    %10 = vector.shape_cast %9 : vector<1x128x128xf32> to vector<128x128xf32>
    %c1_i32_7 = arith.constant 1 : i32
    %11 = tpu.dynamic_rotate %10 by %c1_i32_7 dim 1 : vector<128x128xf32>, i32 -> vector<128x128xf32>
    %cst_8 = arith.constant 0.000000e+00 : f32
    %12 = vector.broadcast %cst_8 : f32 to vector<128x128xf32>
    %13 = arith.select %2, %11, %12 : vector<128x128xi1>, vector<128x128xf32>
    %c127_i32 = arith.constant 127 : i32
    %14 = tpu.dynamic_rotate %10 by %c127_i32 dim 1 : vector<128x128xf32>, i32 -> vector<128x128xf32>
    %cst_9 = arith.constant 0.000000e+00 : f32
    %15 = vector.broadcast %cst_9 : f32 to vector<128x128xf32>
    %16 = arith.select %4, %14, %15 : vector<128x128xi1>, vector<128x128xf32>
    %17 = tpu.concatenate %13, %10, %16 in 0 : vector<128x128xf32>, vector<128x128xf32>, vector<128x128xf32> -> vector<384x128xf32>
    %cst_10 = arith.constant dense<0.000000e+00> : vector<128x128xf32>
    %18 = tpu.matmul %5, %17, %cst_10 {dimension_numbers = #tpu.dot_dimension_numbers<[1], [0], [0], [1], [0, 0, 1, 1], [], []>} : vector<128x384xf32>, vector<384x128xf32>, vector<128x128xf32> -> vector<128x128xf32>
    %c0_11 = arith.constant 0 : index
    %c0_12 = arith.constant 0 : index
    %c0_13 = arith.constant 0 : index
    %19 = vector.load %arg8[%c0_11, %c0_12, %c0_13] : memref<4x128x128xf32, #tpu.memory_space<vmem>>, vector<1x128x128xf32>
    %20 = vector.shape_cast %19 : vector<1x128x128xf32> to vector<128x128xf32>
    %21 = vector.shape_cast %18 : vector<128x128xf32> to vector<1x128x128xf32>
    tpu.vector_store %arg8[%c0_11, %c0_12, %c0_13], %21 {strides = array<i32>} : memref<4x128x128xf32, #tpu.memory_space<vmem>>, vector<1x128x128xf32>,
    %cst_14 = arith.constant dense<0.000000e+00> : vector<128xf32>
    %22 = vector.multi_reduction <add>, %18, %cst_14 [1] : vector<128x128xf32> to vector<128xf32>
    %23 = vector.shape_cast %22 : vector<128xf32> to vector<128x1xf32>
    %24 = arith.addf %7, %23 : vector<128x1xf32>
    %25 = arith.mulf %18, %18 : vector<128x128xf32>
    %cst_15 = arith.constant dense<0.000000e+00> : vector<128xf32>
    %26 = vector.multi_reduction <add>, %25, %cst_15 [1] : vector<128x128xf32> to vector<128xf32>
    %27 = vector.shape_cast %26 : vector<128xf32> to vector<128x1xf32>
    %28 = arith.addf %8, %27 : vector<128x1xf32>
    %c1 = arith.constant 1 : index
    %c0_16 = arith.constant 0 : index
    %c0_17 = arith.constant 0 : index
    %29 = vector.load %arg0[%c1, %c0_16, %c0_17] : memref<4x128x128xf32, #tpu.memory_space<vmem>>, vector<1x128x128xf32>
    %30 = vector.shape_cast %29 : vector<1x128x128xf32> to vector<128x128xf32>
    %c1_i32_18 = arith.constant 1 : i32
    %31 = tpu.dynamic_rotate %30 by %c1_i32_18 dim 1 : vector<128x128xf32>, i32 -> vector<128x128xf32>
    %cst_19 = arith.constant 0.000000e+00 : f32
    %32 = vector.broadcast %cst_19 : f32 to vector<128x128xf32>
    %33 = arith.select %2, %31, %32 : vector<128x128xi1>, vector<128x128xf32>
    %c127_i32_20 = arith.constant 127 : i32
    %34 = tpu.dynamic_rotate %30 by %c127_i32_20 dim 1 : vector<128x128xf32>, i32 -> vector<128x128xf32>
    %cst_21 = arith.constant 0.000000e+00 : f32
    %35 = vector.broadcast %cst_21 : f32 to vector<128x128xf32>
    %36 = arith.select %4, %34, %35 : vector<128x128xi1>, vector<128x128xf32>
    %37 = tpu.concatenate %33, %30, %36 in 0 : vector<128x128xf32>, vector<128x128xf32>, vector<128x128xf32> -> vector<384x128xf32>
    %cst_22 = arith.constant dense<0.000000e+00> : vector<128x128xf32>
    %38 = tpu.matmul %5, %37, %cst_22 {dimension_numbers = #tpu.dot_dimension_numbers<[1], [0], [0], [1], [0, 0, 1, 1], [], []>} : vector<128x384xf32>, vector<384x128xf32>, vector<128x128xf32> -> vector<128x128xf32>
    %c1_23 = arith.constant 1 : index
    %c0_24 = arith.constant 0 : index
    %c0_25 = arith.constant 0 : index
    %39 = vector.load %arg8[%c1_23, %c0_24, %c0_25] : memref<4x128x128xf32, #tpu.memory_space<vmem>>, vector<1x128x128xf32>
    %40 = vector.shape_cast %39 : vector<1x128x128xf32> to vector<128x128xf32>
    %41 = vector.shape_cast %38 : vector<128x128xf32> to vector<1x128x128xf32>
    tpu.vector_store %arg8[%c1_23, %c0_24, %c0_25], %41 {strides = array<i32>} : memref<4x128x128xf32, #tpu.memory_space<vmem>>, vector<1x128x128xf32>,
    %cst_26 = arith.constant dense<0.000000e+00> : vector<128xf32>
    %42 = vector.multi_reduction <add>, %38, %cst_26 [1] : vector<128x128xf32> to vector<128xf32>
    %43 = vector.shape_cast %42 : vector<128xf32> to vector<128x1xf32>
    %44 = arith.addf %24, %43 : vector<128x1xf32>
    %45 = arith.mulf %38, %38 : vector<128x128xf32>
    %cst_27 = arith.constant dense<0.000000e+00> : vector<128xf32>
    %46 = vector.multi_reduction <add>, %45, %cst_27 [1] : vector<128x128xf32> to vector<128xf32>
    %47 = vector.shape_cast %46 : vector<128xf32> to vector<128x1xf32>
    %48 = arith.addf %28, %47 : vector<128x1xf32>
    %c2 = arith.constant 2 : index
    %c0_28 = arith.constant 0 : index
    %c0_29 = arith.constant 0 : index
    %49 = vector.load %arg0[%c2, %c0_28, %c0_29] : memref<4x128x128xf32, #tpu.memory_space<vmem>>, vector<1x128x128xf32>
    %50 = vector.shape_cast %49 : vector<1x128x128xf32> to vector<128x128xf32>
    %c1_i32_30 = arith.constant 1 : i32
    %51 = tpu.dynamic_rotate %50 by %c1_i32_30 dim 1 : vector<128x128xf32>, i32 -> vector<128x128xf32>
    %cst_31 = arith.constant 0.000000e+00 : f32
    %52 = vector.broadcast %cst_31 : f32 to vector<128x128xf32>
    %53 = arith.select %2, %51, %52 : vector<128x128xi1>, vector<128x128xf32>
    %c127_i32_32 = arith.constant 127 : i32
    %54 = tpu.dynamic_rotate %50 by %c127_i32_32 dim 1 : vector<128x128xf32>, i32 -> vector<128x128xf32>
    %cst_33 = arith.constant 0.000000e+00 : f32
    %55 = vector.broadcast %cst_33 : f32 to vector<128x128xf32>
    %56 = arith.select %4, %54, %55 : vector<128x128xi1>, vector<128x128xf32>
    %57 = tpu.concatenate %53, %50, %56 in 0 : vector<128x128xf32>, vector<128x128xf32>, vector<128x128xf32> -> vector<384x128xf32>
    %cst_34 = arith.constant dense<0.000000e+00> : vector<128x128xf32>
    %58 = tpu.matmul %5, %57, %cst_34 {dimension_numbers = #tpu.dot_dimension_numbers<[1], [0], [0], [1], [0, 0, 1, 1], [], []>} : vector<128x384xf32>, vector<384x128xf32>, vector<128x128xf32> -> vector<128x128xf32>
    %c2_35 = arith.constant 2 : index
    %c0_36 = arith.constant 0 : index
    %c0_37 = arith.constant 0 : index
    %59 = vector.load %arg8[%c2_35, %c0_36, %c0_37] : memref<4x128x128xf32, #tpu.memory_space<vmem>>, vector<1x128x128xf32>
    %60 = vector.shape_cast %59 : vector<1x128x128xf32> to vector<128x128xf32>
    %61 = vector.shape_cast %58 : vector<128x128xf32> to vector<1x128x128xf32>
    tpu.vector_store %arg8[%c2_35, %c0_36, %c0_37], %61 {strides = array<i32>} : memref<4x128x128xf32, #tpu.memory_space<vmem>>, vector<1x128x128xf32>,
    %cst_38 = arith.constant dense<0.000000e+00> : vector<128xf32>
    %62 = vector.multi_reduction <add>, %58, %cst_38 [1] : vector<128x128xf32> to vector<128xf32>
    %63 = vector.shape_cast %62 : vector<128xf32> to vector<128x1xf32>
    %64 = arith.addf %44, %63 : vector<128x1xf32>
    %65 = arith.mulf %58, %58 : vector<128x128xf32>
    %cst_39 = arith.constant dense<0.000000e+00> : vector<128xf32>
    %66 = vector.multi_reduction <add>, %65, %cst_39 [1] : vector<128x128xf32> to vector<128xf32>
    %67 = vector.shape_cast %66 : vector<128xf32> to vector<128x1xf32>
    %68 = arith.addf %48, %67 : vector<128x1xf32>
    %c3 = arith.constant 3 : index
    %c0_40 = arith.constant 0 : index
    %c0_41 = arith.constant 0 : index
    %69 = vector.load %arg0[%c3, %c0_40, %c0_41] : memref<4x128x128xf32, #tpu.memory_space<vmem>>, vector<1x128x128xf32>
    %70 = vector.shape_cast %69 : vector<1x128x128xf32> to vector<128x128xf32>
    %c1_i32_42 = arith.constant 1 : i32
    %71 = tpu.dynamic_rotate %70 by %c1_i32_42 dim 1 : vector<128x128xf32>, i32 -> vector<128x128xf32>
    %cst_43 = arith.constant 0.000000e+00 : f32
    %72 = vector.broadcast %cst_43 : f32 to vector<128x128xf32>
    %73 = arith.select %2, %71, %72 : vector<128x128xi1>, vector<128x128xf32>
    %c127_i32_44 = arith.constant 127 : i32
    %74 = tpu.dynamic_rotate %70 by %c127_i32_44 dim 1 : vector<128x128xf32>, i32 -> vector<128x128xf32>
    %cst_45 = arith.constant 0.000000e+00 : f32
    %75 = vector.broadcast %cst_45 : f32 to vector<128x128xf32>
    %76 = arith.select %4, %74, %75 : vector<128x128xi1>, vector<128x128xf32>
    %77 = tpu.concatenate %73, %70, %76 in 0 : vector<128x128xf32>, vector<128x128xf32>, vector<128x128xf32> -> vector<384x128xf32>
    %cst_46 = arith.constant dense<0.000000e+00> : vector<128x128xf32>
    %78 = tpu.matmul %5, %77, %cst_46 {dimension_numbers = #tpu.dot_dimension_numbers<[1], [0], [0], [1], [0, 0, 1, 1], [], []>} : vector<128x384xf32>, vector<384x128xf32>, vector<128x128xf32> -> vector<128x128xf32>
    %c3_47 = arith.constant 3 : index
    %c0_48 = arith.constant 0 : index
    %c0_49 = arith.constant 0 : index
    %79 = vector.load %arg8[%c3_47, %c0_48, %c0_49] : memref<4x128x128xf32, #tpu.memory_space<vmem>>, vector<1x128x128xf32>
    %80 = vector.shape_cast %79 : vector<1x128x128xf32> to vector<128x128xf32>
    %81 = vector.shape_cast %78 : vector<128x128xf32> to vector<1x128x128xf32>
    tpu.vector_store %arg8[%c3_47, %c0_48, %c0_49], %81 {strides = array<i32>} : memref<4x128x128xf32, #tpu.memory_space<vmem>>, vector<1x128x128xf32>,
    %cst_50 = arith.constant dense<0.000000e+00> : vector<128xf32>
    %82 = vector.multi_reduction <add>, %78, %cst_50 [1] : vector<128x128xf32> to vector<128xf32>
    %83 = vector.shape_cast %82 : vector<128xf32> to vector<128x1xf32>
    %84 = arith.addf %64, %83 : vector<128x1xf32>
    %85 = arith.mulf %78, %78 : vector<128x128xf32>
    %cst_51 = arith.constant dense<0.000000e+00> : vector<128xf32>
    %86 = vector.multi_reduction <add>, %85, %cst_51 [1] : vector<128x128xf32> to vector<128xf32>
    %87 = vector.shape_cast %86 : vector<128xf32> to vector<128x1xf32>
    %88 = arith.addf %68, %87 : vector<128x1xf32>
    %cst_52 = arith.constant 0.001953125 : f32
    %89 = vector.broadcast %cst_52 : f32 to vector<128x1xf32>
    %90 = arith.mulf %84, %89 : vector<128x1xf32>
    %cst_53 = arith.constant 0.001953125 : f32
    %91 = vector.broadcast %cst_53 : f32 to vector<128x1xf32>
    %92 = arith.mulf %88, %91 : vector<128x1xf32>
    %93 = arith.mulf %90, %90 : vector<128x1xf32>
    %94 = arith.subf %92, %93 : vector<128x1xf32>
    %c0_54 = arith.constant 0 : index
    %c0_55 = arith.constant 0 : index
    %95 = vector.load %arg3[%c0_54, %c0_55] : memref<128x1xf32, #tpu.memory_space<vmem>>, vector<128x1xf32>
    %cst_56 = arith.constant 9.99999974E-6 : f32
    %96 = vector.broadcast %cst_56 : f32 to vector<128x1xf32>
    %97 = arith.addf %94, %96 : vector<128x1xf32>
    %98 = math.rsqrt %97 : vector<128x1xf32>
    %99 = arith.mulf %95, %98 : vector<128x1xf32>
    %c0_57 = arith.constant 0 : index
    %c0_58 = arith.constant 0 : index
    %100 = vector.load %arg4[%c0_57, %c0_58] : memref<128x1xf32, #tpu.memory_space<vmem>>, vector<128x1xf32>
    %101 = arith.mulf %90, %99 : vector<128x1xf32>
    %102 = arith.subf %100, %101 : vector<128x1xf32>
    %cst_59 = arith.constant 0.000000e+00 : f32
    %103 = vector.broadcast %cst_59 : f32 to vector<128x1xf32>
    %cst_60 = arith.constant 0.000000e+00 : f32
    %104 = vector.broadcast %cst_60 : f32 to vector<128x1xf32>
    %c0_61 = arith.constant 0 : index
    %c0_62 = arith.constant 0 : index
    %c0_63 = arith.constant 0 : index
    %105 = vector.load %arg8[%c0_61, %c0_62, %c0_63] : memref<4x128x128xf32, #tpu.memory_space<vmem>>, vector<1x128x128xf32>
    %106 = vector.shape_cast %105 : vector<1x128x128xf32> to vector<128x128xf32>
    %107 = vector.broadcast %99 : vector<128x1xf32> to vector<128x128xf32>
    %108 = arith.mulf %106, %107 : vector<128x128xf32>
    %109 = vector.broadcast %102 : vector<128x1xf32> to vector<128x128xf32>
    %110 = arith.addf %108, %109 : vector<128x128xf32>
    %cst_64 = arith.constant 0.000000e+00 : f32
    %111 = vector.broadcast %cst_64 : f32 to vector<128x128xf32>
    %112 = arith.maximumf %110, %111 : vector<128x128xf32>
    %c1_i32_65 = arith.constant 1 : i32
    %113 = tpu.dynamic_rotate %112 by %c1_i32_65 dim 1 : vector<128x128xf32>, i32 -> vector<128x128xf32>
    %cst_66 = arith.constant 0.000000e+00 : f32
    %114 = vector.broadcast %cst_66 : f32 to vector<128x128xf32>
    %115 = arith.select %2, %113, %114 : vector<128x128xi1>, vector<128x128xf32>
    %c127_i32_67 = arith.constant 127 : i32
    %116 = tpu.dynamic_rotate %112 by %c127_i32_67 dim 1 : vector<128x128xf32>, i32 -> vector<128x128xf32>
    %cst_68 = arith.constant 0.000000e+00 : f32
    %117 = vector.broadcast %cst_68 : f32 to vector<128x128xf32>
    %118 = arith.select %4, %116, %117 : vector<128x128xi1>, vector<128x128xf32>
    %119 = tpu.concatenate %115, %112, %118 in 0 : vector<128x128xf32>, vector<128x128xf32>, vector<128x128xf32> -> vector<384x128xf32>
    %cst_69 = arith.constant dense<0.000000e+00> : vector<128x128xf32>
    %120 = tpu.matmul %6, %119, %cst_69 {dimension_numbers = #tpu.dot_dimension_numbers<[1], [0], [0], [1], [0, 0, 1, 1], [], []>} : vector<128x384xf32>, vector<384x128xf32>, vector<128x128xf32> -> vector<128x128xf32>
    %c0_70 = arith.constant 0 : index
    %c0_71 = arith.constant 0 : index
    %c0_72 = arith.constant 0 : index
    %121 = vector.load %arg8[%c0_70, %c0_71, %c0_72] : memref<4x128x128xf32, #tpu.memory_space<vmem>>, vector<1x128x128xf32>
    %122 = vector.shape_cast %121 : vector<1x128x128xf32> to vector<128x128xf32>
    %123 = vector.shape_cast %120 : vector<128x128xf32> to vector<1x128x128xf32>
    tpu.vector_store %arg8[%c0_70, %c0_71, %c0_72], %123 {strides = array<i32>} : memref<4x128x128xf32, #tpu.memory_space<vmem>>, vector<1x128x128xf32>,
    %cst_73 = arith.constant dense<0.000000e+00> : vector<128xf32>
    %124 = vector.multi_reduction <add>, %120, %cst_73 [1] : vector<128x128xf32> to vector<128xf32>
    %125 = vector.shape_cast %124 : vector<128xf32> to vector<128x1xf32>
    %126 = arith.addf %103, %125 : vector<128x1xf32>
    %127 = arith.mulf %120, %120 : vector<128x128xf32>
    %cst_74 = arith.constant dense<0.000000e+00> : vector<128xf32>
    %128 = vector.multi_reduction <add>, %127, %cst_74 [1] : vector<128x128xf32> to vector<128xf32>
    %129 = vector.shape_cast %128 : vector<128xf32> to vector<128x1xf32>
    %130 = arith.addf %104, %129 : vector<128x1xf32>
    %c1_75 = arith.constant 1 : index
    %c0_76 = arith.constant 0 : index
    %c0_77 = arith.constant 0 : index
    %131 = vector.load %arg8[%c1_75, %c0_76, %c0_77] : memref<4x128x128xf32, #tpu.memory_space<vmem>>, vector<1x128x128xf32>
    %132 = vector.shape_cast %131 : vector<1x128x128xf32> to vector<128x128xf32>
    %133 = vector.broadcast %99 : vector<128x1xf32> to vector<128x128xf32>
    %134 = arith.mulf %132, %133 : vector<128x128xf32>
    %135 = vector.broadcast %102 : vector<128x1xf32> to vector<128x128xf32>
    %136 = arith.addf %134, %135 : vector<128x128xf32>
    %cst_78 = arith.constant 0.000000e+00 : f32
    %137 = vector.broadcast %cst_78 : f32 to vector<128x128xf32>
    %138 = arith.maximumf %136, %137 : vector<128x128xf32>
    %c1_i32_79 = arith.constant 1 : i32
    %139 = tpu.dynamic_rotate %138 by %c1_i32_79 dim 1 : vector<128x128xf32>, i32 -> vector<128x128xf32>
    %cst_80 = arith.constant 0.000000e+00 : f32
    %140 = vector.broadcast %cst_80 : f32 to vector<128x128xf32>
    %141 = arith.select %2, %139, %140 : vector<128x128xi1>, vector<128x128xf32>
    %c127_i32_81 = arith.constant 127 : i32
    %142 = tpu.dynamic_rotate %138 by %c127_i32_81 dim 1 : vector<128x128xf32>, i32 -> vector<128x128xf32>
    %cst_82 = arith.constant 0.000000e+00 : f32
    %143 = vector.broadcast %cst_82 : f32 to vector<128x128xf32>
    %144 = arith.select %4, %142, %143 : vector<128x128xi1>, vector<128x128xf32>
    %145 = tpu.concatenate %141, %138, %144 in 0 : vector<128x128xf32>, vector<128x128xf32>, vector<128x128xf32> -> vector<384x128xf32>
    %cst_83 = arith.constant dense<0.000000e+00> : vector<128x128xf32>
    %146 = tpu.matmul %6, %145, %cst_83 {dimension_numbers = #tpu.dot_dimension_numbers<[1], [0], [0], [1], [0, 0, 1, 1], [], []>} : vector<128x384xf32>, vector<384x128xf32>, vector<128x128xf32> -> vector<128x128xf32>
    %c1_84 = arith.constant 1 : index
    %c0_85 = arith.constant 0 : index
    %c0_86 = arith.constant 0 : index
    %147 = vector.load %arg8[%c1_84, %c0_85, %c0_86] : memref<4x128x128xf32, #tpu.memory_space<vmem>>, vector<1x128x128xf32>
    %148 = vector.shape_cast %147 : vector<1x128x128xf32> to vector<128x128xf32>
    %149 = vector.shape_cast %146 : vector<128x128xf32> to vector<1x128x128xf32>
    tpu.vector_store %arg8[%c1_84, %c0_85, %c0_86], %149 {strides = array<i32>} : memref<4x128x128xf32, #tpu.memory_space<vmem>>, vector<1x128x128xf32>,
    %cst_87 = arith.constant dense<0.000000e+00> : vector<128xf32>
    %150 = vector.multi_reduction <add>, %146, %cst_87 [1] : vector<128x128xf32> to vector<128xf32>
    %151 = vector.shape_cast %150 : vector<128xf32> to vector<128x1xf32>
    %152 = arith.addf %126, %151 : vector<128x1xf32>
    %153 = arith.mulf %146, %146 : vector<128x128xf32>
    %cst_88 = arith.constant dense<0.000000e+00> : vector<128xf32>
    %154 = vector.multi_reduction <add>, %153, %cst_88 [1] : vector<128x128xf32> to vector<128xf32>
    %155 = vector.shape_cast %154 : vector<128xf32> to vector<128x1xf32>
    %156 = arith.addf %130, %155 : vector<128x1xf32>
    %c2_89 = arith.constant 2 : index
    %c0_90 = arith.constant 0 : index
    %c0_91 = arith.constant 0 : index
    %157 = vector.load %arg8[%c2_89, %c0_90, %c0_91] : memref<4x128x128xf32, #tpu.memory_space<vmem>>, vector<1x128x128xf32>
    %158 = vector.shape_cast %157 : vector<1x128x128xf32> to vector<128x128xf32>
    %159 = vector.broadcast %99 : vector<128x1xf32> to vector<128x128xf32>
    %160 = arith.mulf %158, %159 : vector<128x128xf32>
    %161 = vector.broadcast %102 : vector<128x1xf32> to vector<128x128xf32>
    %162 = arith.addf %160, %161 : vector<128x128xf32>
    %cst_92 = arith.constant 0.000000e+00 : f32
    %163 = vector.broadcast %cst_92 : f32 to vector<128x128xf32>
    %164 = arith.maximumf %162, %163 : vector<128x128xf32>
    %c1_i32_93 = arith.constant 1 : i32
    %165 = tpu.dynamic_rotate %164 by %c1_i32_93 dim 1 : vector<128x128xf32>, i32 -> vector<128x128xf32>
    %cst_94 = arith.constant 0.000000e+00 : f32
    %166 = vector.broadcast %cst_94 : f32 to vector<128x128xf32>
    %167 = arith.select %2, %165, %166 : vector<128x128xi1>, vector<128x128xf32>
    %c127_i32_95 = arith.constant 127 : i32
    %168 = tpu.dynamic_rotate %164 by %c127_i32_95 dim 1 : vector<128x128xf32>, i32 -> vector<128x128xf32>
    %cst_96 = arith.constant 0.000000e+00 : f32
    %169 = vector.broadcast %cst_96 : f32 to vector<128x128xf32>
    %170 = arith.select %4, %168, %169 : vector<128x128xi1>, vector<128x128xf32>
    %171 = tpu.concatenate %167, %164, %170 in 0 : vector<128x128xf32>, vector<128x128xf32>, vector<128x128xf32> -> vector<384x128xf32>
    %cst_97 = arith.constant dense<0.000000e+00> : vector<128x128xf32>
    %172 = tpu.matmul %6, %171, %cst_97 {dimension_numbers = #tpu.dot_dimension_numbers<[1], [0], [0], [1], [0, 0, 1, 1], [], []>} : vector<128x384xf32>, vector<384x128xf32>, vector<128x128xf32> -> vector<128x128xf32>
    %c2_98 = arith.constant 2 : index
    %c0_99 = arith.constant 0 : index
    %c0_100 = arith.constant 0 : index
    %173 = vector.load %arg8[%c2_98, %c0_99, %c0_100] : memref<4x128x128xf32, #tpu.memory_space<vmem>>, vector<1x128x128xf32>
    %174 = vector.shape_cast %173 : vector<1x128x128xf32> to vector<128x128xf32>
    %175 = vector.shape_cast %172 : vector<128x128xf32> to vector<1x128x128xf32>
    tpu.vector_store %arg8[%c2_98, %c0_99, %c0_100], %175 {strides = array<i32>} : memref<4x128x128xf32, #tpu.memory_space<vmem>>, vector<1x128x128xf32>,
    %cst_101 = arith.constant dense<0.000000e+00> : vector<128xf32>
    %176 = vector.multi_reduction <add>, %172, %cst_101 [1] : vector<128x128xf32> to vector<128xf32>
    %177 = vector.shape_cast %176 : vector<128xf32> to vector<128x1xf32>
    %178 = arith.addf %152, %177 : vector<128x1xf32>
    %179 = arith.mulf %172, %172 : vector<128x128xf32>
    %cst_102 = arith.constant dense<0.000000e+00> : vector<128xf32>
    %180 = vector.multi_reduction <add>, %179, %cst_102 [1] : vector<128x128xf32> to vector<128xf32>
    %181 = vector.shape_cast %180 : vector<128xf32> to vector<128x1xf32>
    %182 = arith.addf %156, %181 : vector<128x1xf32>
    %c3_103 = arith.constant 3 : index
    %c0_104 = arith.constant 0 : index
    %c0_105 = arith.constant 0 : index
    %183 = vector.load %arg8[%c3_103, %c0_104, %c0_105] : memref<4x128x128xf32, #tpu.memory_space<vmem>>, vector<1x128x128xf32>
    %184 = vector.shape_cast %183 : vector<1x128x128xf32> to vector<128x128xf32>
    %185 = vector.broadcast %99 : vector<128x1xf32> to vector<128x128xf32>
    %186 = arith.mulf %184, %185 : vector<128x128xf32>
    %187 = vector.broadcast %102 : vector<128x1xf32> to vector<128x128xf32>
    %188 = arith.addf %186, %187 : vector<128x128xf32>
    %cst_106 = arith.constant 0.000000e+00 : f32
    %189 = vector.broadcast %cst_106 : f32 to vector<128x128xf32>
    %190 = arith.maximumf %188, %189 : vector<128x128xf32>
    %c1_i32_107 = arith.constant 1 : i32
    %191 = tpu.dynamic_rotate %190 by %c1_i32_107 dim 1 : vector<128x128xf32>, i32 -> vector<128x128xf32>
    %cst_108 = arith.constant 0.000000e+00 : f32
    %192 = vector.broadcast %cst_108 : f32 to vector<128x128xf32>
    %193 = arith.select %2, %191, %192 : vector<128x128xi1>, vector<128x128xf32>
    %c127_i32_109 = arith.constant 127 : i32
    %194 = tpu.dynamic_rotate %190 by %c127_i32_109 dim 1 : vector<128x128xf32>, i32 -> vector<128x128xf32>
    %cst_110 = arith.constant 0.000000e+00 : f32
    %195 = vector.broadcast %cst_110 : f32 to vector<128x128xf32>
    %196 = arith.select %4, %194, %195 : vector<128x128xi1>, vector<128x128xf32>
    %197 = tpu.concatenate %193, %190, %196 in 0 : vector<128x128xf32>, vector<128x128xf32>, vector<128x128xf32> -> vector<384x128xf32>
    %cst_111 = arith.constant dense<0.000000e+00> : vector<128x128xf32>
    %198 = tpu.matmul %6, %197, %cst_111 {dimension_numbers = #tpu.dot_dimension_numbers<[1], [0], [0], [1], [0, 0, 1, 1], [], []>} : vector<128x384xf32>, vector<384x128xf32>, vector<128x128xf32> -> vector<128x128xf32>
    %c3_112 = arith.constant 3 : index
    %c0_113 = arith.constant 0 : index
    %c0_114 = arith.constant 0 : index
    %199 = vector.load %arg8[%c3_112, %c0_113, %c0_114] : memref<4x128x128xf32, #tpu.memory_space<vmem>>, vector<1x128x128xf32>
    %200 = vector.shape_cast %199 : vector<1x128x128xf32> to vector<128x128xf32>
    %201 = vector.shape_cast %198 : vector<128x128xf32> to vector<1x128x128xf32>
    tpu.vector_store %arg8[%c3_112, %c0_113, %c0_114], %201 {strides = array<i32>} : memref<4x128x128xf32, #tpu.memory_space<vmem>>, vector<1x128x128xf32>,
    %cst_115 = arith.constant dense<0.000000e+00> : vector<128xf32>
    %202 = vector.multi_reduction <add>, %198, %cst_115 [1] : vector<128x128xf32> to vector<128xf32>
    %203 = vector.shape_cast %202 : vector<128xf32> to vector<128x1xf32>
    %204 = arith.addf %178, %203 : vector<128x1xf32>
    %205 = arith.mulf %198, %198 : vector<128x128xf32>
    %cst_116 = arith.constant dense<0.000000e+00> : vector<128xf32>
    %206 = vector.multi_reduction <add>, %205, %cst_116 [1] : vector<128x128xf32> to vector<128xf32>
    %207 = vector.shape_cast %206 : vector<128xf32> to vector<128x1xf32>
    %208 = arith.addf %182, %207 : vector<128x1xf32>
    %cst_117 = arith.constant 0.001953125 : f32
    %209 = vector.broadcast %cst_117 : f32 to vector<128x1xf32>
    %210 = arith.mulf %204, %209 : vector<128x1xf32>
    %cst_118 = arith.constant 0.001953125 : f32
    %211 = vector.broadcast %cst_118 : f32 to vector<128x1xf32>
    %212 = arith.mulf %208, %211 : vector<128x1xf32>
    %213 = arith.mulf %210, %210 : vector<128x1xf32>
    %214 = arith.subf %212, %213 : vector<128x1xf32>
    %c0_119 = arith.constant 0 : index
    %c0_120 = arith.constant 0 : index
    %215 = vector.load %arg5[%c0_119, %c0_120] : memref<128x1xf32, #tpu.memory_space<vmem>>, vector<128x1xf32>
    %cst_121 = arith.constant 9.99999974E-6 : f32
    %216 = vector.broadcast %cst_121 : f32 to vector<128x1xf32>
    %217 = arith.addf %214, %216 : vector<128x1xf32>
    %218 = math.rsqrt %217 : vector<128x1xf32>
    %219 = arith.mulf %215, %218 : vector<128x1xf32>
    %c0_122 = arith.constant 0 : index
    %c0_123 = arith.constant 0 : index
    %220 = vector.load %arg6[%c0_122, %c0_123] : memref<128x1xf32, #tpu.memory_space<vmem>>, vector<128x1xf32>
    %221 = arith.mulf %210, %219 : vector<128x1xf32>
    %222 = arith.subf %220, %221 : vector<128x1xf32>
    %c0_124 = arith.constant 0 : index
    %c0_125 = arith.constant 0 : index
    %c0_126 = arith.constant 0 : index
    %223 = vector.load %arg8[%c0_124, %c0_125, %c0_126] : memref<4x128x128xf32, #tpu.memory_space<vmem>>, vector<1x128x128xf32>
    %224 = vector.shape_cast %223 : vector<1x128x128xf32> to vector<128x128xf32>
    %225 = vector.broadcast %219 : vector<128x1xf32> to vector<128x128xf32>
    %226 = arith.mulf %224, %225 : vector<128x128xf32>
    %227 = vector.broadcast %222 : vector<128x1xf32> to vector<128x128xf32>
    %228 = arith.addf %226, %227 : vector<128x128xf32>
    %c0_127 = arith.constant 0 : index
    %c0_128 = arith.constant 0 : index
    %c0_129 = arith.constant 0 : index
    %229 = vector.load %arg0[%c0_127, %c0_128, %c0_129] : memref<4x128x128xf32, #tpu.memory_space<vmem>>, vector<1x128x128xf32>
    %230 = vector.shape_cast %229 : vector<1x128x128xf32> to vector<128x128xf32>
    %231 = arith.addf %228, %230 : vector<128x128xf32>
    %cst_130 = arith.constant 0.000000e+00 : f32
    %232 = vector.broadcast %cst_130 : f32 to vector<128x128xf32>
    %233 = arith.maximumf %231, %232 : vector<128x128xf32>
    %c0_131 = arith.constant 0 : index
    %c0_132 = arith.constant 0 : index
    %c0_133 = arith.constant 0 : index
    %234 = vector.load %arg7[%c0_131, %c0_132, %c0_133] : memref<4x128x128xf32, #tpu.memory_space<vmem>>, vector<1x128x128xf32>
    %235 = vector.shape_cast %234 : vector<1x128x128xf32> to vector<128x128xf32>
    %236 = vector.shape_cast %233 : vector<128x128xf32> to vector<1x128x128xf32>
    tpu.vector_store %arg7[%c0_131, %c0_132, %c0_133], %236 {strides = array<i32>} : memref<4x128x128xf32, #tpu.memory_space<vmem>>, vector<1x128x128xf32>,
    %c1_134 = arith.constant 1 : index
    %c0_135 = arith.constant 0 : index
    %c0_136 = arith.constant 0 : index
    %237 = vector.load %arg8[%c1_134, %c0_135, %c0_136] : memref<4x128x128xf32, #tpu.memory_space<vmem>>, vector<1x128x128xf32>
    %238 = vector.shape_cast %237 : vector<1x128x128xf32> to vector<128x128xf32>
    %239 = vector.broadcast %219 : vector<128x1xf32> to vector<128x128xf32>
    %240 = arith.mulf %238, %239 : vector<128x128xf32>
    %241 = vector.broadcast %222 : vector<128x1xf32> to vector<128x128xf32>
    %242 = arith.addf %240, %241 : vector<128x128xf32>
    %c1_137 = arith.constant 1 : index
    %c0_138 = arith.constant 0 : index
    %c0_139 = arith.constant 0 : index
    %243 = vector.load %arg0[%c1_137, %c0_138, %c0_139] : memref<4x128x128xf32, #tpu.memory_space<vmem>>, vector<1x128x128xf32>
    %244 = vector.shape_cast %243 : vector<1x128x128xf32> to vector<128x128xf32>
    %245 = arith.addf %242, %244 : vector<128x128xf32>
    %cst_140 = arith.constant 0.000000e+00 : f32
    %246 = vector.broadcast %cst_140 : f32 to vector<128x128xf32>
    %247 = arith.maximumf %245, %246 : vector<128x128xf32>
    %c1_141 = arith.constant 1 : index
    %c0_142 = arith.constant 0 : index
    %c0_143 = arith.constant 0 : index
    %248 = vector.load %arg7[%c1_141, %c0_142, %c0_143] : memref<4x128x128xf32, #tpu.memory_space<vmem>>, vector<1x128x128xf32>
    %249 = vector.shape_cast %248 : vector<1x128x128xf32> to vector<128x128xf32>
    %250 = vector.shape_cast %247 : vector<128x128xf32> to vector<1x128x128xf32>
    tpu.vector_store %arg7[%c1_141, %c0_142, %c0_143], %250 {strides = array<i32>} : memref<4x128x128xf32, #tpu.memory_space<vmem>>, vector<1x128x128xf32>,
    %c2_144 = arith.constant 2 : index
    %c0_145 = arith.constant 0 : index
    %c0_146 = arith.constant 0 : index
    %251 = vector.load %arg8[%c2_144, %c0_145, %c0_146] : memref<4x128x128xf32, #tpu.memory_space<vmem>>, vector<1x128x128xf32>
    %252 = vector.shape_cast %251 : vector<1x128x128xf32> to vector<128x128xf32>
    %253 = vector.broadcast %219 : vector<128x1xf32> to vector<128x128xf32>
    %254 = arith.mulf %252, %253 : vector<128x128xf32>
    %255 = vector.broadcast %222 : vector<128x1xf32> to vector<128x128xf32>
    %256 = arith.addf %254, %255 : vector<128x128xf32>
    %c2_147 = arith.constant 2 : index
    %c0_148 = arith.constant 0 : index
    %c0_149 = arith.constant 0 : index
    %257 = vector.load %arg0[%c2_147, %c0_148, %c0_149] : memref<4x128x128xf32, #tpu.memory_space<vmem>>, vector<1x128x128xf32>
    %258 = vector.shape_cast %257 : vector<1x128x128xf32> to vector<128x128xf32>
    %259 = arith.addf %256, %258 : vector<128x128xf32>
    %cst_150 = arith.constant 0.000000e+00 : f32
    %260 = vector.broadcast %cst_150 : f32 to vector<128x128xf32>
    %261 = arith.maximumf %259, %260 : vector<128x128xf32>
    %c2_151 = arith.constant 2 : index
    %c0_152 = arith.constant 0 : index
    %c0_153 = arith.constant 0 : index
    %262 = vector.load %arg7[%c2_151, %c0_152, %c0_153] : memref<4x128x128xf32, #tpu.memory_space<vmem>>, vector<1x128x128xf32>
    %263 = vector.shape_cast %262 : vector<1x128x128xf32> to vector<128x128xf32>
    %264 = vector.shape_cast %261 : vector<128x128xf32> to vector<1x128x128xf32>
    tpu.vector_store %arg7[%c2_151, %c0_152, %c0_153], %264 {strides = array<i32>} : memref<4x128x128xf32, #tpu.memory_space<vmem>>, vector<1x128x128xf32>,
    %c3_154 = arith.constant 3 : index
    %c0_155 = arith.constant 0 : index
    %c0_156 = arith.constant 0 : index
    %265 = vector.load %arg8[%c3_154, %c0_155, %c0_156] : memref<4x128x128xf32, #tpu.memory_space<vmem>>, vector<1x128x128xf32>
    %266 = vector.shape_cast %265 : vector<1x128x128xf32> to vector<128x128xf32>
    %267 = vector.broadcast %219 : vector<128x1xf32> to vector<128x128xf32>
    %268 = arith.mulf %266, %267 : vector<128x128xf32>
    %269 = vector.broadcast %222 : vector<128x1xf32> to vector<128x128xf32>
    %270 = arith.addf %268, %269 : vector<128x128xf32>
    %c3_157 = arith.constant 3 : index
    %c0_158 = arith.constant 0 : index
    %c0_159 = arith.constant 0 : index
    %271 = vector.load %arg0[%c3_157, %c0_158, %c0_159] : memref<4x128x128xf32, #tpu.memory_space<vmem>>, vector<1x128x128xf32>
    %272 = vector.shape_cast %271 : vector<1x128x128xf32> to vector<128x128xf32>
    %273 = arith.addf %270, %272 : vector<128x128xf32>
    %cst_160 = arith.constant 0.000000e+00 : f32
    %274 = vector.broadcast %cst_160 : f32 to vector<128x128xf32>
    %275 = arith.maximumf %273, %274 : vector<128x128xf32>
    %c3_161 = arith.constant 3 : index
    %c0_162 = arith.constant 0 : index
    %c0_163 = arith.constant 0 : index
    %276 = vector.load %arg7[%c3_161, %c0_162, %c0_163] : memref<4x128x128xf32, #tpu.memory_space<vmem>>, vector<1x128x128xf32>
    %277 = vector.shape_cast %276 : vector<1x128x128xf32> to vector<128x128xf32>
    %278 = vector.shape_cast %275 : vector<128x128xf32> to vector<1x128x128xf32>
    tpu.vector_store %arg7[%c3_161, %c0_162, %c0_163], %278 {strides = array<i32>} : memref<4x128x128xf32, #tpu.memory_space<vmem>>, vector<1x128x128xf32>,
    return
  }
}

</mosaic_0001>

<llo_original>
// kernel: tpu_custom_call.1
$region0: #{tpu_custom_call.1}
  #allocation0 [shape = 'u32[]', space=smem, size = 0x4, offset = 0x4, fixed_abs, tag = 'smem constant byte address 0x4 - core index']
  #allocation1 [shape = 'u32[72,128]{1,0:T(1,128)}', space=vmem, size = 0x9000, scoped, tag = 'internal scratch']
  #allocation2 [shape = 'f32[4,128,128]{2,1,0:T(8,128)}', space=vmem, size = 0x40000, scoped, tag = 'scratch operand']
  %s0 = inlined_call_operand.vmem [shape: f32[4,128,128], index: 0, kind: input, shape index: {}]
  %s1 = inlined_call_operand.hbm [shape: f32[128,384], index: 1, kind: input, shape index: {}]
  %s2 = inlined_call_operand.hbm [shape: f32[128,384], index: 2, kind: input, shape index: {}]
  %s3 = inlined_call_operand.vmem [shape: f32[128,1], index: 3, kind: input, shape index: {}]
  %s4 = inlined_call_operand.vmem [shape: f32[128,1], index: 4, kind: input, shape index: {}]
  %s5 = inlined_call_operand.vmem [shape: f32[128,1], index: 5, kind: input, shape index: {}]
  %s6 = inlined_call_operand.vmem [shape: f32[128,1], index: 6, kind: input, shape index: {}]
  %s7 = inlined_call_operand.hbm [shape: f32[4,128,128], index: 7, kind: output, shape index: {}]
  %s8 = sld [smem:[#allocation0]]
  $region46: #{tpu_custom_call.1} parent=0
    _
  %s10 = ssub.s32 1, %s8
  %s11 = scalar_select 0, %s10, %s8
  $region1: #{tpu_custom_call.1} parent=0
    #allocation3 [shape = 'u8[196608]{0}', space=vmem, size = 0x30000, scoped, tag = 'input window, operand 1, single buffered']
    #allocation4 [shape = 's32[1]{0}', space=sflag, size = 0x4, scoped, tag = 'scoped memory for tpu_custom_call.1']
    #allocation5 [shape = 's32[1]{0}', space=sflag, size = 0x4, scoped, tag = 'scoped memory for tpu_custom_call.1']
    #allocation6 [shape = 'u8[196608]{0}', space=vmem, size = 0x30000, scoped, tag = 'input window, operand 2, single buffered']
    #allocation7 [shape = 's32[1]{0}', space=sflag, size = 0x4, scoped, tag = 'scoped memory for tpu_custom_call.1']
    #allocation8 [shape = 'u8[262144]{0}', space=vmem, size = 0x40000, scoped, tag = 'output window, operand 0, single buffered']
    %12 = vsyncpa [#allocation4], 0
    %13 = vsyncpa [#allocation7], 0
    %14 = vsyncpa [#allocation5], 0
    // Predicated region
    $region2: #{tpu_custom_call.1} parent=1 // pred_check
      _
    $region3: #{tpu_custom_call.1} parent=1 // pred_check_branch
      %16 = sbr.rel (0) target = $region5
    $region4: #{tpu_custom_call.1} parent=1 // pred_region
      _
    $region5: #{tpu_custom_call.1} parent=1 // pred_fallthru
      _
    // Predicated region
    $region6: #{tpu_custom_call.1} parent=1 // pred_check
      _
    $region7: #{tpu_custom_call.1} parent=1 // pred_check_branch
      %18 = sbr.rel (0) target = $region9
    $region8: #{tpu_custom_call.1} parent=1 // pred_region
      %20 = vsyncadd [#allocation4], 0
      %s21 = sshll.u32 %s1, 4
      %s22 = int_to_ptr.hbm [resolvable:$true] %s21
      %s23 = sshll.u32 [#allocation3], 4
      %s24 = int_to_ptr.vmem [resolvable:$true] %s23
      %29 = dma.hbm_to_vmem [thread:$0]  %s22, 6144, %s24, [#allocation4], 384, 384, 24
    $region9: #{tpu_custom_call.1} parent=1 // pred_fallthru
      _
    // Predicated region
    $region10: #{tpu_custom_call.1} parent=1 // pred_check
      _
    $region11: #{tpu_custom_call.1} parent=1 // pred_check_branch
      %31 = sbr.rel (0) target = $region13
    $region12: #{tpu_custom_call.1} parent=1 // pred_region
      %33 = vsyncadd [#allocation7], 0
      %s34 = sshll.u32 %s2, 4
      %s35 = int_to_ptr.hbm [resolvable:$true] %s34
      %s36 = sshll.u32 [#allocation6], 4
      %s37 = int_to_ptr.vmem [resolvable:$true] %s36
      %42 = dma.hbm_to_vmem [thread:$0]  %s35, 6144, %s37, [#allocation7], 384, 384, 24
    $region13: #{tpu_custom_call.1} parent=1 // pred_fallthru
      _
    // Predicated region
    $region14: #{tpu_custom_call.1} parent=1 // pred_check
      _
    $region15: #{tpu_custom_call.1} parent=1 // pred_check_branch
      %44 = sbr.rel (0) target = $region17
    $region16: #{tpu_custom_call.1} parent=1 // pred_region
      _
    $region17: #{tpu_custom_call.1} parent=1 // pred_fallthru
      _
    // Predicated region
    $region18: #{tpu_custom_call.1} parent=1 // pred_check
      _
    $region19: #{tpu_custom_call.1} parent=1 // pred_check_branch
      %46 = sbr.rel (0) target = $region21
    $region20: #{tpu_custom_call.1} parent=1 // pred_region
      _
    $region21: #{tpu_custom_call.1} parent=1 // pred_fallthru
      _
    // Predicated region
    $region22: #{tpu_custom_call.1} parent=1 // pred_check
      _
    $region23: #{tpu_custom_call.1} parent=1 // pred_check_branch
      %48 = sbr.rel (0) target = $region25
    $region24: #{tpu_custom_call.1} parent=1 // pred_region
      _
    $region25: #{tpu_custom_call.1} parent=1 // pred_fallthru
      _
    // Predicated region
    $region26: #{tpu_custom_call.1} parent=1 // pred_check
      _
    $region27: #{tpu_custom_call.1} parent=1 // pred_check_branch
      %50 = sbr.rel (0) target = $region29
    $region28: #{tpu_custom_call.1} parent=1 // pred_region
      _
    $region29: #{tpu_custom_call.1} parent=1 // pred_fallthru
      _
    // Predicated region
    $region30: #{tpu_custom_call.1} parent=1 // pred_check
      _
    $region31: #{tpu_custom_call.1} parent=1 // pred_check_branch
      %52 = sbr.rel (0) target = $region33
    $region32: #{tpu_custom_call.1} parent=1 // pred_region
      %54 = dma.done [#allocation4], 6144
    $region33: #{tpu_custom_call.1} parent=1 // pred_fallthru
      _
    // Predicated region
    $region34: #{tpu_custom_call.1} parent=1 // pred_check
      _
    $region35: #{tpu_custom_call.1} parent=1 // pred_check_branch
      %56 = sbr.rel (0) target = $region37
    $region36: #{tpu_custom_call.1} parent=1 // pred_region
      %58 = dma.done [#allocation7], 6144
    $region37: #{tpu_custom_call.1} parent=1 // pred_fallthru
      _
    %v59 = vlaneseq
    %v60 = vand.u32 %v59, 127
    %vm61 = vcmp.ge.s32.totalorder %v60, 1
    %vm62 = vcmp.le.s32.totalorder %v60, 126
    %v63 = vld [vmem:[#allocation3] sm:$0xff]
    %v64 = vld [vmem:[#allocation3 + $0x8] sm:$0xff]
    %v65 = vld [vmem:[#allocation3 + $0x10] sm:$0xff]
    %v66 = vld [vmem:[#allocation3 + $0x18] sm:$0xff]
    %v67 = vld [vmem:[#allocation3 + $0x20] sm:$0xff]
    %v68 = vld [vmem:[#allocation3 + $0x28] sm:$0xff]
    %v69 = vld [vmem:[#allocation3 + $0x30] sm:$0xff]
    %v70 = vld [vmem:[#allocation3 + $0x38] sm:$0xff]
    %v71 = vld [vmem:[#allocation3 + $0x40] sm:$0xff]
    %v72 = vld [vmem:[#allocation3 + $0x48] sm:$0xff]
    %v73 = vld [vmem:[#allocation3 + $0x50] sm:$0xff]
    %v74 = vld [vmem:[#allocation3 + $0x58] sm:$0xff]
    %v75 = vld [vmem:[#allocation3 + $0x60] sm:$0xff]
    %v76 = vld [vmem:[#allocation3 + $0x68] sm:$0xff]
    %v77 = vld [vmem:[#allocation3 + $0x70] sm:$0xff]
    %v78 = vld [vmem:[#allocation3 + $0x78] sm:$0xff]
    %v79 = vld [vmem:[#allocation3 + $0x80] sm:$0xff]
    %v80 = vld [vmem:[#allocation3 + $0x88] sm:$0xff]
    %v81 = vld [vmem:[#allocation3 + $0x90] sm:$0xff]
    %v82 = vld [vmem:[#allocation3 + $0x98] sm:$0xff]
    %v83 = vld [vmem:[#allocation3 + $0xa0] sm:$0xff]
    %v84 = vld [vmem:[#allocation3 + $0xa8] sm:$0xff]
    %v85 = vld [vmem:[#allocation3 + $0xb0] sm:$0xff]
    %v86 = vld [vmem:[#allocation3 + $0xb8] sm:$0xff]
    %v87 = vld [vmem:[#allocation3 + $0xc0] sm:$0xff]
    %v88 = vld [vmem:[#allocation3 + $0xc8] sm:$0xff]
    %v89 = vld [vmem:[#allocation3 + $0xd0] sm:$0xff]
    %v90 = vld [vmem:[#allocation3 + $0xd8] sm:$0xff]
    %v91 = vld [vmem:[#allocation3 + $0xe0] sm:$0xff]
    %v92 = vld [vmem:[#allocation3 + $0xe8] sm:$0xff]
    %v93 = vld [vmem:[#allocation3 + $0xf0] sm:$0xff]
    %v94 = vld [vmem:[#allocation3 + $0xf8] sm:$0xff]
    %v95 = vld [vmem:[#allocation3 + $0x100] sm:$0xff]
    %v96 = vld [vmem:[#allocation3 + $0x108] sm:$0xff]
    %v97 = vld [vmem:[#allocation3 + $0x110] sm:$0xff]
    %v98 = vld [vmem:[#allocation3 + $0x118] sm:$0xff]
    %v99 = vld [vmem:[#allocation3 + $0x120] sm:$0xff]
    %v100 = vld [vmem:[#allocation3 + $0x128] sm:$0xff]
    %v101 = vld [vmem:[#allocation3 + $0x130] sm:$0xff]
    %v102 = vld [vmem:[#allocation3 + $0x138] sm:$0xff]
    %v103 = vld [vmem:[#allocation3 + $0x140] sm:$0xff]
    %v104 = vld [vmem:[#allocation3 + $0x148] sm:$0xff]
    %v105 = vld [vmem:[#allocation3 + $0x150] sm:$0xff]
    %v106 = vld [vmem:[#allocation3 + $0x158] sm:$0xff]
    %v107 = vld [vmem:[#allocation3 + $0x160] sm:$0xff]
    %v108 = vld [vmem:[#allocation3 + $0x168] sm:$0xff]
    %v109 = vld [vmem:[#allocation3 + $0x170] sm:$0xff]
    %v110 = vld [vmem:[#allocation3 + $0x178] sm:$0xff]
    %v111 = vld [vmem:[#allocation6] sm:$0xff]
    %v112 = vld [vmem:[#allocation6 + $0x8] sm:$0xff]
    %v113 = vld [vmem:[#allocation6 + $0x10] sm:$0xff]
    %v114 = vld [vmem:[#allocation6 + $0x18] sm:$0xff]
    %v115 = vld [vmem:[#allocation6 + $0x20] sm:$0xff]
    %v116 = vld [vmem:[#allocation6 + $0x28] sm:$0xff]
    %v117 = vld [vmem:[#allocation6 + $0x30] sm:$0xff]
    %v118 = vld [vmem:[#allocation6 + $0x38] sm:$0xff]
    %v119 = vld [vmem:[#allocation6 + $0x40] sm:$0xff]
    %v120 = vld [vmem:[#allocation6 + $0x48] sm:$0xff]
    %v121 = vld [vmem:[#allocation6 + $0x50] sm:$0xff]
    %v122 = vld [vmem:[#allocation6 + $0x58] sm:$0xff]
    %v123 = vld [vmem:[#allocation6 + $0x60] sm:$0xff]
    %v124 = vld [vmem:[#allocation6 + $0x68] sm:$0xff]
    %v125 = vld [vmem:[#allocation6 + $0x70] sm:$0xff]
    %v126 = vld [vmem:[#allocation6 + $0x78] sm:$0xff]
    %v127 = vld [vmem:[#allocation6 + $0x80] sm:$0xff]
    %v128 = vld [vmem:[#allocation6 + $0x88] sm:$0xff]
    %v129 = vld [vmem:[#allocation6 + $0x90] sm:$0xff]
    %v130 = vld [vmem:[#allocation6 + $0x98] sm:$0xff]
    %v131 = vld [vmem:[#allocation6 + $0xa0] sm:$0xff]
    %v132 = vld [vmem:[#allocation6 + $0xa8] sm:$0xff]
    %v133 = vld [vmem:[#allocation6 + $0xb0] sm:$0xff]
    %v134 = vld [vmem:[#allocation6 + $0xb8] sm:$0xff]
    %v135 = vld [vmem:[#allocation6 + $0xc0] sm:$0xff]
    %v136 = vld [vmem:[#allocation6 + $0xc8] sm:$0xff]
    %v137 = vld [vmem:[#allocation6 + $0xd0] sm:$0xff]
    %v138 = vld [vmem:[#allocation6 + $0xd8] sm:$0xff]
    %v139 = vld [vmem:[#allocation6 + $0xe0] sm:$0xff]
    %v140 = vld [vmem:[#allocation6 + $0xe8] sm:$0xff]
    %v141 = vld [vmem:[#allocation6 + $0xf0] sm:$0xff]
    %v142 = vld [vmem:[#allocation6 + $0xf8] sm:$0xff]
    %v143 = vld [vmem:[#allocation6 + $0x100] sm:$0xff]
    %v144 = vld [vmem:[#allocation6 + $0x108] sm:$0xff]
    %v145 = vld [vmem:[#allocation6 + $0x110] sm:$0xff]
    %v146 = vld [vmem:[#allocation6 + $0x118] sm:$0xff]
    %v147 = vld [vmem:[#allocation6 + $0x120] sm:$0xff]
    %v148 = vld [vmem:[#allocation6 + $0x128] sm:$0xff]
    %v149 = vld [vmem:[#allocation6 + $0x130] sm:$0xff]
    %v150 = vld [vmem:[#allocation6 + $0x138] sm:$0xff]
    %v151 = vld [vmem:[#allocation6 + $0x140] sm:$0xff]
    %v152 = vld [vmem:[#allocation6 + $0x148] sm:$0xff]
    %v153 = vld [vmem:[#allocation6 + $0x150] sm:$0xff]
    %v154 = vld [vmem:[#allocation6 + $0x158] sm:$0xff]
    %v155 = vld [vmem:[#allocation6 + $0x160] sm:$0xff]
    %v156 = vld [vmem:[#allocation6 + $0x168] sm:$0xff]
    %v157 = vld [vmem:[#allocation6 + $0x170] sm:$0xff]
    %v158 = vld [vmem:[#allocation6 + $0x178] sm:$0xff]
    %v159 = vld [vmem:[%s0] sm:$0xff]
    %v160 = vld [vmem:[%s0 + $0x8] sm:$0xff]
    %v161 = vld [vmem:[%s0 + $0x10] sm:$0xff]
    %v162 = vld [vmem:[%s0 + $0x18] sm:$0xff]
    %v163 = vld [vmem:[%s0 + $0x20] sm:$0xff]
    %v164 = vld [vmem:[%s0 + $0x28] sm:$0xff]
    %v165 = vld [vmem:[%s0 + $0x30] sm:$0xff]
    %v166 = vld [vmem:[%s0 + $0x38] sm:$0xff]
    %v167 = vld [vmem:[%s0 + $0x40] sm:$0xff]
    %v168 = vld [vmem:[%s0 + $0x48] sm:$0xff]
    %v169 = vld [vmem:[%s0 + $0x50] sm:$0xff]
    %v170 = vld [vmem:[%s0 + $0x58] sm:$0xff]
    %v171 = vld [vmem:[%s0 + $0x60] sm:$0xff]
    %v172 = vld [vmem:[%s0 + $0x68] sm:$0xff]
    %v173 = vld [vmem:[%s0 + $0x70] sm:$0xff]
    %v174 = vld [vmem:[%s0 + $0x78] sm:$0xff]
    %175 = vrot.lane.b32.xlu0 %v159, 1
    %v176 = vpop.permute.xlu0 %175
    %177 = vrot.lane.b32.xlu0 %v160, 1
    %v178 = vpop.permute.xlu0 %177
    %179 = vrot.lane.b32.xlu0 %v161, 1
    %v180 = vpop.permute.xlu0 %179
    %181 = vrot.lane.b32.xlu0 %v162, 1
    %v182 = vpop.permute.xlu0 %181
    %183 = vrot.lane.b32.xlu0 %v163, 1
    %v184 = vpop.permute.xlu0 %183
    %185 = vrot.lane.b32.xlu0 %v164, 1
    %v186 = vpop.permute.xlu0 %185
    %187 = vrot.lane.b32.xlu0 %v165, 1
    %v188 = vpop.permute.xlu0 %187
    %189 = vrot.lane.b32.xlu0 %v166, 1
    %v190 = vpop.permute.xlu0 %189
    %191 = vrot.lane.b32.xlu0 %v167, 1
    %v192 = vpop.permute.xlu0 %191
    %193 = vrot.lane.b32.xlu0 %v168, 1
    %v194 = vpop.permute.xlu0 %193
    %195 = vrot.lane.b32.xlu0 %v169, 1
    %v196 = vpop.permute.xlu0 %195
    %197 = vrot.lane.b32.xlu0 %v170, 1
    %v198 = vpop.permute.xlu0 %197
    %199 = vrot.lane.b32.xlu0 %v171, 1
    %v200 = vpop.permute.xlu0 %199
    %201 = vrot.lane.b32.xlu0 %v172, 1
    %v202 = vpop.permute.xlu0 %201
    %203 = vrot.lane.b32.xlu0 %v173, 1
    %v204 = vpop.permute.xlu0 %203
    %205 = vrot.lane.b32.xlu0 %v174, 1
    %v206 = vpop.permute.xlu0 %205
    %v207 = vsel %vm61, %v176, 0.0
    %v208 = vsel %vm61, %v178, 0.0
    %v209 = vsel %vm61, %v180, 0.0
    %v210 = vsel %vm61, %v182, 0.0
    %v211 = vsel %vm61, %v184, 0.0
    %v212 = vsel %vm61, %v186, 0.0
    %v213 = vsel %vm61, %v188, 0.0
    %v214 = vsel %vm61, %v190, 0.0
    %v215 = vsel %vm61, %v192, 0.0
    %v216 = vsel %vm61, %v194, 0.0
    %v217 = vsel %vm61, %v196, 0.0
    %v218 = vsel %vm61, %v198, 0.0
    %v219 = vsel %vm61, %v200, 0.0
    %v220 = vsel %vm61, %v202, 0.0
    %v221 = vsel %vm61, %v204, 0.0
    %v222 = vsel %vm61, %v206, 0.0
    %223 = vrot.lane.b32.xlu0 %v159, 127
    %v224 = vpop.permute.xlu0 %223
    %225 = vrot.lane.b32.xlu0 %v160, 127
    %v226 = vpop.permute.xlu0 %225
    %227 = vrot.lane.b32.xlu0 %v161, 127
    %v228 = vpop.permute.xlu0 %227
    %229 = vrot.lane.b32.xlu0 %v162, 127
    %v230 = vpop.permute.xlu0 %229
    %231 = vrot.lane.b32.xlu0 %v163, 127
    %v232 = vpop.permute.xlu0 %231
    %233 = vrot.lane.b32.xlu0 %v164, 127
    %v234 = vpop.permute.xlu0 %233
    %235 = vrot.lane.b32.xlu0 %v165, 127
    %v236 = vpop.permute.xlu0 %235
    %237 = vrot.lane.b32.xlu0 %v166, 127
    %v238 = vpop.permute.xlu0 %237
    %239 = vrot.lane.b32.xlu0 %v167, 127
    %v240 = vpop.permute.xlu0 %239
    %241 = vrot.lane.b32.xlu0 %v168, 127
    %v242 = vpop.permute.xlu0 %241
    %243 = vrot.lane.b32.xlu0 %v169, 127
    %v244 = vpop.permute.xlu0 %243
    %245 = vrot.lane.b32.xlu0 %v170, 127
    %v246 = vpop.permute.xlu0 %245
    %247 = vrot.lane.b32.xlu0 %v171, 127
    %v248 = vpop.permute.xlu0 %247
    %249 = vrot.lane.b32.xlu0 %v172, 127
    %v250 = vpop.permute.xlu0 %249
    %251 = vrot.lane.b32.xlu0 %v173, 127
    %v252 = vpop.permute.xlu0 %251
    %253 = vrot.lane.b32.xlu0 %v174, 127
    %v254 = vpop.permute.xlu0 %253
    %v255 = vsel %vm62, %v224, 0.0
    %v256 = vsel %vm62, %v226, 0.0
    %v257 = vsel %vm62, %v228, 0.0
    %v258 = vsel %vm62, %v230, 0.0
    %v259 = vsel %vm62, %v232, 0.0
    %v260 = vsel %vm62, %v234, 0.0
    %v261 = vsel %vm62, %v236, 0.0
    %v262 = vsel %vm62, %v238, 0.0
    %v263 = vsel %vm62, %v240, 0.0
    %v264 = vsel %vm62, %v242, 0.0
    %v265 = vsel %vm62, %v244, 0.0
    %v266 = vsel %vm62, %v246, 0.0
    %v267 = vsel %vm62, %v248, 0.0
    %v268 = vsel %vm62, %v250, 0.0
    %v269 = vsel %vm62, %v252, 0.0
    %v270 = vsel %vm62, %v254, 0.0
    %271 = vmatpush.msra.mxu0 %v222
    %272 = vmatpush.msra.mxu0 %v221
    %273 = vmatpush.msra.mxu0 %v220
    %274 = vmatpush.msra.mxu0 %v219
    %275 = vmatpush.msra.mxu0 %v218
    %276 = vmatpush.msra.mxu0 %v217
    %277 = vmatpush.msra.mxu0 %v216
    %278 = vmatpush.msra.mxu0 %v215
    %279 = vmatpush.msra.mxu0 %v214
    %280 = vmatpush.msra.mxu0 %v213
    %281 = vmatpush.msra.mxu0 %v212
    %282 = vmatpush.msra.mxu0 %v211
    %283 = vmatpush.msra.mxu0 %v210
    %284 = vmatpush.msra.mxu0 %v209
    %285 = vmatpush.msra.mxu0 %v208
    %286 = vmatpush.msra.mxu0 %v207
    %287 = vmatmul.f32.gmra.mxu0 %v63
    %v288 = vpop.f32.mrf.mxu0
    %v289 = vadd.f32 0.0, %v288
    %290 = vmatmul.f32.gmra.mxu0 %v66
    %v291 = vpop.f32.mrf.mxu0
    %v292 = vadd.f32 0.0, %v291
    %293 = vmatmul.f32.gmra.mxu0 %v69
    %v294 = vpop.f32.mrf.mxu0
    %v295 = vadd.f32 0.0, %v294
    %296 = vmatmul.f32.gmra.mxu0 %v72
    %v297 = vpop.f32.mrf.mxu0
    %v298 = vadd.f32 0.0, %v297
    %299 = vmatmul.f32.gmra.mxu0 %v75
    %v300 = vpop.f32.mrf.mxu0
    %v301 = vadd.f32 0.0, %v300
    %302 = vmatmul.f32.gmra.mxu0 %v78
    %v303 = vpop.f32.mrf.mxu0
    %v304 = vadd.f32 0.0, %v303
    %305 = vmatmul.f32.gmra.mxu0 %v81
    %v306 = vpop.f32.mrf.mxu0
    %v307 = vadd.f32 0.0, %v306
    %308 = vmatmul.f32.gmra.mxu0 %v84
    %v309 = vpop.f32.mrf.mxu0
    %v310 = vadd.f32 0.0, %v309
    %311 = vmatmul.f32.gmra.mxu0 %v87
    %v312 = vpop.f32.mrf.mxu0
    %v313 = vadd.f32 0.0, %v312
    %314 = vmatmul.f32.gmra.mxu0 %v90
    %v315 = vpop.f32.mrf.mxu0
    %v316 = vadd.f32 0.0, %v315
    %317 = vmatmul.f32.gmra.mxu0 %v93
    %v318 = vpop.f32.mrf.mxu0
    %v319 = vadd.f32 0.0, %v318
    %320 = vmatmul.f32.gmra.mxu0 %v96
    %v321 = vpop.f32.mrf.mxu0
    %v322 = vadd.f32 0.0, %v321
    %323 = vmatmul.f32.gmra.mxu0 %v99
    %v324 = vpop.f32.mrf.mxu0
    %v325 = vadd.f32 0.0, %v324
    %326 = vmatmul.f32.gmra.mxu0 %v102
    %v327 = vpop.f32.mrf.mxu0
    %v328 = vadd.f32 0.0, %v327
    %329 = vmatmul.f32.gmra.mxu0 %v105
    %v330 = vpop.f32.mrf.mxu0
    %v331 = vadd.f32 0.0, %v330
    %332 = vmatmul.f32.gmra.mxu0 %v108
    %v333 = vpop.f32.mrf.mxu0
    %v334 = vadd.f32 0.0, %v333
    %335 = vdwg.mxu0
    %336 = vmatpush.msra.mxu0 %v174
    %337 = vmatpush.msra.mxu0 %v173
    %338 = vmatpush.msra.mxu0 %v172
    %339 = vmatpush.msra.mxu0 %v171
    %340 = vmatpush.msra.mxu0 %v170
    %341 = vmatpush.msra.mxu0 %v169
    %342 = vmatpush.msra.mxu0 %v168
    %343 = vmatpush.msra.mxu0 %v167
    %344 = vmatpush.msra.mxu0 %v166
    %345 = vmatpush.msra.mxu0 %v165
    %346 = vmatpush.msra.mxu0 %v164
    %347 = vmatpush.msra.mxu0 %v163
    %348 = vmatpush.msra.mxu0 %v162
    %349 = vmatpush.msra.mxu0 %v161
    %350 = vmatpush.msra.mxu0 %v160
    %351 = vmatpush.msra.mxu0 %v159
    %352 = vmatmul.f32.gmra.mxu0 %v64
    %v353 = vpop.f32.mrf.mxu0
    %v354 = vadd.f32 %v289, %v353
    %355 = vmatmul.f32.gmra.mxu0 %v67
    %v356 = vpop.f32.mrf.mxu0
    %v357 = vadd.f32 %v292, %v356
    %358 = vmatmul.f32.gmra.mxu0 %v70
    %v359 = vpop.f32.mrf.mxu0
    %v360 = vadd.f32 %v295, %v359
    %361 = vmatmul.f32.gmra.mxu0 %v73
    %v362 = vpop.f32.mrf.mxu0
    %v363 = vadd.f32 %v298, %v362
    %364 = vmatmul.f32.gmra.mxu0 %v76
    %v365 = vpop.f32.mrf.mxu0
    %v366 = vadd.f32 %v301, %v365
    %367 = vmatmul.f32.gmra.mxu0 %v79
    %v368 = vpop.f32.mrf.mxu0
    %v369 = vadd.f32 %v304, %v368
    %370 = vmatmul.f32.gmra.mxu0 %v82
    %v371 = vpop.f32.mrf.mxu0
    %v372 = vadd.f32 %v307, %v371
    %373 = vmatmul.f32.gmra.mxu0 %v85
    %v374 = vpop.f32.mrf.mxu0
    %v375 = vadd.f32 %v310, %v374
    %376 = vmatmul.f32.gmra.mxu0 %v88
    %v377 = vpop.f32.mrf.mxu0
    %v378 = vadd.f32 %v313, %v377
    %379 = vmatmul.f32.gmra.mxu0 %v91
    %v380 = vpop.f32.mrf.mxu0
    %v381 = vadd.f32 %v316, %v380
    %382 = vmatmul.f32.gmra.mxu0 %v94
    %v383 = vpop.f32.mrf.mxu0
    %v384 = vadd.f32 %v319, %v383
    %385 = vmatmul.f32.gmra.mxu0 %v97
    %v386 = vpop.f32.mrf.mxu0
    %v387 = vadd.f32 %v322, %v386
    %388 = vmatmul.f32.gmra.mxu0 %v100
    %v389 = vpop.f32.mrf.mxu0
    %v390 = vadd.f32 %v325, %v389
    %391 = vmatmul.f32.gmra.mxu0 %v103
    %v392 = vpop.f32.mrf.mxu0
    %v393 = vadd.f32 %v328, %v392
    %394 = vmatmul.f32.gmra.mxu0 %v106
    %v395 = vpop.f32.mrf.mxu0
    %v396 = vadd.f32 %v331, %v395
    %397 = vmatmul.f32.gmra.mxu0 %v109
    %v398 = vpop.f32.mrf.mxu0
    %v399 = vadd.f32 %v334, %v398
    %400 = vdwg.mxu0
    %401 = vmatpush.msra.mxu0 %v270
    %402 = vmatpush.msra.mxu0 %v269
    %403 = vmatpush.msra.mxu0 %v268
    %404 = vmatpush.msra.mxu0 %v267
    %405 = vmatpush.msra.mxu0 %v266
    %406 = vmatpush.msra.mxu0 %v265
    %407 = vmatpush.msra.mxu0 %v264
    %408 = vmatpush.msra.mxu0 %v263
    %409 = vmatpush.msra.mxu0 %v262
    %410 = vmatpush.msra.mxu0 %v261
    %411 = vmatpush.msra.mxu0 %v260
    %412 = vmatpush.msra.mxu0 %v259
    %413 = vmatpush.msra.mxu0 %v258
    %414 = vmatpush.msra.mxu0 %v257
    %415 = vmatpush.msra.mxu0 %v256
    %416 = vmatpush.msra.mxu0 %v255
    %417 = vmatmul.f32.gmra.mxu0 %v65
    %v418 = vpop.f32.mrf.mxu0
    %v419 = vadd.f32 %v354, %v418
    %420 = vmatmul.f32.gmra.mxu0 %v68
    %v421 = vpop.f32.mrf.mxu0
    %v422 = vadd.f32 %v357, %v421
    %423 = vmatmul.f32.gmra.mxu0 %v71
    %v424 = vpop.f32.mrf.mxu0
    %v425 = vadd.f32 %v360, %v424
    %426 = vmatmul.f32.gmra.mxu0 %v74
    %v427 = vpop.f32.mrf.mxu0
    %v428 = vadd.f32 %v363, %v427
    %429 = vmatmul.f32.gmra.mxu0 %v77
    %v430 = vpop.f32.mrf.mxu0
    %v431 = vadd.f32 %v366, %v430
    %432 = vmatmul.f32.gmra.mxu0 %v80
    %v433 = vpop.f32.mrf.mxu0
    %v434 = vadd.f32 %v369, %v433
    %435 = vmatmul.f32.gmra.mxu0 %v83
    %v436 = vpop.f32.mrf.mxu0
    %v437 = vadd.f32 %v372, %v436
    %438 = vmatmul.f32.gmra.mxu0 %v86
    %v439 = vpop.f32.mrf.mxu0
    %v440 = vadd.f32 %v375, %v439
    %441 = vmatmul.f32.gmra.mxu0 %v89
    %v442 = vpop.f32.mrf.mxu0
    %v443 = vadd.f32 %v378, %v442
    %444 = vmatmul.f32.gmra.mxu0 %v92
    %v445 = vpop.f32.mrf.mxu0
    %v446 = vadd.f32 %v381, %v445
    %447 = vmatmul.f32.gmra.mxu0 %v95
    %v448 = vpop.f32.mrf.mxu0
    %v449 = vadd.f32 %v384, %v448
    %450 = vmatmul.f32.gmra.mxu0 %v98
    %v451 = vpop.f32.mrf.mxu0
    %v452 = vadd.f32 %v387, %v451
    %453 = vmatmul.f32.gmra.mxu0 %v101
    %v454 = vpop.f32.mrf.mxu0
    %v455 = vadd.f32 %v390, %v454
    %456 = vmatmul.f32.gmra.mxu0 %v104
    %v457 = vpop.f32.mrf.mxu0
    %v458 = vadd.f32 %v393, %v457
    %459 = vmatmul.f32.gmra.mxu0 %v107
    %v460 = vpop.f32.mrf.mxu0
    %v461 = vadd.f32 %v396, %v460
    %462 = vmatmul.f32.gmra.mxu0 %v110
    %v463 = vpop.f32.mrf.mxu0
    %v464 = vadd.f32 %v399, %v463
    %465 = vdwg.mxu0
    %466 = vst [vmem:[#allocation2] sm:$0xff] %v419
    %467 = vst [vmem:[#allocation2 + $0x8] sm:$0xff] %v422
    %468 = vst [vmem:[#allocation2 + $0x10] sm:$0xff] %v425
    %469 = vst [vmem:[#allocation2 + $0x18] sm:$0xff] %v428
    %470 = vst [vmem:[#allocation2 + $0x20] sm:$0xff] %v431
    %471 = vst [vmem:[#allocation2 + $0x28] sm:$0xff] %v434
    %472 = vst [vmem:[#allocation2 + $0x30] sm:$0xff] %v437
    %473 = vst [vmem:[#allocation2 + $0x38] sm:$0xff] %v440
    %474 = vst [vmem:[#allocation2 + $0x40] sm:$0xff] %v443
    %475 = vst [vmem:[#allocation2 + $0x48] sm:$0xff] %v446
    %476 = vst [vmem:[#allocation2 + $0x50] sm:$0xff] %v449
    %477 = vst [vmem:[#allocation2 + $0x58] sm:$0xff] %v452
    %478 = vst [vmem:[#allocation2 + $0x60] sm:$0xff] %v455
    %479 = vst [vmem:[#allocation2 + $0x68] sm:$0xff] %v458
    %480 = vst [vmem:[#allocation2 + $0x70] sm:$0xff] %v461
    %481 = vst [vmem:[#allocation2 + $0x78] sm:$0xff] %v464
    %482 = vadd.xlane.f32.xlu0 %v419
    %v483 = vpop.xlane.xlu0 %482
    %484 = vadd.xlane.f32.xlu0 %v422
    %v485 = vpop.xlane.xlu0 %484
    %486 = vadd.xlane.f32.xlu0 %v425
    %v487 = vpop.xlane.xlu0 %486
    %488 = vadd.xlane.f32.xlu0 %v428
    %v489 = vpop.xlane.xlu0 %488
    %490 = vadd.xlane.f32.xlu0 %v431
    %v491 = vpop.xlane.xlu0 %490
    %492 = vadd.xlane.f32.xlu0 %v434
    %v493 = vpop.xlane.xlu0 %492
    %494 = vadd.xlane.f32.xlu0 %v437
    %v495 = vpop.xlane.xlu0 %494
    %496 = vadd.xlane.f32.xlu0 %v440
    %v497 = vpop.xlane.xlu0 %496
    %498 = vadd.xlane.f32.xlu0 %v443
    %v499 = vpop.xlane.xlu0 %498
    %500 = vadd.xlane.f32.xlu0 %v446
    %v501 = vpop.xlane.xlu0 %500
    %502 = vadd.xlane.f32.xlu0 %v449
    %v503 = vpop.xlane.xlu0 %502
    %504 = vadd.xlane.f32.xlu0 %v452
    %v505 = vpop.xlane.xlu0 %504
    %506 = vadd.xlane.f32.xlu0 %v455
    %v507 = vpop.xlane.xlu0 %506
    %508 = vadd.xlane.f32.xlu0 %v458
    %v509 = vpop.xlane.xlu0 %508
    %510 = vadd.xlane.f32.xlu0 %v461
    %v511 = vpop.xlane.xlu0 %510
    %512 = vadd.xlane.f32.xlu0 %v464
    %v513 = vpop.xlane.xlu0 %512
    %v514 = vadd.f32 %v483, 0.0
    %v515 = vadd.f32 %v485, 0.0
    %v516 = vadd.f32 %v487, 0.0
    %v517 = vadd.f32 %v489, 0.0
    %v518 = vadd.f32 %v491, 0.0
    %v519 = vadd.f32 %v493, 0.0
    %v520 = vadd.f32 %v495, 0.0
    %v521 = vadd.f32 %v497, 0.0
    %v522 = vadd.f32 %v499, 0.0
    %v523 = vadd.f32 %v501, 0.0
    %v524 = vadd.f32 %v503, 0.0
    %v525 = vadd.f32 %v505, 0.0
    %v526 = vadd.f32 %v507, 0.0
    %v527 = vadd.f32 %v509, 0.0
    %v528 = vadd.f32 %v511, 0.0
    %v529 = vadd.f32 %v513, 0.0
    %v530 = vmul.f32 %v419, %v419
    %v531 = vmul.f32 %v422, %v422
    %v532 = vmul.f32 %v425, %v425
    %v533 = vmul.f32 %v428, %v428
    %v534 = vmul.f32 %v431, %v431
    %v535 = vmul.f32 %v434, %v434
    %v536 = vmul.f32 %v437, %v437
    %v537 = vmul.f32 %v440, %v440
    %v538 = vmul.f32 %v443, %v443
    %v539 = vmul.f32 %v446, %v446
    %v540 = vmul.f32 %v449, %v449
    %v541 = vmul.f32 %v452, %v452
    %v542 = vmul.f32 %v455, %v455
    %v543 = vmul.f32 %v458, %v458
    %v544 = vmul.f32 %v461, %v461
    %v545 = vmul.f32 %v464, %v464
    %546 = vadd.xlane.f32.xlu0 %v530
    %v547 = vpop.xlane.xlu0 %546
    %548 = vadd.xlane.f32.xlu0 %v531
    %v549 = vpop.xlane.xlu0 %548
    %550 = vadd.xlane.f32.xlu0 %v532
    %v551 = vpop.xlane.xlu0 %550
    %552 = vadd.xlane.f32.xlu0 %v533
    %v553 = vpop.xlane.xlu0 %552
    %554 = vadd.xlane.f32.xlu0 %v534
    %v555 = vpop.xlane.xlu0 %554
    %556 = vadd.xlane.f32.xlu0 %v535
    %v557 = vpop.xlane.xlu0 %556
    %558 = vadd.xlane.f32.xlu0 %v536
    %v559 = vpop.xlane.xlu0 %558
    %560 = vadd.xlane.f32.xlu0 %v537
    %v561 = vpop.xlane.xlu0 %560
    %562 = vadd.xlane.f32.xlu0 %v538
    %v563 = vpop.xlane.xlu0 %562
    %564 = vadd.xlane.f32.xlu0 %v539
    %v565 = vpop.xlane.xlu0 %564
    %566 = vadd.xlane.f32.xlu0 %v540
    %v567 = vpop.xlane.xlu0 %566
    %568 = vadd.xlane.f32.xlu0 %v541
    %v569 = vpop.xlane.xlu0 %568
    %570 = vadd.xlane.f32.xlu0 %v542
    %v571 = vpop.xlane.xlu0 %570
    %572 = vadd.xlane.f32.xlu0 %v543
    %v573 = vpop.xlane.xlu0 %572
    %574 = vadd.xlane.f32.xlu0 %v544
    %v575 = vpop.xlane.xlu0 %574
    %576 = vadd.xlane.f32.xlu0 %v545
    %v577 = vpop.xlane.xlu0 %576
    %v578 = vadd.f32 %v547, 0.0
    %v579 = vadd.f32 %v549, 0.0
    %v580 = vadd.f32 %v551, 0.0
    %v581 = vadd.f32 %v553, 0.0
    %v582 = vadd.f32 %v555, 0.0
    %v583 = vadd.f32 %v557, 0.0
    %v584 = vadd.f32 %v559, 0.0
    %v585 = vadd.f32 %v561, 0.0
    %v586 = vadd.f32 %v563, 0.0
    %v587 = vadd.f32 %v565, 0.0
    %v588 = vadd.f32 %v567, 0.0
    %v589 = vadd.f32 %v569, 0.0
    %v590 = vadd.f32 %v571, 0.0
    %v591 = vadd.f32 %v573, 0.0
    %v592 = vadd.f32 %v575, 0.0
    %v593 = vadd.f32 %v577, 0.0
    %s594 = scalar_lea.vmem %s0, 128
    %v595 = vld [vmem:[%s594] sm:$0xff]
    %v596 = vld [vmem:[%s594 + $0x8] sm:$0xff]
    %v597 = vld [vmem:[%s594 + $0x10] sm:$0xff]
    %v598 = vld [vmem:[%s594 + $0x18] sm:$0xff]
    %v599 = vld [vmem:[%s594 + $0x20] sm:$0xff]
    %v600 = vld [vmem:[%s594 + $0x28] sm:$0xff]
    %v601 = vld [vmem:[%s594 + $0x30] sm:$0xff]
    %v602 = vld [vmem:[%s594 + $0x38] sm:$0xff]
    %v603 = vld [vmem:[%s594 + $0x40] sm:$0xff]
    %v604 = vld [vmem:[%s594 + $0x48] sm:$0xff]
    %v605 = vld [vmem:[%s594 + $0x50] sm:$0xff]
    %v606 = vld [vmem:[%s594 + $0x58] sm:$0xff]
    %v607 = vld [vmem:[%s594 + $0x60] sm:$0xff]
    %v608 = vld [vmem:[%s594 + $0x68] sm:$0xff]
    %v609 = vld [vmem:[%s594 + $0x70] sm:$0xff]
    %v610 = vld [vmem:[%s594 + $0x78] sm:$0xff]
    %611 = vrot.lane.b32.xlu0 %v595, 1
    %v612 = vpop.permute.xlu0 %611
    %613 = vrot.lane.b32.xlu0 %v596, 1
    %v614 = vpop.permute.xlu0 %613
    %615 = vrot.lane.b32.xlu0 %v597, 1
    %v616 = vpop.permute.xlu0 %615
    %617 = vrot.lane.b32.xlu0 %v598, 1
    %v618 = vpop.permute.xlu0 %617
    %619 = vrot.lane.b32.xlu0 %v599, 1
    %v620 = vpop.permute.xlu0 %619
    %621 = vrot.lane.b32.xlu0 %v600, 1
    %v622 = vpop.permute.xlu0 %621
    %623 = vrot.lane.b32.xlu0 %v601, 1
    %v624 = vpop.permute.xlu0 %623
    %625 = vrot.lane.b32.xlu0 %v602, 1
    %v626 = vpop.permute.xlu0 %625
    %627 = vrot.lane.b32.xlu0 %v603, 1
    %v628 = vpop.permute.xlu0 %627
    %629 = vrot.lane.b32.xlu0 %v604, 1
    %v630 = vpop.permute.xlu0 %629
    %631 = vrot.lane.b32.xlu0 %v605, 1
    %v632 = vpop.permute.xlu0 %631
    %633 = vrot.lane.b32.xlu0 %v606, 1
    %v634 = vpop.permute.xlu0 %633
    %635 = vrot.lane.b32.xlu0 %v607, 1
    %v636 = vpop.permute.xlu0 %635
    %637 = vrot.lane.b32.xlu0 %v608, 1
    %v638 = vpop.permute.xlu0 %637
    %639 = vrot.lane.b32.xlu0 %v609, 1
    %v640 = vpop.permute.xlu0 %639
    %641 = vrot.lane.b32.xlu0 %v610, 1
    %v642 = vpop.permute.xlu0 %641
    %v643 = vsel %vm61, %v612, 0.0
    %v644 = vsel %vm61, %v614, 0.0
    %v645 = vsel %vm61, %v616, 0.0
    %v646 = vsel %vm61, %v618, 0.0
    %v647 = vsel %vm61, %v620, 0.0
    %v648 = vsel %vm61, %v622, 0.0
    %v649 = vsel %vm61, %v624, 0.0
    %v650 = vsel %vm61, %v626, 0.0
    %v651 = vsel %vm61, %v628, 0.0
    %v652 = vsel %vm61, %v630, 0.0
    %v653 = vsel %vm61, %v632, 0.0
    %v654 = vsel %vm61, %v634, 0.0
    %v655 = vsel %vm61, %v636, 0.0
    %v656 = vsel %vm61, %v638, 0.0
    %v657 = vsel %vm61, %v640, 0.0
    %v658 = vsel %vm61, %v642, 0.0
    %659 = vrot.lane.b32.xlu0 %v595, 127
    %v660 = vpop.permute.xlu0 %659
    %661 = vrot.lane.b32.xlu0 %v596, 127
    %v662 = vpop.permute.xlu0 %661
    %663 = vrot.lane.b32.xlu0 %v597, 127
    %v664 = vpop.permute.xlu0 %663
    %665 = vrot.lane.b32.xlu0 %v598, 127
    %v666 = vpop.permute.xlu0 %665
    %667 = vrot.lane.b32.xlu0 %v599, 127
    %v668 = vpop.permute.xlu0 %667
    %669 = vrot.lane.b32.xlu0 %v600, 127
    %v670 = vpop.permute.xlu0 %669
    %671 = vrot.lane.b32.xlu0 %v601, 127
    %v672 = vpop.permute.xlu0 %671
    %673 = vrot.lane.b32.xlu0 %v602, 127
    %v674 = vpop.permute.xlu0 %673
    %675 = vrot.lane.b32.xlu0 %v603, 127
    %v676 = vpop.permute.xlu0 %675
    %677 = vrot.lane.b32.xlu0 %v604, 127
    %v678 = vpop.permute.xlu0 %677
    %679 = vrot.lane.b32.xlu0 %v605, 127
    %v680 = vpop.permute.xlu0 %679
    %681 = vrot.lane.b32.xlu0 %v606, 127
    %v682 = vpop.permute.xlu0 %681
    %683 = vrot.lane.b32.xlu0 %v607, 127
    %v684 = vpop.permute.xlu0 %683
    %685 = vrot.lane.b32.xlu0 %v608, 127
    %v686 = vpop.permute.xlu0 %685
    %687 = vrot.lane.b32.xlu0 %v609, 127
    %v688 = vpop.permute.xlu0 %687
    %689 = vrot.lane.b32.xlu0 %v610, 127
    %v690 = vpop.permute.xlu0 %689
    %v691 = vsel %vm62, %v660, 0.0
    %v692 = vsel %vm62, %v662, 0.0
    %v693 = vsel %vm62, %v664, 0.0
    %v694 = vsel %vm62, %v666, 0.0
    %v695 = vsel %vm62, %v668, 0.0
    %v696 = vsel %vm62, %v670, 0.0
    %v697 = vsel %vm62, %v672, 0.0
    %v698 = vsel %vm62, %v674, 0.0
    %v699 = vsel %vm62, %v676, 0.0
    %v700 = vsel %vm62, %v678, 0.0
    %v701 = vsel %vm62, %v680, 0.0
    %v702 = vsel %vm62, %v682, 0.0
    %v703 = vsel %vm62, %v684, 0.0
    %v704 = vsel %vm62, %v686, 0.0
    %v705 = vsel %vm62, %v688, 0.0
    %v706 = vsel %vm62, %v690, 0.0
    %707 = vmatpush.msra.mxu0 %v658
    %708 = vmatpush.msra.mxu0 %v657
    %709 = vmatpush.msra.mxu0 %v656
    %710 = vmatpush.msra.mxu0 %v655
    %711 = vmatpush.msra.mxu0 %v654
    %712 = vmatpush.msra.mxu0 %v653
    %713 = vmatpush.msra.mxu0 %v652
    %714 = vmatpush.msra.mxu0 %v651
    %715 = vmatpush.msra.mxu0 %v650
    %716 = vmatpush.msra.mxu0 %v649
    %717 = vmatpush.msra.mxu0 %v648
    %718 = vmatpush.msra.mxu0 %v647
    %719 = vmatpush.msra.mxu0 %v646
    %720 = vmatpush.msra.mxu0 %v645
    %721 = vmatpush.msra.mxu0 %v644
    %722 = vmatpush.msra.mxu0 %v643
    %723 = vmatmul.f32.gmra.mxu0 %v63
    %v724 = vpop.f32.mrf.mxu0
    %v725 = vadd.f32 0.0, %v724
    %726 = vmatmul.f32.gmra.mxu0 %v66
    %v727 = vpop.f32.mrf.mxu0
    %v728 = vadd.f32 0.0, %v727
    %729 = vmatmul.f32.gmra.mxu0 %v69
    %v730 = vpop.f32.mrf.mxu0
    %v731 = vadd.f32 0.0, %v730
    %732 = vmatmul.f32.gmra.mxu0 %v72
    %v733 = vpop.f32.mrf.mxu0
    %v734 = vadd.f32 0.0, %v733
    %735 = vmatmul.f32.gmra.mxu0 %v75
    %v736 = vpop.f32.mrf.mxu0
    %v737 = vadd.f32 0.0, %v736
    %738 = vmatmul.f32.gmra.mxu0 %v78
    %v739 = vpop.f32.mrf.mxu0
    %v740 = vadd.f32 0.0, %v739
    %741 = vmatmul.f32.gmra.mxu0 %v81
    %v742 = vpop.f32.mrf.mxu0
    %v743 = vadd.f32 0.0, %v742
    %744 = vmatmul.f32.gmra.mxu0 %v84
    %v745 = vpop.f32.mrf.mxu0
    %v746 = vadd.f32 0.0, %v745
    %747 = vmatmul.f32.gmra.mxu0 %v87
    %v748 = vpop.f32.mrf.mxu0
    %v749 = vadd.f32 0.0, %v748
    %750 = vmatmul.f32.gmra.mxu0 %v90
    %v751 = vpop.f32.mrf.mxu0
    %v752 = vadd.f32 0.0, %v751
    %753 = vmatmul.f32.gmra.mxu0 %v93
    %v754 = vpop.f32.mrf.mxu0
    %v755 = vadd.f32 0.0, %v754
    %756 = vmatmul.f32.gmra.mxu0 %v96
    %v757 = vpop.f32.mrf.mxu0
    %v758 = vadd.f32 0.0, %v757
    %759 = vmatmul.f32.gmra.mxu0 %v99
    %v760 = vpop.f32.mrf.mxu0
    %v761 = vadd.f32 0.0, %v760
    %762 = vmatmul.f32.gmra.mxu0 %v102
    %v763 = vpop.f32.mrf.mxu0
    %v764 = vadd.f32 0.0, %v763
    %765 = vmatmul.f32.gmra.mxu0 %v105
    %v766 = vpop.f32.mrf.mxu0
    %v767 = vadd.f32 0.0, %v766
    %768 = vmatmul.f32.gmra.mxu0 %v108
    %v769 = vpop.f32.mrf.mxu0
    %v770 = vadd.f32 0.0, %v769
    %771 = vdwg.mxu0
    %772 = vmatpush.msra.mxu0 %v610
    %773 = vmatpush.msra.mxu0 %v609
    %774 = vmatpush.msra.mxu0 %v608
    %775 = vmatpush.msra.mxu0 %v607
    %776 = vmatpush.msra.mxu0 %v606
    %777 = vmatpush.msra.mxu0 %v605
    %778 = vmatpush.msra.mxu0 %v604
    %779 = vmatpush.msra.mxu0 %v603
    %780 = vmatpush.msra.mxu0 %v602
    %781 = vmatpush.msra.mxu0 %v601
    %782 = vmatpush.msra.mxu0 %v600
    %783 = vmatpush.msra.mxu0 %v599
    %784 = vmatpush.msra.mxu0 %v598
    %785 = vmatpush.msra.mxu0 %v597
    %786 = vmatpush.msra.mxu0 %v596
    %787 = vmatpush.msra.mxu0 %v595
    %788 = vmatmul.f32.gmra.mxu0 %v64
    %v789 = vpop.f32.mrf.mxu0
    %v790 = vadd.f32 %v725, %v789
    %791 = vmatmul.f32.gmra.mxu0 %v67
    %v792 = vpop.f32.mrf.mxu0
    %v793 = vadd.f32 %v728, %v792
    %794 = vmatmul.f32.gmra.mxu0 %v70
    %v795 = vpop.f32.mrf.mxu0
    %v796 = vadd.f32 %v731, %v795
    %797 = vmatmul.f32.gmra.mxu0 %v73
    %v798 = vpop.f32.mrf.mxu0
    %v799 = vadd.f32 %v734, %v798
    %800 = vmatmul.f32.gmra.mxu0 %v76
    %v801 = vpop.f32.mrf.mxu0
    %v802 = vadd.f32 %v737, %v801
    %803 = vmatmul.f32.gmra.mxu0 %v79
    %v804 = vpop.f32.mrf.mxu0
    %v805 = vadd.f32 %v740, %v804
    %806 = vmatmul.f32.gmra.mxu0 %v82
    %v807 = vpop.f32.mrf.mxu0
    %v808 = vadd.f32 %v743, %v807
    %809 = vmatmul.f32.gmra.mxu0 %v85
    %v810 = vpop.f32.mrf.mxu0
    %v811 = vadd.f32 %v746, %v810
    %812 = vmatmul.f32.gmra.mxu0 %v88
    %v813 = vpop.f32.mrf.mxu0
    %v814 = vadd.f32 %v749, %v813
    %815 = vmatmul.f32.gmra.mxu0 %v91
    %v816 = vpop.f32.mrf.mxu0
    %v817 = vadd.f32 %v752, %v816
    %818 = vmatmul.f32.gmra.mxu0 %v94
    %v819 = vpop.f32.mrf.mxu0
    %v820 = vadd.f32 %v755, %v819
    %821 = vmatmul.f32.gmra.mxu0 %v97
    %v822 = vpop.f32.mrf.mxu0
    %v823 = vadd.f32 %v758, %v822
    %824 = vmatmul.f32.gmra.mxu0 %v100
    %v825 = vpop.f32.mrf.mxu0
    %v826 = vadd.f32 %v761, %v825
    %827 = vmatmul.f32.gmra.mxu0 %v103
    %v828 = vpop.f32.mrf.mxu0
    %v829 = vadd.f32 %v764, %v828
    %830 = vmatmul.f32.gmra.mxu0 %v106
    %v831 = vpop.f32.mrf.mxu0
    %v832 = vadd.f32 %v767, %v831
    %833 = vmatmul.f32.gmra.mxu0 %v109
    %v834 = vpop.f32.mrf.mxu0
    %v835 = vadd.f32 %v770, %v834
    %836 = vdwg.mxu0
    %837 = vmatpush.msra.mxu0 %v706
    %838 = vmatpush.msra.mxu0 %v705
    %839 = vmatpush.msra.mxu0 %v704
    %840 = vmatpush.msra.mxu0 %v703
    %841 = vmatpush.msra.mxu0 %v702
    %842 = vmatpush.msra.mxu0 %v701
    %843 = vmatpush.msra.mxu0 %v700
    %844 = vmatpush.msra.mxu0 %v699
    %845 = vmatpush.msra.mxu0 %v698
    %846 = vmatpush.msra.mxu0 %v697
    %847 = vmatpush.msra.mxu0 %v696
    %848 = vmatpush.msra.mxu0 %v695
    %849 = vmatpush.msra.mxu0 %v694
    %850 = vmatpush.msra.mxu0 %v693
    %851 = vmatpush.msra.mxu0 %v692
    %852 = vmatpush.msra.mxu0 %v691
    %853 = vmatmul.f32.gmra.mxu0 %v65
    %v854 = vpop.f32.mrf.mxu0
    %v855 = vadd.f32 %v790, %v854
    %856 = vmatmul.f32.gmra.mxu0 %v68
    %v857 = vpop.f32.mrf.mxu0
    %v858 = vadd.f32 %v793, %v857
    %859 = vmatmul.f32.gmra.mxu0 %v71
    %v860 = vpop.f32.mrf.mxu0
    %v861 = vadd.f32 %v796, %v860
    %862 = vmatmul.f32.gmra.mxu0 %v74
    %v863 = vpop.f32.mrf.mxu0
    %v864 = vadd.f32 %v799, %v863
    %865 = vmatmul.f32.gmra.mxu0 %v77
    %v866 = vpop.f32.mrf.mxu0
    %v867 = vadd.f32 %v802, %v866
    %868 = vmatmul.f32.gmra.mxu0 %v80
    %v869 = vpop.f32.mrf.mxu0
    %v870 = vadd.f32 %v805, %v869
    %871 = vmatmul.f32.gmra.mxu0 %v83
    %v872 = vpop.f32.mrf.mxu0
    %v873 = vadd.f32 %v808, %v872
    %874 = vmatmul.f32.gmra.mxu0 %v86
    %v875 = vpop.f32.mrf.mxu0
    %v876 = vadd.f32 %v811, %v875
    %877 = vmatmul.f32.gmra.mxu0 %v89
    %v878 = vpop.f32.mrf.mxu0
    %v879 = vadd.f32 %v814, %v878
    %880 = vmatmul.f32.gmra.mxu0 %v92
    %v881 = vpop.f32.mrf.mxu0
    %v882 = vadd.f32 %v817, %v881
    %883 = vmatmul.f32.gmra.mxu0 %v95
    %v884 = vpop.f32.mrf.mxu0
    %v885 = vadd.f32 %v820, %v884
    %886 = vmatmul.f32.gmra.mxu0 %v98
    %v887 = vpop.f32.mrf.mxu0
    %v888 = vadd.f32 %v823, %v887
    %889 = vmatmul.f32.gmra.mxu0 %v101
    %v890 = vpop.f32.mrf.mxu0
    %v891 = vadd.f32 %v826, %v890
    %892 = vmatmul.f32.gmra.mxu0 %v104
    %v893 = vpop.f32.mrf.mxu0
    %v894 = vadd.f32 %v829, %v893
    %895 = vmatmul.f32.gmra.mxu0 %v107
    %v896 = vpop.f32.mrf.mxu0
    %v897 = vadd.f32 %v832, %v896
    %898 = vmatmul.f32.gmra.mxu0 %v110
    %v899 = vpop.f32.mrf.mxu0
    %v900 = vadd.f32 %v835, %v899
    %901 = vdwg.mxu0
    %s902 = scalar_lea.vmem [#allocation2], 128
    %903 = vst [vmem:[%s902] sm:$0xff] %v855
    %904 = vst [vmem:[%s902 + $0x8] sm:$0xff] %v858
    %905 = vst [vmem:[%s902 + $0x10] sm:$0xff] %v861
    %906 = vst [vmem:[%s902 + $0x18] sm:$0xff] %v864
    %907 = vst [vmem:[%s902 + $0x20] sm:$0xff] %v867
    %908 = vst [vmem:[%s902 + $0x28] sm:$0xff] %v870
    %909 = vst [vmem:[%s902 + $0x30] sm:$0xff] %v873
    %910 = vst [vmem:[%s902 + $0x38] sm:$0xff] %v876
    %911 = vst [vmem:[%s902 + $0x40] sm:$0xff] %v879
    %912 = vst [vmem:[%s902 + $0x48] sm:$0xff] %v882
    %913 = vst [vmem:[%s902 + $0x50] sm:$0xff] %v885
    %914 = vst [vmem:[%s902 + $0x58] sm:$0xff] %v888
    %915 = vst [vmem:[%s902 + $0x60] sm:$0xff] %v891
    %916 = vst [vmem:[%s902 + $0x68] sm:$0xff] %v894
    %917 = vst [vmem:[%s902 + $0x70] sm:$0xff] %v897
    %918 = vst [vmem:[%s902 + $0x78] sm:$0xff] %v900
    %919 = vadd.xlane.f32.xlu0 %v855
    %v920 = vpop.xlane.xlu0 %919
    %921 = vadd.xlane.f32.xlu0 %v858
    %v922 = vpop.xlane.xlu0 %921
    %923 = vadd.xlane.f32.xlu0 %v861
    %v924 = vpop.xlane.xlu0 %923
    %925 = vadd.xlane.f32.xlu0 %v864
    %v926 = vpop.xlane.xlu0 %925
    %927 = vadd.xlane.f32.xlu0 %v867
    %v928 = vpop.xlane.xlu0 %927
    %929 = vadd.xlane.f32.xlu0 %v870
    %v930 = vpop.xlane.xlu0 %929
    %931 = vadd.xlane.f32.xlu0 %v873
    %v932 = vpop.xlane.xlu0 %931
    %933 = vadd.xlane.f32.xlu0 %v876
    %v934 = vpop.xlane.xlu0 %933
    %935 = vadd.xlane.f32.xlu0 %v879
    %v936 = vpop.xlane.xlu0 %935
    %937 = vadd.xlane.f32.xlu0 %v882
    %v938 = vpop.xlane.xlu0 %937
    %939 = vadd.xlane.f32.xlu0 %v885
    %v940 = vpop.xlane.xlu0 %939
    %941 = vadd.xlane.f32.xlu0 %v888
    %v942 = vpop.xlane.xlu0 %941
    %943 = vadd.xlane.f32.xlu0 %v891
    %v944 = vpop.xlane.xlu0 %943
    %945 = vadd.xlane.f32.xlu0 %v894
    %v946 = vpop.xlane.xlu0 %945
    %947 = vadd.xlane.f32.xlu0 %v897
    %v948 = vpop.xlane.xlu0 %947
    %949 = vadd.xlane.f32.xlu0 %v900
    %v950 = vpop.xlane.xlu0 %949
    %v951 = vadd.f32 %v514, %v920
    %v952 = vadd.f32 %v515, %v922
    %v953 = vadd.f32 %v516, %v924
    %v954 = vadd.f32 %v517, %v926
    %v955 = vadd.f32 %v518, %v928
    %v956 = vadd.f32 %v519, %v930
    %v957 = vadd.f32 %v520, %v932
    %v958 = vadd.f32 %v521, %v934
    %v959 = vadd.f32 %v522, %v936
    %v960 = vadd.f32 %v523, %v938
    %v961 = vadd.f32 %v524, %v940
    %v962 = vadd.f32 %v525, %v942
    %v963 = vadd.f32 %v526, %v944
    %v964 = vadd.f32 %v527, %v946
    %v965 = vadd.f32 %v528, %v948
    %v966 = vadd.f32 %v529, %v950
    %v967 = vmul.f32 %v855, %v855
    %v968 = vmul.f32 %v858, %v858
    %v969 = vmul.f32 %v861, %v861
    %v970 = vmul.f32 %v864, %v864
    %v971 = vmul.f32 %v867, %v867
    %v972 = vmul.f32 %v870, %v870
    %v973 = vmul.f32 %v873, %v873
    %v974 = vmul.f32 %v876, %v876
    %v975 = vmul.f32 %v879, %v879
    %v976 = vmul.f32 %v882, %v882
    %v977 = vmul.f32 %v885, %v885
    %v978 = vmul.f32 %v888, %v888
    %v979 = vmul.f32 %v891, %v891
    %v980 = vmul.f32 %v894, %v894
    %v981 = vmul.f32 %v897, %v897
    %v982 = vmul.f32 %v900, %v900
    %983 = vadd.xlane.f32.xlu0 %v967
    %v984 = vpop.xlane.xlu0 %983
    %985 = vadd.xlane.f32.xlu0 %v968
    %v986 = vpop.xlane.xlu0 %985
    %987 = vadd.xlane.f32.xlu0 %v969
    %v988 = vpop.xlane.xlu0 %987
    %989 = vadd.xlane.f32.xlu0 %v970
    %v990 = vpop.xlane.xlu0 %989
    %991 = vadd.xlane.f32.xlu0 %v971
    %v992 = vpop.xlane.xlu0 %991
    %993 = vadd.xlane.f32.xlu0 %v972
    %v994 = vpop.xlane.xlu0 %993
    %995 = vadd.xlane.f32.xlu0 %v973
    %v996 = vpop.xlane.xlu0 %995
    %997 = vadd.xlane.f32.xlu0 %v974
    %v998 = vpop.xlane.xlu0 %997
    %999 = vadd.xlane.f32.xlu0 %v975
    %v1000 = vpop.xlane.xlu0 %999
    %1001 = vadd.xlane.f32.xlu0 %v976
    %v1002 = vpop.xlane.xlu0 %1001
    %1003 = vadd.xlane.f32.xlu0 %v977
    %v1004 = vpop.xlane.xlu0 %1003
    %1005 = vadd.xlane.f32.xlu0 %v978
    %v1006 = vpop.xlane.xlu0 %1005
    %1007 = vadd.xlane.f32.xlu0 %v979
    %v1008 = vpop.xlane.xlu0 %1007
    %1009 = vadd.xlane.f32.xlu0 %v980
    %v1010 = vpop.xlane.xlu0 %1009
    %1011 = vadd.xlane.f32.xlu0 %v981
    %v1012 = vpop.xlane.xlu0 %1011
    %1013 = vadd.xlane.f32.xlu0 %v982
    %v1014 = vpop.xlane.xlu0 %1013
    %v1015 = vadd.f32 %v578, %v984
    %v1016 = vadd.f32 %v579, %v986
    %v1017 = vadd.f32 %v580, %v988
    %v1018 = vadd.f32 %v581, %v990
    %v1019 = vadd.f32 %v582, %v992
    %v1020 = vadd.f32 %v583, %v994
    %v1021 = vadd.f32 %v584, %v996
    %v1022 = vadd.f32 %v585, %v998
    %v1023 = vadd.f32 %v586, %v1000
    %v1024 = vadd.f32 %v587, %v1002
    %v1025 = vadd.f32 %v588, %v1004
    %v1026 = vadd.f32 %v589, %v1006
    %v1027 = vadd.f32 %v590, %v1008
    %v1028 = vadd.f32 %v591, %v1010
    %v1029 = vadd.f32 %v592, %v1012
    %v1030 = vadd.f32 %v593, %v1014
    %s1031 = scalar_lea.vmem %s0, 256
    %v1032 = vld [vmem:[%s1031] sm:$0xff]
    %v1033 = vld [vmem:[%s1031 + $0x8] sm:$0xff]
    %v1034 = vld [vmem:[%s1031 + $0x10] sm:$0xff]
    %v1035 = vld [vmem:[%s1031 + $0x18] sm:$0xff]
    %v1036 = vld [vmem:[%s1031 + $0x20] sm:$0xff]
    %v1037 = vld [vmem:[%s1031 + $0x28] sm:$0xff]
    %v1038 = vld [vmem:[%s1031 + $0x30] sm:$0xff]
    %v1039 = vld [vmem:[%s1031 + $0x38] sm:$0xff]
    %v1040 = vld [vmem:[%s1031 + $0x40] sm:$0xff]
    %v1041 = vld [vmem:[%s1031 + $0x48] sm:$0xff]
    %v1042 = vld [vmem:[%s1031 + $0x50] sm:$0xff]
    %v1043 = vld [vmem:[%s1031 + $0x58] sm:$0xff]
    %v1044 = vld [vmem:[%s1031 + $0x60] sm:$0xff]
    %v1045 = vld [vmem:[%s1031 + $0x68] sm:$0xff]
    %v1046 = vld [vmem:[%s1031 + $0x70] sm:$0xff]
    %v1047 = vld [vmem:[%s1031 + $0x78] sm:$0xff]
    %1048 = vrot.lane.b32.xlu0 %v1032, 1
    %v1049 = vpop.permute.xlu0 %1048
    %1050 = vrot.lane.b32.xlu0 %v1033, 1
    %v1051 = vpop.permute.xlu0 %1050
    %1052 = vrot.lane.b32.xlu0 %v1034, 1
    %v1053 = vpop.permute.xlu0 %1052
    %1054 = vrot.lane.b32.xlu0 %v1035, 1
    %v1055 = vpop.permute.xlu0 %1054
    %1056 = vrot.lane.b32.xlu0 %v1036, 1
    %v1057 = vpop.permute.xlu0 %1056
    %1058 = vrot.lane.b32.xlu0 %v1037, 1
    %v1059 = vpop.permute.xlu0 %1058
    %1060 = vrot.lane.b32.xlu0 %v1038, 1
    %v1061 = vpop.permute.xlu0 %1060
    %1062 = vrot.lane.b32.xlu0 %v1039, 1
    %v1063 = vpop.permute.xlu0 %1062
    %1064 = vrot.lane.b32.xlu0 %v1040, 1
    %v1065 = vpop.permute.xlu0 %1064
    %1066 = vrot.lane.b32.xlu0 %v1041, 1
    %v1067 = vpop.permute.xlu0 %1066
    %1068 = vrot.lane.b32.xlu0 %v1042, 1
    %v1069 = vpop.permute.xlu0 %1068
    %1070 = vrot.lane.b32.xlu0 %v1043, 1
    %v1071 = vpop.permute.xlu0 %1070
    %1072 = vrot.lane.b32.xlu0 %v1044, 1
    %v1073 = vpop.permute.xlu0 %1072
    %1074 = vrot.lane.b32.xlu0 %v1045, 1
    %v1075 = vpop.permute.xlu0 %1074
    %1076 = vrot.lane.b32.xlu0 %v1046, 1
    %v1077 = vpop.permute.xlu0 %1076
    %1078 = vrot.lane.b32.xlu0 %v1047, 1
    %v1079 = vpop.permute.xlu0 %1078
    %v1080 = vsel %vm61, %v1049, 0.0
    %v1081 = vsel %vm61, %v1051, 0.0
    %v1082 = vsel %vm61, %v1053, 0.0
    %v1083 = vsel %vm61, %v1055, 0.0
    %v1084 = vsel %vm61, %v1057, 0.0
    %v1085 = vsel %vm61, %v1059, 0.0
    %v1086 = vsel %vm61, %v1061, 0.0
    %v1087 = vsel %vm61, %v1063, 0.0
    %v1088 = vsel %vm61, %v1065, 0.0
    %v1089 = vsel %vm61, %v1067, 0.0
    %v1090 = vsel %vm61, %v1069, 0.0
    %v1091 = vsel %vm61, %v1071, 0.0
    %v1092 = vsel %vm61, %v1073, 0.0
    %v1093 = vsel %vm61, %v1075, 0.0
    %v1094 = vsel %vm61, %v1077, 0.0
    %v1095 = vsel %vm61, %v1079, 0.0
    %1096 = vrot.lane.b32.xlu0 %v1032, 127
    %v1097 = vpop.permute.xlu0 %1096
    %1098 = vrot.lane.b32.xlu0 %v1033, 127
    %v1099 = vpop.permute.xlu0 %1098
    %1100 = vrot.lane.b32.xlu0 %v1034, 127
    %v1101 = vpop.permute.xlu0 %1100
    %1102 = vrot.lane.b32.xlu0 %v1035, 127
    %v1103 = vpop.permute.xlu0 %1102
    %1104 = vrot.lane.b32.xlu0 %v1036, 127
    %v1105 = vpop.permute.xlu0 %1104
    %1106 = vrot.lane.b32.xlu0 %v1037, 127
    %v1107 = vpop.permute.xlu0 %1106
    %1108 = vrot.lane.b32.xlu0 %v1038, 127
    %v1109 = vpop.permute.xlu0 %1108
    %1110 = vrot.lane.b32.xlu0 %v1039, 127
    %v1111 = vpop.permute.xlu0 %1110
    %1112 = vrot.lane.b32.xlu0 %v1040, 127
    %v1113 = vpop.permute.xlu0 %1112
    %1114 = vrot.lane.b32.xlu0 %v1041, 127
    %v1115 = vpop.permute.xlu0 %1114
    %1116 = vrot.lane.b32.xlu0 %v1042, 127
    %v1117 = vpop.permute.xlu0 %1116
    %1118 = vrot.lane.b32.xlu0 %v1043, 127
    %v1119 = vpop.permute.xlu0 %1118
    %1120 = vrot.lane.b32.xlu0 %v1044, 127
    %v1121 = vpop.permute.xlu0 %1120
    %1122 = vrot.lane.b32.xlu0 %v1045, 127
    %v1123 = vpop.permute.xlu0 %1122
    %1124 = vrot.lane.b32.xlu0 %v1046, 127
    %v1125 = vpop.permute.xlu0 %1124
    %1126 = vrot.lane.b32.xlu0 %v1047, 127
    %v1127 = vpop.permute.xlu0 %1126
    %v1128 = vsel %vm62, %v1097, 0.0
    %v1129 = vsel %vm62, %v1099, 0.0
    %v1130 = vsel %vm62, %v1101, 0.0
    %v1131 = vsel %vm62, %v1103, 0.0
    %v1132 = vsel %vm62, %v1105, 0.0
    %v1133 = vsel %vm62, %v1107, 0.0
    %v1134 = vsel %vm62, %v1109, 0.0
    %v1135 = vsel %vm62, %v1111, 0.0
    %v1136 = vsel %vm62, %v1113, 0.0
    %v1137 = vsel %vm62, %v1115, 0.0
    %v1138 = vsel %vm62, %v1117, 0.0
    %v1139 = vsel %vm62, %v1119, 0.0
    %v1140 = vsel %vm62, %v1121, 0.0
    %v1141 = vsel %vm62, %v1123, 0.0
    %v1142 = vsel %vm62, %v1125, 0.0
    %v1143 = vsel %vm62, %v1127, 0.0
    %1144 = vmatpush.msra.mxu0 %v1095
    %1145 = vmatpush.msra.mxu0 %v1094
    %1146 = vmatpush.msra.mxu0 %v1093
    %1147 = vmatpush.msra.mxu0 %v1092
    %1148 = vmatpush.msra.mxu0 %v1091
    %1149 = vmatpush.msra.mxu0 %v1090
    %1150 = vmatpush.msra.mxu0 %v1089
    %1151 = vmatpush.msra.mxu0 %v1088
    %1152 = vmatpush.msra.mxu0 %v1087
    %1153 = vmatpush.msra.mxu0 %v1086
    %1154 = vmatpush.msra.mxu0 %v1085
    %1155 = vmatpush.msra.mxu0 %v1084
    %1156 = vmatpush.msra.mxu0 %v1083
    %1157 = vmatpush.msra.mxu0 %v1082
    %1158 = vmatpush.msra.mxu0 %v1081
    %1159 = vmatpush.msra.mxu0 %v1080
    %1160 = vmatmul.f32.gmra.mxu0 %v63
    %v1161 = vpop.f32.mrf.mxu0
    %v1162 = vadd.f32 0.0, %v1161
    %1163 = vmatmul.f32.gmra.mxu0 %v66
    %v1164 = vpop.f32.mrf.mxu0
    %v1165 = vadd.f32 0.0, %v1164
    %1166 = vmatmul.f32.gmra.mxu0 %v69
    %v1167 = vpop.f32.mrf.mxu0
    %v1168 = vadd.f32 0.0, %v1167
    %1169 = vmatmul.f32.gmra.mxu0 %v72
    %v1170 = vpop.f32.mrf.mxu0
    %v1171 = vadd.f32 0.0, %v1170
    %1172 = vmatmul.f32.gmra.mxu0 %v75
    %v1173 = vpop.f32.mrf.mxu0
    %v1174 = vadd.f32 0.0, %v1173
    %1175 = vmatmul.f32.gmra.mxu0 %v78
    %v1176 = vpop.f32.mrf.mxu0
    %v1177 = vadd.f32 0.0, %v1176
    %1178 = vmatmul.f32.gmra.mxu0 %v81
    %v1179 = vpop.f32.mrf.mxu0
    %v1180 = vadd.f32 0.0, %v1179
    %1181 = vmatmul.f32.gmra.mxu0 %v84
    %v1182 = vpop.f32.mrf.mxu0
    %v1183 = vadd.f32 0.0, %v1182
    %1184 = vmatmul.f32.gmra.mxu0 %v87
    %v1185 = vpop.f32.mrf.mxu0
    %v1186 = vadd.f32 0.0, %v1185
    %1187 = vmatmul.f32.gmra.mxu0 %v90
    %v1188 = vpop.f32.mrf.mxu0
    %v1189 = vadd.f32 0.0, %v1188
    %1190 = vmatmul.f32.gmra.mxu0 %v93
    %v1191 = vpop.f32.mrf.mxu0
    %v1192 = vadd.f32 0.0, %v1191
    %1193 = vmatmul.f32.gmra.mxu0 %v96
    %v1194 = vpop.f32.mrf.mxu0
    %v1195 = vadd.f32 0.0, %v1194
    %1196 = vmatmul.f32.gmra.mxu0 %v99
    %v1197 = vpop.f32.mrf.mxu0
    %v1198 = vadd.f32 0.0, %v1197
    %1199 = vmatmul.f32.gmra.mxu0 %v102
    %v1200 = vpop.f32.mrf.mxu0
    %v1201 = vadd.f32 0.0, %v1200
    %1202 = vmatmul.f32.gmra.mxu0 %v105
    %v1203 = vpop.f32.mrf.mxu0
    %v1204 = vadd.f32 0.0, %v1203
    %1205 = vmatmul.f32.gmra.mxu0 %v108
    %v1206 = vpop.f32.mrf.mxu0
    %v1207 = vadd.f32 0.0, %v1206
    %1208 = vdwg.mxu0
    %1209 = vmatpush.msra.mxu0 %v1047
    %1210 = vmatpush.msra.mxu0 %v1046
    %1211 = vmatpush.msra.mxu0 %v1045
    %1212 = vmatpush.msra.mxu0 %v1044
    %1213 = vmatpush.msra.mxu0 %v1043
    %1214 = vmatpush.msra.mxu0 %v1042
    %1215 = vmatpush.msra.mxu0 %v1041
    %1216 = vmatpush.msra.mxu0 %v1040
    %1217 = vmatpush.msra.mxu0 %v1039
    %1218 = vmatpush.msra.mxu0 %v1038
    %1219 = vmatpush.msra.mxu0 %v1037
    %1220 = vmatpush.msra.mxu0 %v1036
    %1221 = vmatpush.msra.mxu0 %v1035
    %1222 = vmatpush.msra.mxu0 %v1034
    %1223 = vmatpush.msra.mxu0 %v1033
    %1224 = vmatpush.msra.mxu0 %v1032
    %1225 = vmatmul.f32.gmra.mxu0 %v64
    %v1226 = vpop.f32.mrf.mxu0
    %v1227 = vadd.f32 %v1162, %v1226
    %1228 = vmatmul.f32.gmra.mxu0 %v67
    %v1229 = vpop.f32.mrf.mxu0
    %v1230 = vadd.f32 %v1165, %v1229
    %1231 = vmatmul.f32.gmra.mxu0 %v70
    %v1232 = vpop.f32.mrf.mxu0
    %v1233 = vadd.f32 %v1168, %v1232
    %1234 = vmatmul.f32.gmra.mxu0 %v73
    %v1235 = vpop.f32.mrf.mxu0
    %v1236 = vadd.f32 %v1171, %v1235
    %1237 = vmatmul.f32.gmra.mxu0 %v76
    %v1238 = vpop.f32.mrf.mxu0
    %v1239 = vadd.f32 %v1174, %v1238
    %1240 = vmatmul.f32.gmra.mxu0 %v79
    %v1241 = vpop.f32.mrf.mxu0
    %v1242 = vadd.f32 %v1177, %v1241
    %1243 = vmatmul.f32.gmra.mxu0 %v82
    %v1244 = vpop.f32.mrf.mxu0
    %v1245 = vadd.f32 %v1180, %v1244
    %1246 = vmatmul.f32.gmra.mxu0 %v85
    %v1247 = vpop.f32.mrf.mxu0
    %v1248 = vadd.f32 %v1183, %v1247
    %1249 = vmatmul.f32.gmra.mxu0 %v88
    %v1250 = vpop.f32.mrf.mxu0
    %v1251 = vadd.f32 %v1186, %v1250
    %1252 = vmatmul.f32.gmra.mxu0 %v91
    %v1253 = vpop.f32.mrf.mxu0
    %v1254 = vadd.f32 %v1189, %v1253
    %1255 = vmatmul.f32.gmra.mxu0 %v94
    %v1256 = vpop.f32.mrf.mxu0
    %v1257 = vadd.f32 %v1192, %v1256
    %1258 = vmatmul.f32.gmra.mxu0 %v97
    %v1259 = vpop.f32.mrf.mxu0
    %v1260 = vadd.f32 %v1195, %v1259
    %1261 = vmatmul.f32.gmra.mxu0 %v100
    %v1262 = vpop.f32.mrf.mxu0
    %v1263 = vadd.f32 %v1198, %v1262
    %1264 = vmatmul.f32.gmra.mxu0 %v103
    %v1265 = vpop.f32.mrf.mxu0
    %v1266 = vadd.f32 %v1201, %v1265
    %1267 = vmatmul.f32.gmra.mxu0 %v106
    %v1268 = vpop.f32.mrf.mxu0
    %v1269 = vadd.f32 %v1204, %v1268
    %1270 = vmatmul.f32.gmra.mxu0 %v109
    %v1271 = vpop.f32.mrf.mxu0
    %v1272 = vadd.f32 %v1207, %v1271
    %1273 = vdwg.mxu0
    %1274 = vmatpush.msra.mxu0 %v1143
    %1275 = vmatpush.msra.mxu0 %v1142
    %1276 = vmatpush.msra.mxu0 %v1141
    %1277 = vmatpush.msra.mxu0 %v1140
    %1278 = vmatpush.msra.mxu0 %v1139
    %1279 = vmatpush.msra.mxu0 %v1138
    %1280 = vmatpush.msra.mxu0 %v1137
    %1281 = vmatpush.msra.mxu0 %v1136
    %1282 = vmatpush.msra.mxu0 %v1135
    %1283 = vmatpush.msra.mxu0 %v1134
    %1284 = vmatpush.msra.mxu0 %v1133
    %1285 = vmatpush.msra.mxu0 %v1132
    %1286 = vmatpush.msra.mxu0 %v1131
    %1287 = vmatpush.msra.mxu0 %v1130
    %1288 = vmatpush.msra.mxu0 %v1129
    %1289 = vmatpush.msra.mxu0 %v1128
    %1290 = vmatmul.f32.gmra.mxu0 %v65
    %v1291 = vpop.f32.mrf.mxu0
    %v1292 = vadd.f32 %v1227, %v1291
    %1293 = vmatmul.f32.gmra.mxu0 %v68
    %v1294 = vpop.f32.mrf.mxu0
    %v1295 = vadd.f32 %v1230, %v1294
    %1296 = vmatmul.f32.gmra.mxu0 %v71
    %v1297 = vpop.f32.mrf.mxu0
    %v1298 = vadd.f32 %v1233, %v1297
    %1299 = vmatmul.f32.gmra.mxu0 %v74
    %v1300 = vpop.f32.mrf.mxu0
    %v1301 = vadd.f32 %v1236, %v1300
    %1302 = vmatmul.f32.gmra.mxu0 %v77
    %v1303 = vpop.f32.mrf.mxu0
    %v1304 = vadd.f32 %v1239, %v1303
    %1305 = vmatmul.f32.gmra.mxu0 %v80
    %v1306 = vpop.f32.mrf.mxu0
    %v1307 = vadd.f32 %v1242, %v1306
    %1308 = vmatmul.f32.gmra.mxu0 %v83
    %v1309 = vpop.f32.mrf.mxu0
    %v1310 = vadd.f32 %v1245, %v1309
    %1311 = vmatmul.f32.gmra.mxu0 %v86
    %v1312 = vpop.f32.mrf.mxu0
    %v1313 = vadd.f32 %v1248, %v1312
    %1314 = vmatmul.f32.gmra.mxu0 %v89
    %v1315 = vpop.f32.mrf.mxu0
    %v1316 = vadd.f32 %v1251, %v1315
    %1317 = vmatmul.f32.gmra.mxu0 %v92
    %v1318 = vpop.f32.mrf.mxu0
    %v1319 = vadd.f32 %v1254, %v1318
    %1320 = vmatmul.f32.gmra.mxu0 %v95
    %v1321 = vpop.f32.mrf.mxu0
    %v1322 = vadd.f32 %v1257, %v1321
    %1323 = vmatmul.f32.gmra.mxu0 %v98
    %v1324 = vpop.f32.mrf.mxu0
    %v1325 = vadd.f32 %v1260, %v1324
    %1326 = vmatmul.f32.gmra.mxu0 %v101
    %v1327 = vpop.f32.mrf.mxu0
    %v1328 = vadd.f32 %v1263, %v1327
    %1329 = vmatmul.f32.gmra.mxu0 %v104
    %v1330 = vpop.f32.mrf.mxu0
    %v1331 = vadd.f32 %v1266, %v1330
    %1332 = vmatmul.f32.gmra.mxu0 %v107
    %v1333 = vpop.f32.mrf.mxu0
    %v1334 = vadd.f32 %v1269, %v1333
    %1335 = vmatmul.f32.gmra.mxu0 %v110
    %v1336 = vpop.f32.mrf.mxu0
    %v1337 = vadd.f32 %v1272, %v1336
    %1338 = vdwg.mxu0
    %s1339 = scalar_lea.vmem [#allocation2], 256
    %1340 = vst [vmem:[%s1339] sm:$0xff] %v1292
    %1341 = vst [vmem:[%s1339 + $0x8] sm:$0xff] %v1295
    %1342 = vst [vmem:[%s1339 + $0x10] sm:$0xff] %v1298
    %1343 = vst [vmem:[%s1339 + $0x18] sm:$0xff] %v1301
    %1344 = vst [vmem:[%s1339 + $0x20] sm:$0xff] %v1304
    %1345 = vst [vmem:[%s1339 + $0x28] sm:$0xff] %v1307
    %1346 = vst [vmem:[%s1339 + $0x30] sm:$0xff] %v1310
    %1347 = vst [vmem:[%s1339 + $0x38] sm:$0xff] %v1313
    %1348 = vst [vmem:[%s1339 + $0x40] sm:$0xff] %v1316
    %1349 = vst [vmem:[%s1339 + $0x48] sm:$0xff] %v1319
    %1350 = vst [vmem:[%s1339 + $0x50] sm:$0xff] %v1322
    %1351 = vst [vmem:[%s1339 + $0x58] sm:$0xff] %v1325
    %1352 = vst [vmem:[%s1339 + $0x60] sm:$0xff] %v1328
    %1353 = vst [vmem:[%s1339 + $0x68] sm:$0xff] %v1331
    %1354 = vst [vmem:[%s1339 + $0x70] sm:$0xff] %v1334
    %1355 = vst [vmem:[%s1339 + $0x78] sm:$0xff] %v1337
    %1356 = vadd.xlane.f32.xlu0 %v1292
    %v1357 = vpop.xlane.xlu0 %1356
    %1358 = vadd.xlane.f32.xlu0 %v1295
    %v1359 = vpop.xlane.xlu0 %1358
    %1360 = vadd.xlane.f32.xlu0 %v1298
    %v1361 = vpop.xlane.xlu0 %1360
    %1362 = vadd.xlane.f32.xlu0 %v1301
    %v1363 = vpop.xlane.xlu0 %1362
    %1364 = vadd.xlane.f32.xlu0 %v1304
    %v1365 = vpop.xlane.xlu0 %1364
    %1366 = vadd.xlane.f32.xlu0 %v1307
    %v1367 = vpop.xlane.xlu0 %1366
    %1368 = vadd.xlane.f32.xlu0 %v1310
    %v1369 = vpop.xlane.xlu0 %1368
    %1370 = vadd.xlane.f32.xlu0 %v1313
    %v1371 = vpop.xlane.xlu0 %1370
    %1372 = vadd.xlane.f32.xlu0 %v1316
    %v1373 = vpop.xlane.xlu0 %1372
    %1374 = vadd.xlane.f32.xlu0 %v1319
    %v1375 = vpop.xlane.xlu0 %1374
    %1376 = vadd.xlane.f32.xlu0 %v1322
    %v1377 = vpop.xlane.xlu0 %1376
    %1378 = vadd.xlane.f32.xlu0 %v1325
    %v1379 = vpop.xlane.xlu0 %1378
    %1380 = vadd.xlane.f32.xlu0 %v1328
    %v1381 = vpop.xlane.xlu0 %1380
    %1382 = vadd.xlane.f32.xlu0 %v1331
    %v1383 = vpop.xlane.xlu0 %1382
    %1384 = vadd.xlane.f32.xlu0 %v1334
    %v1385 = vpop.xlane.xlu0 %1384
    %1386 = vadd.xlane.f32.xlu0 %v1337
    %v1387 = vpop.xlane.xlu0 %1386
    %v1388 = vadd.f32 %v951, %v1357
    %v1389 = vadd.f32 %v952, %v1359
    %v1390 = vadd.f32 %v953, %v1361
    %v1391 = vadd.f32 %v954, %v1363
    %v1392 = vadd.f32 %v955, %v1365
    %v1393 = vadd.f32 %v956, %v1367
    %v1394 = vadd.f32 %v957, %v1369
    %v1395 = vadd.f32 %v958, %v1371
    %v1396 = vadd.f32 %v959, %v1373
    %v1397 = vadd.f32 %v960, %v1375
    %v1398 = vadd.f32 %v961, %v1377
    %v1399 = vadd.f32 %v962, %v1379
    %v1400 = vadd.f32 %v963, %v1381
    %v1401 = vadd.f32 %v964, %v1383
    %v1402 = vadd.f32 %v965, %v1385
    %v1403 = vadd.f32 %v966, %v1387
    %v1404 = vmul.f32 %v1292, %v1292
    %v1405 = vmul.f32 %v1295, %v1295
    %v1406 = vmul.f32 %v1298, %v1298
    %v1407 = vmul.f32 %v1301, %v1301
    %v1408 = vmul.f32 %v1304, %v1304
    %v1409 = vmul.f32 %v1307, %v1307
    %v1410 = vmul.f32 %v1310, %v1310
    %v1411 = vmul.f32 %v1313, %v1313
    %v1412 = vmul.f32 %v1316, %v1316
    %v1413 = vmul.f32 %v1319, %v1319
    %v1414 = vmul.f32 %v1322, %v1322
    %v1415 = vmul.f32 %v1325, %v1325
    %v1416 = vmul.f32 %v1328, %v1328
    %v1417 = vmul.f32 %v1331, %v1331
    %v1418 = vmul.f32 %v1334, %v1334
    %v1419 = vmul.f32 %v1337, %v1337
    %1420 = vadd.xlane.f32.xlu0 %v1404
    %v1421 = vpop.xlane.xlu0 %1420
    %1422 = vadd.xlane.f32.xlu0 %v1405
    %v1423 = vpop.xlane.xlu0 %1422
    %1424 = vadd.xlane.f32.xlu0 %v1406
    %v1425 = vpop.xlane.xlu0 %1424
    %1426 = vadd.xlane.f32.xlu0 %v1407
    %v1427 = vpop.xlane.xlu0 %1426
    %1428 = vadd.xlane.f32.xlu0 %v1408
    %v1429 = vpop.xlane.xlu0 %1428
    %1430 = vadd.xlane.f32.xlu0 %v1409
    %v1431 = vpop.xlane.xlu0 %1430
    %1432 = vadd.xlane.f32.xlu0 %v1410
    %v1433 = vpop.xlane.xlu0 %1432
    %1434 = vadd.xlane.f32.xlu0 %v1411
    %v1435 = vpop.xlane.xlu0 %1434
    %1436 = vadd.xlane.f32.xlu0 %v1412
    %v1437 = vpop.xlane.xlu0 %1436
    %1438 = vadd.xlane.f32.xlu0 %v1413
    %v1439 = vpop.xlane.xlu0 %1438
    %1440 = vadd.xlane.f32.xlu0 %v1414
    %v1441 = vpop.xlane.xlu0 %1440
    %1442 = vadd.xlane.f32.xlu0 %v1415
    %v1443 = vpop.xlane.xlu0 %1442
    %1444 = vadd.xlane.f32.xlu0 %v1416
    %v1445 = vpop.xlane.xlu0 %1444
    %1446 = vadd.xlane.f32.xlu0 %v1417
    %v1447 = vpop.xlane.xlu0 %1446
    %1448 = vadd.xlane.f32.xlu0 %v1418
    %v1449 = vpop.xlane.xlu0 %1448
    %1450 = vadd.xlane.f32.xlu0 %v1419
    %v1451 = vpop.xlane.xlu0 %1450
    %v1452 = vadd.f32 %v1015, %v1421
    %v1453 = vadd.f32 %v1016, %v1423
    %v1454 = vadd.f32 %v1017, %v1425
    %v1455 = vadd.f32 %v1018, %v1427
    %v1456 = vadd.f32 %v1019, %v1429
    %v1457 = vadd.f32 %v1020, %v1431
    %v1458 = vadd.f32 %v1021, %v1433
    %v1459 = vadd.f32 %v1022, %v1435
    %v1460 = vadd.f32 %v1023, %v1437
    %v1461 = vadd.f32 %v1024, %v1439
    %v1462 = vadd.f32 %v1025, %v1441
    %v1463 = vadd.f32 %v1026, %v1443
    %v1464 = vadd.f32 %v1027, %v1445
    %v1465 = vadd.f32 %v1028, %v1447
    %v1466 = vadd.f32 %v1029, %v1449
    %v1467 = vadd.f32 %v1030, %v1451
    %s1468 = scalar_lea.vmem %s0, 384
    %v1469 = vld [vmem:[%s1468] sm:$0xff]
    %v1470 = vld [vmem:[%s1468 + $0x8] sm:$0xff]
    %v1471 = vld [vmem:[%s1468 + $0x10] sm:$0xff]
    %v1472 = vld [vmem:[%s1468 + $0x18] sm:$0xff]
    %v1473 = vld [vmem:[%s1468 + $0x20] sm:$0xff]
    %v1474 = vld [vmem:[%s1468 + $0x28] sm:$0xff]
    %v1475 = vld [vmem:[%s1468 + $0x30] sm:$0xff]
    %v1476 = vld [vmem:[%s1468 + $0x38] sm:$0xff]
    %v1477 = vld [vmem:[%s1468 + $0x40] sm:$0xff]
    %v1478 = vld [vmem:[%s1468 + $0x48] sm:$0xff]
    %v1479 = vld [vmem:[%s1468 + $0x50] sm:$0xff]
    %v1480 = vld [vmem:[%s1468 + $0x58] sm:$0xff]
    %v1481 = vld [vmem:[%s1468 + $0x60] sm:$0xff]
    %v1482 = vld [vmem:[%s1468 + $0x68] sm:$0xff]
    %v1483 = vld [vmem:[%s1468 + $0x70] sm:$0xff]
    %v1484 = vld [vmem:[%s1468 + $0x78] sm:$0xff]
    %1485 = vrot.lane.b32.xlu0 %v1469, 1
    %v1486 = vpop.permute.xlu0 %1485
    %1487 = vrot.lane.b32.xlu0 %v1470, 1
    %v1488 = vpop.permute.xlu0 %1487
    %1489 = vrot.lane.b32.xlu0 %v1471, 1
    %v1490 = vpop.permute.xlu0 %1489
    %1491 = vrot.lane.b32.xlu0 %v1472, 1
    %v1492 = vpop.permute.xlu0 %1491
    %1493 = vrot.lane.b32.xlu0 %v1473, 1
    %v1494 = vpop.permute.xlu0 %1493
    %1495 = vrot.lane.b32.xlu0 %v1474, 1
    %v1496 = vpop.permute.xlu0 %1495
    %1497 = vrot.lane.b32.xlu0 %v1475, 1
    %v1498 = vpop.permute.xlu0 %1497
    %1499 = vrot.lane.b32.xlu0 %v1476, 1
    %v1500 = vpop.permute.xlu0 %1499
    %1501 = vrot.lane.b32.xlu0 %v1477, 1
    %v1502 = vpop.permute.xlu0 %1501
    %1503 = vrot.lane.b32.xlu0 %v1478, 1
    %v1504 = vpop.permute.xlu0 %1503
    %1505 = vrot.lane.b32.xlu0 %v1479, 1
    %v1506 = vpop.permute.xlu0 %1505
    %1507 = vrot.lane.b32.xlu0 %v1480, 1
    %v1508 = vpop.permute.xlu0 %1507
    %1509 = vrot.lane.b32.xlu0 %v1481, 1
    %v1510 = vpop.permute.xlu0 %1509
    %1511 = vrot.lane.b32.xlu0 %v1482, 1
    %v1512 = vpop.permute.xlu0 %1511
    %1513 = vrot.lane.b32.xlu0 %v1483, 1
    %v1514 = vpop.permute.xlu0 %1513
    %1515 = vrot.lane.b32.xlu0 %v1484, 1
    %v1516 = vpop.permute.xlu0 %1515
    %v1517 = vsel %vm61, %v1486, 0.0
    %v1518 = vsel %vm61, %v1488, 0.0
    %v1519 = vsel %vm61, %v1490, 0.0
    %v1520 = vsel %vm61, %v1492, 0.0
    %v1521 = vsel %vm61, %v1494, 0.0
    %v1522 = vsel %vm61, %v1496, 0.0
    %v1523 = vsel %vm61, %v1498, 0.0
    %v1524 = vsel %vm61, %v1500, 0.0
    %v1525 = vsel %vm61, %v1502, 0.0
    %v1526 = vsel %vm61, %v1504, 0.0
    %v1527 = vsel %vm61, %v1506, 0.0
    %v1528 = vsel %vm61, %v1508, 0.0
    %v1529 = vsel %vm61, %v1510, 0.0
    %v1530 = vsel %vm61, %v1512, 0.0
    %v1531 = vsel %vm61, %v1514, 0.0
    %v1532 = vsel %vm61, %v1516, 0.0
    %1533 = vrot.lane.b32.xlu0 %v1469, 127
    %v1534 = vpop.permute.xlu0 %1533
    %1535 = vrot.lane.b32.xlu0 %v1470, 127
    %v1536 = vpop.permute.xlu0 %1535
    %1537 = vrot.lane.b32.xlu0 %v1471, 127
    %v1538 = vpop.permute.xlu0 %1537
    %1539 = vrot.lane.b32.xlu0 %v1472, 127
    %v1540 = vpop.permute.xlu0 %1539
    %1541 = vrot.lane.b32.xlu0 %v1473, 127
    %v1542 = vpop.permute.xlu0 %1541
    %1543 = vrot.lane.b32.xlu0 %v1474, 127
    %v1544 = vpop.permute.xlu0 %1543
    %1545 = vrot.lane.b32.xlu0 %v1475, 127
    %v1546 = vpop.permute.xlu0 %1545
    %1547 = vrot.lane.b32.xlu0 %v1476, 127
    %v1548 = vpop.permute.xlu0 %1547
    %1549 = vrot.lane.b32.xlu0 %v1477, 127
    %v1550 = vpop.permute.xlu0 %1549
    %1551 = vrot.lane.b32.xlu0 %v1478, 127
    %v1552 = vpop.permute.xlu0 %1551
    %1553 = vrot.lane.b32.xlu0 %v1479, 127
    %v1554 = vpop.permute.xlu0 %1553
    %1555 = vrot.lane.b32.xlu0 %v1480, 127
    %v1556 = vpop.permute.xlu0 %1555
    %1557 = vrot.lane.b32.xlu0 %v1481, 127
    %v1558 = vpop.permute.xlu0 %1557
    %1559 = vrot.lane.b32.xlu0 %v1482, 127
    %v1560 = vpop.permute.xlu0 %1559
    %1561 = vrot.lane.b32.xlu0 %v1483, 127
    %v1562 = vpop.permute.xlu0 %1561
    %1563 = vrot.lane.b32.xlu0 %v1484, 127
    %v1564 = vpop.permute.xlu0 %1563
    %v1565 = vsel %vm62, %v1534, 0.0
    %v1566 = vsel %vm62, %v1536, 0.0
    %v1567 = vsel %vm62, %v1538, 0.0
    %v1568 = vsel %vm62, %v1540, 0.0
    %v1569 = vsel %vm62, %v1542, 0.0
    %v1570 = vsel %vm62, %v1544, 0.0
    %v1571 = vsel %vm62, %v1546, 0.0
    %v1572 = vsel %vm62, %v1548, 0.0
    %v1573 = vsel %vm62, %v1550, 0.0
    %v1574 = vsel %vm62, %v1552, 0.0
    %v1575 = vsel %vm62, %v1554, 0.0
    %v1576 = vsel %vm62, %v1556, 0.0
    %v1577 = vsel %vm62, %v1558, 0.0
    %v1578 = vsel %vm62, %v1560, 0.0
    %v1579 = vsel %vm62, %v1562, 0.0
    %v1580 = vsel %vm62, %v1564, 0.0
    %1581 = vmatpush.msra.mxu0 %v1532
    %1582 = vmatpush.msra.mxu0 %v1531
    %1583 = vmatpush.msra.mxu0 %v1530
    %1584 = vmatpush.msra.mxu0 %v1529
    %1585 = vmatpush.msra.mxu0 %v1528
    %1586 = vmatpush.msra.mxu0 %v1527
    %1587 = vmatpush.msra.mxu0 %v1526
    %1588 = vmatpush.msra.mxu0 %v1525
    %1589 = vmatpush.msra.mxu0 %v1524
    %1590 = vmatpush.msra.mxu0 %v1523
    %1591 = vmatpush.msra.mxu0 %v1522
    %1592 = vmatpush.msra.mxu0 %v1521
    %1593 = vmatpush.msra.mxu0 %v1520
    %1594 = vmatpush.msra.mxu0 %v1519
    %1595 = vmatpush.msra.mxu0 %v1518
    %1596 = vmatpush.msra.mxu0 %v1517
    %1597 = vmatmul.f32.gmra.mxu0 %v63
    %v1598 = vpop.f32.mrf.mxu0
    %v1599 = vadd.f32 0.0, %v1598
    %1600 = vmatmul.f32.gmra.mxu0 %v66
    %v1601 = vpop.f32.mrf.mxu0
    %v1602 = vadd.f32 0.0, %v1601
    %1603 = vmatmul.f32.gmra.mxu0 %v69
    %v1604 = vpop.f32.mrf.mxu0
    %v1605 = vadd.f32 0.0, %v1604
    %1606 = vmatmul.f32.gmra.mxu0 %v72
    %v1607 = vpop.f32.mrf.mxu0
    %v1608 = vadd.f32 0.0, %v1607
    %1609 = vmatmul.f32.gmra.mxu0 %v75
    %v1610 = vpop.f32.mrf.mxu0
    %v1611 = vadd.f32 0.0, %v1610
    %1612 = vmatmul.f32.gmra.mxu0 %v78
    %v1613 = vpop.f32.mrf.mxu0
    %v1614 = vadd.f32 0.0, %v1613
    %1615 = vmatmul.f32.gmra.mxu0 %v81
    %v1616 = vpop.f32.mrf.mxu0
    %v1617 = vadd.f32 0.0, %v1616
    %1618 = vmatmul.f32.gmra.mxu0 %v84
    %v1619 = vpop.f32.mrf.mxu0
    %v1620 = vadd.f32 0.0, %v1619
    %1621 = vmatmul.f32.gmra.mxu0 %v87
    %v1622 = vpop.f32.mrf.mxu0
    %v1623 = vadd.f32 0.0, %v1622
    %1624 = vmatmul.f32.gmra.mxu0 %v90
    %v1625 = vpop.f32.mrf.mxu0
    %v1626 = vadd.f32 0.0, %v1625
    %1627 = vmatmul.f32.gmra.mxu0 %v93
    %v1628 = vpop.f32.mrf.mxu0
    %v1629 = vadd.f32 0.0, %v1628
    %1630 = vmatmul.f32.gmra.mxu0 %v96
    %v1631 = vpop.f32.mrf.mxu0
    %v1632 = vadd.f32 0.0, %v1631
    %1633 = vmatmul.f32.gmra.mxu0 %v99
    %v1634 = vpop.f32.mrf.mxu0
    %v1635 = vadd.f32 0.0, %v1634
    %1636 = vmatmul.f32.gmra.mxu0 %v102
    %v1637 = vpop.f32.mrf.mxu0
    %v1638 = vadd.f32 0.0, %v1637
    %1639 = vmatmul.f32.gmra.mxu0 %v105
    %v1640 = vpop.f32.mrf.mxu0
    %v1641 = vadd.f32 0.0, %v1640
    %1642 = vmatmul.f32.gmra.mxu0 %v108
    %v1643 = vpop.f32.mrf.mxu0
    %v1644 = vadd.f32 0.0, %v1643
    %1645 = vdwg.mxu0
    %1646 = vmatpush.msra.mxu0 %v1484
    %1647 = vmatpush.msra.mxu0 %v1483
    %1648 = vmatpush.msra.mxu0 %v1482
    %1649 = vmatpush.msra.mxu0 %v1481
    %1650 = vmatpush.msra.mxu0 %v1480
    %1651 = vmatpush.msra.mxu0 %v1479
    %1652 = vmatpush.msra.mxu0 %v1478
    %1653 = vmatpush.msra.mxu0 %v1477
    %1654 = vmatpush.msra.mxu0 %v1476
    %1655 = vmatpush.msra.mxu0 %v1475
    %1656 = vmatpush.msra.mxu0 %v1474
    %1657 = vmatpush.msra.mxu0 %v1473
    %1658 = vmatpush.msra.mxu0 %v1472
    %1659 = vmatpush.msra.mxu0 %v1471
    %1660 = vmatpush.msra.mxu0 %v1470
    %1661 = vmatpush.msra.mxu0 %v1469
    %1662 = vmatmul.f32.gmra.mxu0 %v64
    %v1663 = vpop.f32.mrf.mxu0
    %v1664 = vadd.f32 %v1599, %v1663
    %1665 = vmatmul.f32.gmra.mxu0 %v67
    %v1666 = vpop.f32.mrf.mxu0
    %v1667 = vadd.f32 %v1602, %v1666
    %1668 = vmatmul.f32.gmra.mxu0 %v70
    %v1669 = vpop.f32.mrf.mxu0
    %v1670 = vadd.f32 %v1605, %v1669
    %1671 = vmatmul.f32.gmra.mxu0 %v73
    %v1672 = vpop.f32.mrf.mxu0
    %v1673 = vadd.f32 %v1608, %v1672
    %1674 = vmatmul.f32.gmra.mxu0 %v76
    %v1675 = vpop.f32.mrf.mxu0
    %v1676 = vadd.f32 %v1611, %v1675
    %1677 = vmatmul.f32.gmra.mxu0 %v79
    %v1678 = vpop.f32.mrf.mxu0
    %v1679 = vadd.f32 %v1614, %v1678
    %1680 = vmatmul.f32.gmra.mxu0 %v82
    %v1681 = vpop.f32.mrf.mxu0
    %v1682 = vadd.f32 %v1617, %v1681
    %1683 = vmatmul.f32.gmra.mxu0 %v85
    %v1684 = vpop.f32.mrf.mxu0
    %v1685 = vadd.f32 %v1620, %v1684
    %1686 = vmatmul.f32.gmra.mxu0 %v88
    %v1687 = vpop.f32.mrf.mxu0
    %v1688 = vadd.f32 %v1623, %v1687
    %1689 = vmatmul.f32.gmra.mxu0 %v91
    %v1690 = vpop.f32.mrf.mxu0
    %v1691 = vadd.f32 %v1626, %v1690
    %1692 = vmatmul.f32.gmra.mxu0 %v94
    %v1693 = vpop.f32.mrf.mxu0
    %v1694 = vadd.f32 %v1629, %v1693
    %1695 = vmatmul.f32.gmra.mxu0 %v97
    %v1696 = vpop.f32.mrf.mxu0
    %v1697 = vadd.f32 %v1632, %v1696
    %1698 = vmatmul.f32.gmra.mxu0 %v100
    %v1699 = vpop.f32.mrf.mxu0
    %v1700 = vadd.f32 %v1635, %v1699
    %1701 = vmatmul.f32.gmra.mxu0 %v103
    %v1702 = vpop.f32.mrf.mxu0
    %v1703 = vadd.f32 %v1638, %v1702
    %1704 = vmatmul.f32.gmra.mxu0 %v106
    %v1705 = vpop.f32.mrf.mxu0
    %v1706 = vadd.f32 %v1641, %v1705
    %1707 = vmatmul.f32.gmra.mxu0 %v109
    %v1708 = vpop.f32.mrf.mxu0
    %v1709 = vadd.f32 %v1644, %v1708
    %1710 = vdwg.mxu0
    %1711 = vmatpush.msra.mxu0 %v1580
    %1712 = vmatpush.msra.mxu0 %v1579
    %1713 = vmatpush.msra.mxu0 %v1578
    %1714 = vmatpush.msra.mxu0 %v1577
    %1715 = vmatpush.msra.mxu0 %v1576
    %1716 = vmatpush.msra.mxu0 %v1575
    %1717 = vmatpush.msra.mxu0 %v1574
    %1718 = vmatpush.msra.mxu0 %v1573
    %1719 = vmatpush.msra.mxu0 %v1572
    %1720 = vmatpush.msra.mxu0 %v1571
    %1721 = vmatpush.msra.mxu0 %v1570
    %1722 = vmatpush.msra.mxu0 %v1569
    %1723 = vmatpush.msra.mxu0 %v1568
    %1724 = vmatpush.msra.mxu0 %v1567
    %1725 = vmatpush.msra.mxu0 %v1566
    %1726 = vmatpush.msra.mxu0 %v1565
    %1727 = vmatmul.f32.gmra.mxu0 %v65
    %v1728 = vpop.f32.mrf.mxu0
    %v1729 = vadd.f32 %v1664, %v1728
    %1730 = vmatmul.f32.gmra.mxu0 %v68
    %v1731 = vpop.f32.mrf.mxu0
    %v1732 = vadd.f32 %v1667, %v1731
    %1733 = vmatmul.f32.gmra.mxu0 %v71
    %v1734 = vpop.f32.mrf.mxu0
    %v1735 = vadd.f32 %v1670, %v1734
    %1736 = vmatmul.f32.gmra.mxu0 %v74
    %v1737 = vpop.f32.mrf.mxu0
    %v1738 = vadd.f32 %v1673, %v1737
    %1739 = vmatmul.f32.gmra.mxu0 %v77
    %v1740 = vpop.f32.mrf.mxu0
    %v1741 = vadd.f32 %v1676, %v1740
    %1742 = vmatmul.f32.gmra.mxu0 %v80
    %v1743 = vpop.f32.mrf.mxu0
    %v1744 = vadd.f32 %v1679, %v1743
    %1745 = vmatmul.f32.gmra.mxu0 %v83
    %v1746 = vpop.f32.mrf.mxu0
    %v1747 = vadd.f32 %v1682, %v1746
    %1748 = vmatmul.f32.gmra.mxu0 %v86
    %v1749 = vpop.f32.mrf.mxu0
    %v1750 = vadd.f32 %v1685, %v1749
    %1751 = vmatmul.f32.gmra.mxu0 %v89
    %v1752 = vpop.f32.mrf.mxu0
    %v1753 = vadd.f32 %v1688, %v1752
    %1754 = vmatmul.f32.gmra.mxu0 %v92
    %v1755 = vpop.f32.mrf.mxu0
    %v1756 = vadd.f32 %v1691, %v1755
    %1757 = vmatmul.f32.gmra.mxu0 %v95
    %v1758 = vpop.f32.mrf.mxu0
    %v1759 = vadd.f32 %v1694, %v1758
    %1760 = vmatmul.f32.gmra.mxu0 %v98
    %v1761 = vpop.f32.mrf.mxu0
    %v1762 = vadd.f32 %v1697, %v1761
    %1763 = vmatmul.f32.gmra.mxu0 %v101
    %v1764 = vpop.f32.mrf.mxu0
    %v1765 = vadd.f32 %v1700, %v1764
    %1766 = vmatmul.f32.gmra.mxu0 %v104
    %v1767 = vpop.f32.mrf.mxu0
    %v1768 = vadd.f32 %v1703, %v1767
    %1769 = vmatmul.f32.gmra.mxu0 %v107
    %v1770 = vpop.f32.mrf.mxu0
    %v1771 = vadd.f32 %v1706, %v1770
    %1772 = vmatmul.f32.gmra.mxu0 %v110
    %v1773 = vpop.f32.mrf.mxu0
    %v1774 = vadd.f32 %v1709, %v1773
    %1775 = vdwg.mxu0
    %s1776 = scalar_lea.vmem [#allocation2], 384
    %1777 = vst [vmem:[%s1776] sm:$0xff] %v1729
    %1778 = vst [vmem:[%s1776 + $0x8] sm:$0xff] %v1732
    %1779 = vst [vmem:[%s1776 + $0x10] sm:$0xff] %v1735
    %1780 = vst [vmem:[%s1776 + $0x18] sm:$0xff] %v1738
    %1781 = vst [vmem:[%s1776 + $0x20] sm:$0xff] %v1741
    %1782 = vst [vmem:[%s1776 + $0x28] sm:$0xff] %v1744
    %1783 = vst [vmem:[%s1776 + $0x30] sm:$0xff] %v1747
    %1784 = vst [vmem:[%s1776 + $0x38] sm:$0xff] %v1750
    %1785 = vst [vmem:[%s1776 + $0x40] sm:$0xff] %v1753
    %1786 = vst [vmem:[%s1776 + $0x48] sm:$0xff] %v1756
    %1787 = vst [vmem:[%s1776 + $0x50] sm:$0xff] %v1759
    %1788 = vst [vmem:[%s1776 + $0x58] sm:$0xff] %v1762
    %1789 = vst [vmem:[%s1776 + $0x60] sm:$0xff] %v1765
    %1790 = vst [vmem:[%s1776 + $0x68] sm:$0xff] %v1768
    %1791 = vst [vmem:[%s1776 + $0x70] sm:$0xff] %v1771
    %1792 = vst [vmem:[%s1776 + $0x78] sm:$0xff] %v1774
    %1793 = vadd.xlane.f32.xlu0 %v1729
    %v1794 = vpop.xlane.xlu0 %1793
    %1795 = vadd.xlane.f32.xlu0 %v1732
    %v1796 = vpop.xlane.xlu0 %1795
    %1797 = vadd.xlane.f32.xlu0 %v1735
    %v1798 = vpop.xlane.xlu0 %1797
    %1799 = vadd.xlane.f32.xlu0 %v1738
    %v1800 = vpop.xlane.xlu0 %1799
    %1801 = vadd.xlane.f32.xlu0 %v1741
    %v1802 = vpop.xlane.xlu0 %1801
    %1803 = vadd.xlane.f32.xlu0 %v1744
    %v1804 = vpop.xlane.xlu0 %1803
    %1805 = vadd.xlane.f32.xlu0 %v1747
    %v1806 = vpop.xlane.xlu0 %1805
    %1807 = vadd.xlane.f32.xlu0 %v1750
    %v1808 = vpop.xlane.xlu0 %1807
    %1809 = vadd.xlane.f32.xlu0 %v1753
    %v1810 = vpop.xlane.xlu0 %1809
    %1811 = vadd.xlane.f32.xlu0 %v1756
    %v1812 = vpop.xlane.xlu0 %1811
    %1813 = vadd.xlane.f32.xlu0 %v1759
    %v1814 = vpop.xlane.xlu0 %1813
    %1815 = vadd.xlane.f32.xlu0 %v1762
    %v1816 = vpop.xlane.xlu0 %1815
    %1817 = vadd.xlane.f32.xlu0 %v1765
    %v1818 = vpop.xlane.xlu0 %1817
    %1819 = vadd.xlane.f32.xlu0 %v1768
    %v1820 = vpop.xlane.xlu0 %1819
    %1821 = vadd.xlane.f32.xlu0 %v1771
    %v1822 = vpop.xlane.xlu0 %1821
    %1823 = vadd.xlane.f32.xlu0 %v1774
    %v1824 = vpop.xlane.xlu0 %1823
    %v1825 = vadd.f32 %v1388, %v1794
    %v1826 = vadd.f32 %v1389, %v1796
    %v1827 = vadd.f32 %v1390, %v1798
    %v1828 = vadd.f32 %v1391, %v1800
    %v1829 = vadd.f32 %v1392, %v1802
    %v1830 = vadd.f32 %v1393, %v1804
    %v1831 = vadd.f32 %v1394, %v1806
    %v1832 = vadd.f32 %v1395, %v1808
    %v1833 = vadd.f32 %v1396, %v1810
    %v1834 = vadd.f32 %v1397, %v1812
    %v1835 = vadd.f32 %v1398, %v1814
    %v1836 = vadd.f32 %v1399, %v1816
    %v1837 = vadd.f32 %v1400, %v1818
    %v1838 = vadd.f32 %v1401, %v1820
    %v1839 = vadd.f32 %v1402, %v1822
    %v1840 = vadd.f32 %v1403, %v1824
    %v1841 = vmul.f32 %v1729, %v1729
    %v1842 = vmul.f32 %v1732, %v1732
    %v1843 = vmul.f32 %v1735, %v1735
    %v1844 = vmul.f32 %v1738, %v1738
    %v1845 = vmul.f32 %v1741, %v1741
    %v1846 = vmul.f32 %v1744, %v1744
    %v1847 = vmul.f32 %v1747, %v1747
    %v1848 = vmul.f32 %v1750, %v1750
    %v1849 = vmul.f32 %v1753, %v1753
    %v1850 = vmul.f32 %v1756, %v1756
    %v1851 = vmul.f32 %v1759, %v1759
    %v1852 = vmul.f32 %v1762, %v1762
    %v1853 = vmul.f32 %v1765, %v1765
    %v1854 = vmul.f32 %v1768, %v1768
    %v1855 = vmul.f32 %v1771, %v1771
    %v1856 = vmul.f32 %v1774, %v1774
    %1857 = vadd.xlane.f32.xlu0 %v1841
    %v1858 = vpop.xlane.xlu0 %1857
    %1859 = vadd.xlane.f32.xlu0 %v1842
    %v1860 = vpop.xlane.xlu0 %1859
    %1861 = vadd.xlane.f32.xlu0 %v1843
    %v1862 = vpop.xlane.xlu0 %1861
    %1863 = vadd.xlane.f32.xlu0 %v1844
    %v1864 = vpop.xlane.xlu0 %1863
    %1865 = vadd.xlane.f32.xlu0 %v1845
    %v1866 = vpop.xlane.xlu0 %1865
    %1867 = vadd.xlane.f32.xlu0 %v1846
    %v1868 = vpop.xlane.xlu0 %1867
    %1869 = vadd.xlane.f32.xlu0 %v1847
    %v1870 = vpop.xlane.xlu0 %1869
    %1871 = vadd.xlane.f32.xlu0 %v1848
    %v1872 = vpop.xlane.xlu0 %1871
    %1873 = vadd.xlane.f32.xlu0 %v1849
    %v1874 = vpop.xlane.xlu0 %1873
    %1875 = vadd.xlane.f32.xlu0 %v1850
    %v1876 = vpop.xlane.xlu0 %1875
    %1877 = vadd.xlane.f32.xlu0 %v1851
    %v1878 = vpop.xlane.xlu0 %1877
    %1879 = vadd.xlane.f32.xlu0 %v1852
    %v1880 = vpop.xlane.xlu0 %1879
    %1881 = vadd.xlane.f32.xlu0 %v1853
    %v1882 = vpop.xlane.xlu0 %1881
    %1883 = vadd.xlane.f32.xlu0 %v1854
    %v1884 = vpop.xlane.xlu0 %1883
    %1885 = vadd.xlane.f32.xlu0 %v1855
    %v1886 = vpop.xlane.xlu0 %1885
    %1887 = vadd.xlane.f32.xlu0 %v1856
    %v1888 = vpop.xlane.xlu0 %1887
    %v1889 = vadd.f32 %v1452, %v1858
    %v1890 = vadd.f32 %v1453, %v1860
    %v1891 = vadd.f32 %v1454, %v1862
    %v1892 = vadd.f32 %v1455, %v1864
    %v1893 = vadd.f32 %v1456, %v1866
    %v1894 = vadd.f32 %v1457, %v1868
    %v1895 = vadd.f32 %v1458, %v1870
    %v1896 = vadd.f32 %v1459, %v1872
    %v1897 = vadd.f32 %v1460, %v1874
    %v1898 = vadd.f32 %v1461, %v1876
    %v1899 = vadd.f32 %v1462, %v1878
    %v1900 = vadd.f32 %v1463, %v1880
    %v1901 = vadd.f32 %v1464, %v1882
    %v1902 = vadd.f32 %v1465, %v1884
    %v1903 = vadd.f32 %v1466, %v1886
    %v1904 = vadd.f32 %v1467, %v1888
    %v1905 = vmul.f32 %v1825, 0.001953125
    %v1906 = vmul.f32 %v1826, 0.001953125
    %v1907 = vmul.f32 %v1827, 0.001953125
    %v1908 = vmul.f32 %v1828, 0.001953125
    %v1909 = vmul.f32 %v1829, 0.001953125
    %v1910 = vmul.f32 %v1830, 0.001953125
    %v1911 = vmul.f32 %v1831, 0.001953125
    %v1912 = vmul.f32 %v1832, 0.001953125
    %v1913 = vmul.f32 %v1833, 0.001953125
    %v1914 = vmul.f32 %v1834, 0.001953125
    %v1915 = vmul.f32 %v1835, 0.001953125
    %v1916 = vmul.f32 %v1836, 0.001953125
    %v1917 = vmul.f32 %v1837, 0.001953125
    %v1918 = vmul.f32 %v1838, 0.001953125
    %v1919 = vmul.f32 %v1839, 0.001953125
    %v1920 = vmul.f32 %v1840, 0.001953125
    %v1921 = vmul.f32 %v1889, 0.001953125
    %v1922 = vmul.f32 %v1890, 0.001953125
    %v1923 = vmul.f32 %v1891, 0.001953125
    %v1924 = vmul.f32 %v1892, 0.001953125
    %v1925 = vmul.f32 %v1893, 0.001953125
    %v1926 = vmul.f32 %v1894, 0.001953125
    %v1927 = vmul.f32 %v1895, 0.001953125
    %v1928 = vmul.f32 %v1896, 0.001953125
    %v1929 = vmul.f32 %v1897, 0.001953125
    %v1930 = vmul.f32 %v1898, 0.001953125
    %v1931 = vmul.f32 %v1899, 0.001953125
    %v1932 = vmul.f32 %v1900, 0.001953125
    %v1933 = vmul.f32 %v1901, 0.001953125
    %v1934 = vmul.f32 %v1902, 0.001953125
    %v1935 = vmul.f32 %v1903, 0.001953125
    %v1936 = vmul.f32 %v1904, 0.001953125
    %v1937 = vmul.f32 %v1905, %v1905
    %v1938 = vmul.f32 %v1906, %v1906
    %v1939 = vmul.f32 %v1907, %v1907
    %v1940 = vmul.f32 %v1908, %v1908
    %v1941 = vmul.f32 %v1909, %v1909
    %v1942 = vmul.f32 %v1910, %v1910
    %v1943 = vmul.f32 %v1911, %v1911
    %v1944 = vmul.f32 %v1912, %v1912
    %v1945 = vmul.f32 %v1913, %v1913
    %v1946 = vmul.f32 %v1914, %v1914
    %v1947 = vmul.f32 %v1915, %v1915
    %v1948 = vmul.f32 %v1916, %v1916
    %v1949 = vmul.f32 %v1917, %v1917
    %v1950 = vmul.f32 %v1918, %v1918
    %v1951 = vmul.f32 %v1919, %v1919
    %v1952 = vmul.f32 %v1920, %v1920
    %v1953 = vsub.f32 %v1921, %v1937
    %v1954 = vsub.f32 %v1922, %v1938
    %v1955 = vsub.f32 %v1923, %v1939
    %v1956 = vsub.f32 %v1924, %v1940
    %v1957 = vsub.f32 %v1925, %v1941
    %v1958 = vsub.f32 %v1926, %v1942
    %v1959 = vsub.f32 %v1927, %v1943
    %v1960 = vsub.f32 %v1928, %v1944
    %v1961 = vsub.f32 %v1929, %v1945
    %v1962 = vsub.f32 %v1930, %v1946
    %v1963 = vsub.f32 %v1931, %v1947
    %v1964 = vsub.f32 %v1932, %v1948
    %v1965 = vsub.f32 %v1933, %v1949
    %v1966 = vsub.f32 %v1934, %v1950
    %v1967 = vsub.f32 %v1935, %v1951
    %v1968 = vsub.f32 %v1936, %v1952
    %v1969 = vld [vmem:[%s3] sm:$0xff]
    %v1970 = vld [vmem:[%s3 + $0x8] sm:$0xff]
    %v1971 = vld [vmem:[%s3 + $0x10] sm:$0xff]
    %v1972 = vld [vmem:[%s3 + $0x18] sm:$0xff]
    %v1973 = vld [vmem:[%s3 + $0x20] sm:$0xff]
    %v1974 = vld [vmem:[%s3 + $0x28] sm:$0xff]
    %v1975 = vld [vmem:[%s3 + $0x30] sm:$0xff]
    %v1976 = vld [vmem:[%s3 + $0x38] sm:$0xff]
    %v1977 = vld [vmem:[%s3 + $0x40] sm:$0xff]
    %v1978 = vld [vmem:[%s3 + $0x48] sm:$0xff]
    %v1979 = vld [vmem:[%s3 + $0x50] sm:$0xff]
    %v1980 = vld [vmem:[%s3 + $0x58] sm:$0xff]
    %v1981 = vld [vmem:[%s3 + $0x60] sm:$0xff]
    %v1982 = vld [vmem:[%s3 + $0x68] sm:$0xff]
    %v1983 = vld [vmem:[%s3 + $0x70] sm:$0xff]
    %v1984 = vld [vmem:[%s3 + $0x78] sm:$0xff]
    %v1985 = vadd.f32 %v1953, 1e-05
    %v1986 = vadd.f32 %v1954, 1e-05
    %v1987 = vadd.f32 %v1955, 1e-05
    %v1988 = vadd.f32 %v1956, 1e-05
    %v1989 = vadd.f32 %v1957, 1e-05
    %v1990 = vadd.f32 %v1958, 1e-05
    %v1991 = vadd.f32 %v1959, 1e-05
    %v1992 = vadd.f32 %v1960, 1e-05
    %v1993 = vadd.f32 %v1961, 1e-05
    %v1994 = vadd.f32 %v1962, 1e-05
    %v1995 = vadd.f32 %v1963, 1e-05
    %v1996 = vadd.f32 %v1964, 1e-05
    %v1997 = vadd.f32 %v1965, 1e-05
    %v1998 = vadd.f32 %v1966, 1e-05
    %v1999 = vadd.f32 %v1967, 1e-05
    %v2000 = vadd.f32 %v1968, 1e-05
    %v2001 = vrsqrt.pop %v1985
    %v2002 = vmul.f32 %v2001, %v1985
    %v2003 = vmul.f32 %v2002, %v2001
    %v2004 = vmul.f32 0.5, %v2003
    %v2005 = vsub.f32 1.5, %v2004
    %v2006 = vmul.f32 %v2001, %v2005
    %vm2007 = vweird.f32 %v1985
    %vm2008 = vweird.f32 %v2001
    %vm2009 = vmor %vm2007, %vm2008
    %v2010 = vsel %vm2009, %v2001, %v2006
    %v2011 = vrsqrt.pop %v1986
    %v2012 = vmul.f32 %v2011, %v1986
    %v2013 = vmul.f32 %v2012, %v2011
    %v2014 = vmul.f32 0.5, %v2013
    %v2015 = vsub.f32 1.5, %v2014
    %v2016 = vmul.f32 %v2011, %v2015
    %vm2017 = vweird.f32 %v1986
    %vm2018 = vweird.f32 %v2011
    %vm2019 = vmor %vm2017, %vm2018
    %v2020 = vsel %vm2019, %v2011, %v2016
    %v2021 = vrsqrt.pop %v1987
    %v2022 = vmul.f32 %v2021, %v1987
    %v2023 = vmul.f32 %v2022, %v2021
    %v2024 = vmul.f32 0.5, %v2023
    %v2025 = vsub.f32 1.5, %v2024
    %v2026 = vmul.f32 %v2021, %v2025
    %vm2027 = vweird.f32 %v1987
    %vm2028 = vweird.f32 %v2021
    %vm2029 = vmor %vm2027, %vm2028
    %v2030 = vsel %vm2029, %v2021, %v2026
    %v2031 = vrsqrt.pop %v1988
    %v2032 = vmul.f32 %v2031, %v1988
    %v2033 = vmul.f32 %v2032, %v2031
    %v2034 = vmul.f32 0.5, %v2033
    %v2035 = vsub.f32 1.5, %v2034
    %v2036 = vmul.f32 %v2031, %v2035
    %vm2037 = vweird.f32 %v1988
    %vm2038 = vweird.f32 %v2031
    %vm2039 = vmor %vm2037, %vm2038
    %v2040 = vsel %vm2039, %v2031, %v2036
    %v2041 = vrsqrt.pop %v1989
    %v2042 = vmul.f32 %v2041, %v1989
    %v2043 = vmul.f32 %v2042, %v2041
    %v2044 = vmul.f32 0.5, %v2043
    %v2045 = vsub.f32 1.5, %v2044
    %v2046 = vmul.f32 %v2041, %v2045
    %vm2047 = vweird.f32 %v1989
    %vm2048 = vweird.f32 %v2041
    %vm2049 = vmor %vm2047, %vm2048
    %v2050 = vsel %vm2049, %v2041, %v2046
    %v2051 = vrsqrt.pop %v1990
    %v2052 = vmul.f32 %v2051, %v1990
    %v2053 = vmul.f32 %v2052, %v2051
    %v2054 = vmul.f32 0.5, %v2053
    %v2055 = vsub.f32 1.5, %v2054
    %v2056 = vmul.f32 %v2051, %v2055
    %vm2057 = vweird.f32 %v1990
    %vm2058 = vweird.f32 %v2051
    %vm2059 = vmor %vm2057, %vm2058
    %v2060 = vsel %vm2059, %v2051, %v2056
    %v2061 = vrsqrt.pop %v1991
    %v2062 = vmul.f32 %v2061, %v1991
    %v2063 = vmul.f32 %v2062, %v2061
    %v2064 = vmul.f32 0.5, %v2063
    %v2065 = vsub.f32 1.5, %v2064
    %v2066 = vmul.f32 %v2061, %v2065
    %vm2067 = vweird.f32 %v1991
    %vm2068 = vweird.f32 %v2061
    %vm2069 = vmor %vm2067, %vm2068
    %v2070 = vsel %vm2069, %v2061, %v2066
    %v2071 = vrsqrt.pop %v1992
    %v2072 = vmul.f32 %v2071, %v1992
    %v2073 = vmul.f32 %v2072, %v2071
    %v2074 = vmul.f32 0.5, %v2073
    %v2075 = vsub.f32 1.5, %v2074
    %v2076 = vmul.f32 %v2071, %v2075
    %vm2077 = vweird.f32 %v1992
    %vm2078 = vweird.f32 %v2071
    %vm2079 = vmor %vm2077, %vm2078
    %v2080 = vsel %vm2079, %v2071, %v2076
    %v2081 = vrsqrt.pop %v1993
    %v2082 = vmul.f32 %v2081, %v1993
    %v2083 = vmul.f32 %v2082, %v2081
    %v2084 = vmul.f32 0.5, %v2083
    %v2085 = vsub.f32 1.5, %v2084
    %v2086 = vmul.f32 %v2081, %v2085
    %vm2087 = vweird.f32 %v1993
    %vm2088 = vweird.f32 %v2081
    %vm2089 = vmor %vm2087, %vm2088
    %v2090 = vsel %vm2089, %v2081, %v2086
    %v2091 = vrsqrt.pop %v1994
    %v2092 = vmul.f32 %v2091, %v1994
    %v2093 = vmul.f32 %v2092, %v2091
    %v2094 = vmul.f32 0.5, %v2093
    %v2095 = vsub.f32 1.5, %v2094
    %v2096 = vmul.f32 %v2091, %v2095
    %vm2097 = vweird.f32 %v1994
    %vm2098 = vweird.f32 %v2091
    %vm2099 = vmor %vm2097, %vm2098
    %v2100 = vsel %vm2099, %v2091, %v2096
    %v2101 = vrsqrt.pop %v1995
    %v2102 = vmul.f32 %v2101, %v1995
    %v2103 = vmul.f32 %v2102, %v2101
    %v2104 = vmul.f32 0.5, %v2103
    %v2105 = vsub.f32 1.5, %v2104
    %v2106 = vmul.f32 %v2101, %v2105
    %vm2107 = vweird.f32 %v1995
    %vm2108 = vweird.f32 %v2101
    %vm2109 = vmor %vm2107, %vm2108
    %v2110 = vsel %vm2109, %v2101, %v2106
    %v2111 = vrsqrt.pop %v1996
    %v2112 = vmul.f32 %v2111, %v1996
    %v2113 = vmul.f32 %v2112, %v2111
    %v2114 = vmul.f32 0.5, %v2113
    %v2115 = vsub.f32 1.5, %v2114
    %v2116 = vmul.f32 %v2111, %v2115
    %vm2117 = vweird.f32 %v1996
    %vm2118 = vweird.f32 %v2111
    %vm2119 = vmor %vm2117, %vm2118
    %v2120 = vsel %vm2119, %v2111, %v2116
    %v2121 = vrsqrt.pop %v1997
    %v2122 = vmul.f32 %v2121, %v1997
    %v2123 = vmul.f32 %v2122, %v2121
    %v2124 = vmul.f32 0.5, %v2123
    %v2125 = vsub.f32 1.5, %v2124
    %v2126 = vmul.f32 %v2121, %v2125
    %vm2127 = vweird.f32 %v1997
    %vm2128 = vweird.f32 %v2121
    %vm2129 = vmor %vm2127, %vm2128
    %v2130 = vsel %vm2129, %v2121, %v2126
    %v2131 = vrsqrt.pop %v1998
    %v2132 = vmul.f32 %v2131, %v1998
    %v2133 = vmul.f32 %v2132, %v2131
    %v2134 = vmul.f32 0.5, %v2133
    %v2135 = vsub.f32 1.5, %v2134
    %v2136 = vmul.f32 %v2131, %v2135
    %vm2137 = vweird.f32 %v1998
    %vm2138 = vweird.f32 %v2131
    %vm2139 = vmor %vm2137, %vm2138
    %v2140 = vsel %vm2139, %v2131, %v2136
    %v2141 = vrsqrt.pop %v1999
    %v2142 = vmul.f32 %v2141, %v1999
    %v2143 = vmul.f32 %v2142, %v2141
    %v2144 = vmul.f32 0.5, %v2143
    %v2145 = vsub.f32 1.5, %v2144
    %v2146 = vmul.f32 %v2141, %v2145
    %vm2147 = vweird.f32 %v1999
    %vm2148 = vweird.f32 %v2141
    %vm2149 = vmor %vm2147, %vm2148
    %v2150 = vsel %vm2149, %v2141, %v2146
    %v2151 = vrsqrt.pop %v2000
    %v2152 = vmul.f32 %v2151, %v2000
    %v2153 = vmul.f32 %v2152, %v2151
    %v2154 = vmul.f32 0.5, %v2153
    %v2155 = vsub.f32 1.5, %v2154
    %v2156 = vmul.f32 %v2151, %v2155
    %vm2157 = vweird.f32 %v2000
    %vm2158 = vweird.f32 %v2151
    %vm2159 = vmor %vm2157, %vm2158
    %v2160 = vsel %vm2159, %v2151, %v2156
    %v2161 = vmul.f32 %v1969, %v2010
    %v2162 = vmul.f32 %v1970, %v2020
    %v2163 = vmul.f32 %v1971, %v2030
    %v2164 = vmul.f32 %v1972, %v2040
    %v2165 = vmul.f32 %v1973, %v2050
    %v2166 = vmul.f32 %v1974, %v2060
    %v2167 = vmul.f32 %v1975, %v2070
    %v2168 = vmul.f32 %v1976, %v2080
    %v2169 = vmul.f32 %v1977, %v2090
    %v2170 = vmul.f32 %v1978, %v2100
    %v2171 = vmul.f32 %v1979, %v2110
    %v2172 = vmul.f32 %v1980, %v2120
    %v2173 = vmul.f32 %v1981, %v2130
    %v2174 = vmul.f32 %v1982, %v2140
    %v2175 = vmul.f32 %v1983, %v2150
    %v2176 = vmul.f32 %v1984, %v2160
    %v2177 = vld [vmem:[%s4] sm:$0xff]
    %v2178 = vld [vmem:[%s4 + $0x8] sm:$0xff]
    %v2179 = vld [vmem:[%s4 + $0x10] sm:$0xff]
    %v2180 = vld [vmem:[%s4 + $0x18] sm:$0xff]
    %v2181 = vld [vmem:[%s4 + $0x20] sm:$0xff]
    %v2182 = vld [vmem:[%s4 + $0x28] sm:$0xff]
    %v2183 = vld [vmem:[%s4 + $0x30] sm:$0xff]
    %v2184 = vld [vmem:[%s4 + $0x38] sm:$0xff]
    %v2185 = vld [vmem:[%s4 + $0x40] sm:$0xff]
    %v2186 = vld [vmem:[%s4 + $0x48] sm:$0xff]
    %v2187 = vld [vmem:[%s4 + $0x50] sm:$0xff]
    %v2188 = vld [vmem:[%s4 + $0x58] sm:$0xff]
    %v2189 = vld [vmem:[%s4 + $0x60] sm:$0xff]
    %v2190 = vld [vmem:[%s4 + $0x68] sm:$0xff]
    %v2191 = vld [vmem:[%s4 + $0x70] sm:$0xff]
    %v2192 = vld [vmem:[%s4 + $0x78] sm:$0xff]
    %v2193 = vmul.f32 %v1905, %v2161
    %v2194 = vmul.f32 %v1906, %v2162
    %v2195 = vmul.f32 %v1907, %v2163
    %v2196 = vmul.f32 %v1908, %v2164
    %v2197 = vmul.f32 %v1909, %v2165
    %v2198 = vmul.f32 %v1910, %v2166
    %v2199 = vmul.f32 %v1911, %v2167
    %v2200 = vmul.f32 %v1912, %v2168
    %v2201 = vmul.f32 %v1913, %v2169
    %v2202 = vmul.f32 %v1914, %v2170
    %v2203 = vmul.f32 %v1915, %v2171
    %v2204 = vmul.f32 %v1916, %v2172
    %v2205 = vmul.f32 %v1917, %v2173
    %v2206 = vmul.f32 %v1918, %v2174
    %v2207 = vmul.f32 %v1919, %v2175
    %v2208 = vmul.f32 %v1920, %v2176
    %v2209 = vsub.f32 %v2177, %v2193
    %v2210 = vsub.f32 %v2178, %v2194
    %v2211 = vsub.f32 %v2179, %v2195
    %v2212 = vsub.f32 %v2180, %v2196
    %v2213 = vsub.f32 %v2181, %v2197
    %v2214 = vsub.f32 %v2182, %v2198
    %v2215 = vsub.f32 %v2183, %v2199
    %v2216 = vsub.f32 %v2184, %v2200
    %v2217 = vsub.f32 %v2185, %v2201
    %v2218 = vsub.f32 %v2186, %v2202
    %v2219 = vsub.f32 %v2187, %v2203
    %v2220 = vsub.f32 %v2188, %v2204
    %v2221 = vsub.f32 %v2189, %v2205
    %v2222 = vsub.f32 %v2190, %v2206
    %v2223 = vsub.f32 %v2191, %v2207
    %v2224 = vsub.f32 %v2192, %v2208
    %v2225 = vld [vmem:[#allocation2] sm:$0xff]
    %v2226 = vld [vmem:[#allocation2 + $0x8] sm:$0xff]
    %v2227 = vld [vmem:[#allocation2 + $0x10] sm:$0xff]
    %v2228 = vld [vmem:[#allocation2 + $0x18] sm:$0xff]
    %v2229 = vld [vmem:[#allocation2 + $0x20] sm:$0xff]
    %v2230 = vld [vmem:[#allocation2 + $0x28] sm:$0xff]
    %v2231 = vld [vmem:[#allocation2 + $0x30] sm:$0xff]
    %v2232 = vld [vmem:[#allocation2 + $0x38] sm:$0xff]
    %v2233 = vld [vmem:[#allocation2 + $0x40] sm:$0xff]
    %v2234 = vld [vmem:[#allocation2 + $0x48] sm:$0xff]
    %v2235 = vld [vmem:[#allocation2 + $0x50] sm:$0xff]
    %v2236 = vld [vmem:[#allocation2 + $0x58] sm:$0xff]
    %v2237 = vld [vmem:[#allocation2 + $0x60] sm:$0xff]
    %v2238 = vld [vmem:[#allocation2 + $0x68] sm:$0xff]
    %v2239 = vld [vmem:[#allocation2 + $0x70] sm:$0xff]
    %v2240 = vld [vmem:[#allocation2 + $0x78] sm:$0xff]
    %2242 = vset.pattern.permute.xlu0 0
    %2243 = vperm.xlu0 %2242, %v2161
    %v2244 = vpop.permute.xlu0 %2243
    %2247 = vset.pattern.permute.xlu0 0
    %2248 = vperm.xlu0 %2247, %v2162
    %v2249 = vpop.permute.xlu0 %2248
    %2252 = vset.pattern.permute.xlu0 0
    %2253 = vperm.xlu0 %2252, %v2163
    %v2254 = vpop.permute.xlu0 %2253
    %2257 = vset.pattern.permute.xlu0 0
    %2258 = vperm.xlu0 %2257, %v2164
    %v2259 = vpop.permute.xlu0 %2258
    %2262 = vset.pattern.permute.xlu0 0
    %2263 = vperm.xlu0 %2262, %v2165
    %v2264 = vpop.permute.xlu0 %2263
    %2267 = vset.pattern.permute.xlu0 0
    %2268 = vperm.xlu0 %2267, %v2166
    %v2269 = vpop.permute.xlu0 %2268
    %2272 = vset.pattern.permute.xlu0 0
    %2273 = vperm.xlu0 %2272, %v2167
    %v2274 = vpop.permute.xlu0 %2273
    %2277 = vset.pattern.permute.xlu0 0
    %2278 = vperm.xlu0 %2277, %v2168
    %v2279 = vpop.permute.xlu0 %2278
    %2282 = vset.pattern.permute.xlu0 0
    %2283 = vperm.xlu0 %2282, %v2169
    %v2284 = vpop.permute.xlu0 %2283
    %2287 = vset.pattern.permute.xlu0 0
    %2288 = vperm.xlu0 %2287, %v2170
    %v2289 = vpop.permute.xlu0 %2288
    %2292 = vset.pattern.permute.xlu0 0
    %2293 = vperm.xlu0 %2292, %v2171
    %v2294 = vpop.permute.xlu0 %2293
    %2297 = vset.pattern.permute.xlu0 0
    %2298 = vperm.xlu0 %2297, %v2172
    %v2299 = vpop.permute.xlu0 %2298
    %2302 = vset.pattern.permute.xlu0 0
    %2303 = vperm.xlu0 %2302, %v2173
    %v2304 = vpop.permute.xlu0 %2303
    %2307 = vset.pattern.permute.xlu0 0
    %2308 = vperm.xlu0 %2307, %v2174
    %v2309 = vpop.permute.xlu0 %2308
    %2312 = vset.pattern.permute.xlu0 0
    %2313 = vperm.xlu0 %2312, %v2175
    %v2314 = vpop.permute.xlu0 %2313
    %2317 = vset.pattern.permute.xlu0 0
    %2318 = vperm.xlu0 %2317, %v2176
    %v2319 = vpop.permute.xlu0 %2318
    %v2321 = vmul.f32 %v2225, %v2244
    %v2322 = vmul.f32 %v2226, %v2249
    %v2323 = vmul.f32 %v2227, %v2254
    %v2324 = vmul.f32 %v2228, %v2259
    %v2325 = vmul.f32 %v2229, %v2264
    %v2326 = vmul.f32 %v2230, %v2269
    %v2327 = vmul.f32 %v2231, %v2274
    %v2328 = vmul.f32 %v2232, %v2279
    %v2329 = vmul.f32 %v2233, %v2284
    %v2330 = vmul.f32 %v2234, %v2289
    %v2331 = vmul.f32 %v2235, %v2294
    %v2332 = vmul.f32 %v2236, %v2299
    %v2333 = vmul.f32 %v2237, %v2304
    %v2334 = vmul.f32 %v2238, %v2309
    %v2335 = vmul.f32 %v2239, %v2314
    %v2336 = vmul.f32 %v2240, %v2319
    %2338 = vset.pattern.permute.xlu0 0
    %2339 = vperm.xlu0 %2338, %v2209
    %v2340 = vpop.permute.xlu0 %2339
    %2343 = vset.pattern.permute.xlu0 0
    %2344 = vperm.xlu0 %2343, %v2210
    %v2345 = vpop.permute.xlu0 %2344
    %2348 = vset.pattern.permute.xlu0 0
    %2349 = vperm.xlu0 %2348, %v2211
    %v2350 = vpop.permute.xlu0 %2349
    %2353 = vset.pattern.permute.xlu0 0
    %2354 = vperm.xlu0 %2353, %v2212
    %v2355 = vpop.permute.xlu0 %2354
    %2358 = vset.pattern.permute.xlu0 0
    %2359 = vperm.xlu0 %2358, %v2213
    %v2360 = vpop.permute.xlu0 %2359
    %2363 = vset.pattern.permute.xlu0 0
    %2364 = vperm.xlu0 %2363, %v2214
    %v2365 = vpop.permute.xlu0 %2364
    %2368 = vset.pattern.permute.xlu0 0
    %2369 = vperm.xlu0 %2368, %v2215
    %v2370 = vpop.permute.xlu0 %2369
    %2373 = vset.pattern.permute.xlu0 0
    %2374 = vperm.xlu0 %2373, %v2216
    %v2375 = vpop.permute.xlu0 %2374
    %2378 = vset.pattern.permute.xlu0 0
    %2379 = vperm.xlu0 %2378, %v2217
    %v2380 = vpop.permute.xlu0 %2379
    %2383 = vset.pattern.permute.xlu0 0
    %2384 = vperm.xlu0 %2383, %v2218
    %v2385 = vpop.permute.xlu0 %2384
    %2388 = vset.pattern.permute.xlu0 0
    %2389 = vperm.xlu0 %2388, %v2219
    %v2390 = vpop.permute.xlu0 %2389
    %2393 = vset.pattern.permute.xlu0 0
    %2394 = vperm.xlu0 %2393, %v2220
    %v2395 = vpop.permute.xlu0 %2394
    %2398 = vset.pattern.permute.xlu0 0
    %2399 = vperm.xlu0 %2398, %v2221
    %v2400 = vpop.permute.xlu0 %2399
    %2403 = vset.pattern.permute.xlu0 0
    %2404 = vperm.xlu0 %2403, %v2222
    %v2405 = vpop.permute.xlu0 %2404
    %2408 = vset.pattern.permute.xlu0 0
    %2409 = vperm.xlu0 %2408, %v2223
    %v2410 = vpop.permute.xlu0 %2409
    %2413 = vset.pattern.permute.xlu0 0
    %2414 = vperm.xlu0 %2413, %v2224
    %v2415 = vpop.permute.xlu0 %2414
    %v2417 = vadd.f32 %v2321, %v2340
    %v2418 = vadd.f32 %v2322, %v2345
    %v2419 = vadd.f32 %v2323, %v2350
    %v2420 = vadd.f32 %v2324, %v2355
    %v2421 = vadd.f32 %v2325, %v2360
    %v2422 = vadd.f32 %v2326, %v2365
    %v2423 = vadd.f32 %v2327, %v2370
    %v2424 = vadd.f32 %v2328, %v2375
    %v2425 = vadd.f32 %v2329, %v2380
    %v2426 = vadd.f32 %v2330, %v2385
    %v2427 = vadd.f32 %v2331, %v2390
    %v2428 = vadd.f32 %v2332, %v2395
    %v2429 = vadd.f32 %v2333, %v2400
    %v2430 = vadd.f32 %v2334, %v2405
    %v2431 = vadd.f32 %v2335, %v2410
    %v2432 = vadd.f32 %v2336, %v2415
    %v2433 = vmax.f32 %v2417, 0.0
    %v2434 = vmax.f32 %v2418, 0.0
    %v2435 = vmax.f32 %v2419, 0.0
    %v2436 = vmax.f32 %v2420, 0.0
    %v2437 = vmax.f32 %v2421, 0.0
    %v2438 = vmax.f32 %v2422, 0.0
    %v2439 = vmax.f32 %v2423, 0.0
    %v2440 = vmax.f32 %v2424, 0.0
    %v2441 = vmax.f32 %v2425, 0.0
    %v2442 = vmax.f32 %v2426, 0.0
    %v2443 = vmax.f32 %v2427, 0.0
    %v2444 = vmax.f32 %v2428, 0.0
    %v2445 = vmax.f32 %v2429, 0.0
    %v2446 = vmax.f32 %v2430, 0.0
    %v2447 = vmax.f32 %v2431, 0.0
    %v2448 = vmax.f32 %v2432, 0.0
    %2449 = vrot.lane.b32.xlu0 %v2433, 1
    %v2450 = vpop.permute.xlu0 %2449
    %2451 = vrot.lane.b32.xlu0 %v2434, 1
    %v2452 = vpop.permute.xlu0 %2451
    %2453 = vrot.lane.b32.xlu0 %v2435, 1
    %v2454 = vpop.permute.xlu0 %2453
    %2455 = vrot.lane.b32.xlu0 %v2436, 1
    %v2456 = vpop.permute.xlu0 %2455
    %2457 = vrot.lane.b32.xlu0 %v2437, 1
    %v2458 = vpop.permute.xlu0 %2457
    %2459 = vrot.lane.b32.xlu0 %v2438, 1
    %v2460 = vpop.permute.xlu0 %2459
    %2461 = vrot.lane.b32.xlu0 %v2439, 1
    %v2462 = vpop.permute.xlu0 %2461
    %2463 = vrot.lane.b32.xlu0 %v2440, 1
    %v2464 = vpop.permute.xlu0 %2463
    %2465 = vrot.lane.b32.xlu0 %v2441, 1
    %v2466 = vpop.permute.xlu0 %2465
    %2467 = vrot.lane.b32.xlu0 %v2442, 1
    %v2468 = vpop.permute.xlu0 %2467
    %2469 = vrot.lane.b32.xlu0 %v2443, 1
    %v2470 = vpop.permute.xlu0 %2469
    %2471 = vrot.lane.b32.xlu0 %v2444, 1
    %v2472 = vpop.permute.xlu0 %2471
    %2473 = vrot.lane.b32.xlu0 %v2445, 1
    %v2474 = vpop.permute.xlu0 %2473
    %2475 = vrot.lane.b32.xlu0 %v2446, 1
    %v2476 = vpop.permute.xlu0 %2475
    %2477 = vrot.lane.b32.xlu0 %v2447, 1
    %v2478 = vpop.permute.xlu0 %2477
    %2479 = vrot.lane.b32.xlu0 %v2448, 1
    %v2480 = vpop.permute.xlu0 %2479
    %v2481 = vsel %vm61, %v2450, 0.0
    %v2482 = vsel %vm61, %v2452, 0.0
    %v2483 = vsel %vm61, %v2454, 0.0
    %v2484 = vsel %vm61, %v2456, 0.0
    %v2485 = vsel %vm61, %v2458, 0.0
    %v2486 = vsel %vm61, %v2460, 0.0
    %v2487 = vsel %vm61, %v2462, 0.0
    %v2488 = vsel %vm61, %v2464, 0.0
    %v2489 = vsel %vm61, %v2466, 0.0
    %v2490 = vsel %vm61, %v2468, 0.0
    %v2491 = vsel %vm61, %v2470, 0.0
    %v2492 = vsel %vm61, %v2472, 0.0
    %v2493 = vsel %vm61, %v2474, 0.0
    %v2494 = vsel %vm61, %v2476, 0.0
    %v2495 = vsel %vm61, %v2478, 0.0
    %v2496 = vsel %vm61, %v2480, 0.0
    %2497 = vrot.lane.b32.xlu0 %v2433, 127
    %v2498 = vpop.permute.xlu0 %2497
    %2499 = vrot.lane.b32.xlu0 %v2434, 127
    %v2500 = vpop.permute.xlu0 %2499
    %2501 = vrot.lane.b32.xlu0 %v2435, 127
    %v2502 = vpop.permute.xlu0 %2501
    %2503 = vrot.lane.b32.xlu0 %v2436, 127
    %v2504 = vpop.permute.xlu0 %2503
    %2505 = vrot.lane.b32.xlu0 %v2437, 127
    %v2506 = vpop.permute.xlu0 %2505
    %2507 = vrot.lane.b32.xlu0 %v2438, 127
    %v2508 = vpop.permute.xlu0 %2507
    %2509 = vrot.lane.b32.xlu0 %v2439, 127
    %v2510 = vpop.permute.xlu0 %2509
    %2511 = vrot.lane.b32.xlu0 %v2440, 127
    %v2512 = vpop.permute.xlu0 %2511
    %2513 = vrot.lane.b32.xlu0 %v2441, 127
    %v2514 = vpop.permute.xlu0 %2513
    %2515 = vrot.lane.b32.xlu0 %v2442, 127
    %v2516 = vpop.permute.xlu0 %2515
    %2517 = vrot.lane.b32.xlu0 %v2443, 127
    %v2518 = vpop.permute.xlu0 %2517
    %2519 = vrot.lane.b32.xlu0 %v2444, 127
    %v2520 = vpop.permute.xlu0 %2519
    %2521 = vrot.lane.b32.xlu0 %v2445, 127
    %v2522 = vpop.permute.xlu0 %2521
    %2523 = vrot.lane.b32.xlu0 %v2446, 127
    %v2524 = vpop.permute.xlu0 %2523
    %2525 = vrot.lane.b32.xlu0 %v2447, 127
    %v2526 = vpop.permute.xlu0 %2525
    %2527 = vrot.lane.b32.xlu0 %v2448, 127
    %v2528 = vpop.permute.xlu0 %2527
    %v2529 = vsel %vm62, %v2498, 0.0
    %v2530 = vsel %vm62, %v2500, 0.0
    %v2531 = vsel %vm62, %v2502, 0.0
    %v2532 = vsel %vm62, %v2504, 0.0
    %v2533 = vsel %vm62, %v2506, 0.0
    %v2534 = vsel %vm62, %v2508, 0.0
    %v2535 = vsel %vm62, %v2510, 0.0
    %v2536 = vsel %vm62, %v2512, 0.0
    %v2537 = vsel %vm62, %v2514, 0.0
    %v2538 = vsel %vm62, %v2516, 0.0
    %v2539 = vsel %vm62, %v2518, 0.0
    %v2540 = vsel %vm62, %v2520, 0.0
    %v2541 = vsel %vm62, %v2522, 0.0
    %v2542 = vsel %vm62, %v2524, 0.0
    %v2543 = vsel %vm62, %v2526, 0.0
    %v2544 = vsel %vm62, %v2528, 0.0
    %2545 = vmatpush.msra.mxu0 %v2496
    %2546 = vmatpush.msra.mxu0 %v2495
    %2547 = vmatpush.msra.mxu0 %v2494
    %2548 = vmatpush.msra.mxu0 %v2493
    %2549 = vmatpush.msra.mxu0 %v2492
    %2550 = vmatpush.msra.mxu0 %v2491
    %2551 = vmatpush.msra.mxu0 %v2490
    %2552 = vmatpush.msra.mxu0 %v2489
    %2553 = vmatpush.msra.mxu0 %v2488
    %2554 = vmatpush.msra.mxu0 %v2487
    %2555 = vmatpush.msra.mxu0 %v2486
    %2556 = vmatpush.msra.mxu0 %v2485
    %2557 = vmatpush.msra.mxu0 %v2484
    %2558 = vmatpush.msra.mxu0 %v2483
    %2559 = vmatpush.msra.mxu0 %v2482
    %2560 = vmatpush.msra.mxu0 %v2481
    %2561 = vmatmul.f32.gmra.mxu0 %v111
    %v2562 = vpop.f32.mrf.mxu0
    %v2563 = vadd.f32 0.0, %v2562
    %2564 = vmatmul.f32.gmra.mxu0 %v114
    %v2565 = vpop.f32.mrf.mxu0
    %v2566 = vadd.f32 0.0, %v2565
    %2567 = vmatmul.f32.gmra.mxu0 %v117
    %v2568 = vpop.f32.mrf.mxu0
    %v2569 = vadd.f32 0.0, %v2568
    %2570 = vmatmul.f32.gmra.mxu0 %v120
    %v2571 = vpop.f32.mrf.mxu0
    %v2572 = vadd.f32 0.0, %v2571
    %2573 = vmatmul.f32.gmra.mxu0 %v123
    %v2574 = vpop.f32.mrf.mxu0
    %v2575 = vadd.f32 0.0, %v2574
    %2576 = vmatmul.f32.gmra.mxu0 %v126
    %v2577 = vpop.f32.mrf.mxu0
    %v2578 = vadd.f32 0.0, %v2577
    %2579 = vmatmul.f32.gmra.mxu0 %v129
    %v2580 = vpop.f32.mrf.mxu0
    %v2581 = vadd.f32 0.0, %v2580
    %2582 = vmatmul.f32.gmra.mxu0 %v132
    %v2583 = vpop.f32.mrf.mxu0
    %v2584 = vadd.f32 0.0, %v2583
    %2585 = vmatmul.f32.gmra.mxu0 %v135
    %v2586 = vpop.f32.mrf.mxu0
    %v2587 = vadd.f32 0.0, %v2586
    %2588 = vmatmul.f32.gmra.mxu0 %v138
    %v2589 = vpop.f32.mrf.mxu0
    %v2590 = vadd.f32 0.0, %v2589
    %2591 = vmatmul.f32.gmra.mxu0 %v141
    %v2592 = vpop.f32.mrf.mxu0
    %v2593 = vadd.f32 0.0, %v2592
    %2594 = vmatmul.f32.gmra.mxu0 %v144
    %v2595 = vpop.f32.mrf.mxu0
    %v2596 = vadd.f32 0.0, %v2595
    %2597 = vmatmul.f32.gmra.mxu0 %v147
    %v2598 = vpop.f32.mrf.mxu0
    %v2599 = vadd.f32 0.0, %v2598
    %2600 = vmatmul.f32.gmra.mxu0 %v150
    %v2601 = vpop.f32.mrf.mxu0
    %v2602 = vadd.f32 0.0, %v2601
    %2603 = vmatmul.f32.gmra.mxu0 %v153
    %v2604 = vpop.f32.mrf.mxu0
    %v2605 = vadd.f32 0.0, %v2604
    %2606 = vmatmul.f32.gmra.mxu0 %v156
    %v2607 = vpop.f32.mrf.mxu0
    %v2608 = vadd.f32 0.0, %v2607
    %2609 = vdwg.mxu0
    %2610 = vmatpush.msra.mxu0 %v2448
    %2611 = vmatpush.msra.mxu0 %v2447
    %2612 = vmatpush.msra.mxu0 %v2446
    %2613 = vmatpush.msra.mxu0 %v2445
    %2614 = vmatpush.msra.mxu0 %v2444
    %2615 = vmatpush.msra.mxu0 %v2443
    %2616 = vmatpush.msra.mxu0 %v2442
    %2617 = vmatpush.msra.mxu0 %v2441
    %2618 = vmatpush.msra.mxu0 %v2440
    %2619 = vmatpush.msra.mxu0 %v2439
    %2620 = vmatpush.msra.mxu0 %v2438
    %2621 = vmatpush.msra.mxu0 %v2437
    %2622 = vmatpush.msra.mxu0 %v2436
    %2623 = vmatpush.msra.mxu0 %v2435
    %2624 = vmatpush.msra.mxu0 %v2434
    %2625 = vmatpush.msra.mxu0 %v2433
    %2626 = vmatmul.f32.gmra.mxu0 %v112
    %v2627 = vpop.f32.mrf.mxu0
    %v2628 = vadd.f32 %v2563, %v2627
    %2629 = vmatmul.f32.gmra.mxu0 %v115
    %v2630 = vpop.f32.mrf.mxu0
    %v2631 = vadd.f32 %v2566, %v2630
    %2632 = vmatmul.f32.gmra.mxu0 %v118
    %v2633 = vpop.f32.mrf.mxu0
    %v2634 = vadd.f32 %v2569, %v2633
    %2635 = vmatmul.f32.gmra.mxu0 %v121
    %v2636 = vpop.f32.mrf.mxu0
    %v2637 = vadd.f32 %v2572, %v2636
    %2638 = vmatmul.f32.gmra.mxu0 %v124
    %v2639 = vpop.f32.mrf.mxu0
    %v2640 = vadd.f32 %v2575, %v2639
    %2641 = vmatmul.f32.gmra.mxu0 %v127
    %v2642 = vpop.f32.mrf.mxu0
    %v2643 = vadd.f32 %v2578, %v2642
    %2644 = vmatmul.f32.gmra.mxu0 %v130
    %v2645 = vpop.f32.mrf.mxu0
    %v2646 = vadd.f32 %v2581, %v2645
    %2647 = vmatmul.f32.gmra.mxu0 %v133
    %v2648 = vpop.f32.mrf.mxu0
    %v2649 = vadd.f32 %v2584, %v2648
    %2650 = vmatmul.f32.gmra.mxu0 %v136
    %v2651 = vpop.f32.mrf.mxu0
    %v2652 = vadd.f32 %v2587, %v2651
    %2653 = vmatmul.f32.gmra.mxu0 %v139
    %v2654 = vpop.f32.mrf.mxu0
    %v2655 = vadd.f32 %v2590, %v2654
    %2656 = vmatmul.f32.gmra.mxu0 %v142
    %v2657 = vpop.f32.mrf.mxu0
    %v2658 = vadd.f32 %v2593, %v2657
    %2659 = vmatmul.f32.gmra.mxu0 %v145
    %v2660 = vpop.f32.mrf.mxu0
    %v2661 = vadd.f32 %v2596, %v2660
    %2662 = vmatmul.f32.gmra.mxu0 %v148
    %v2663 = vpop.f32.mrf.mxu0
    %v2664 = vadd.f32 %v2599, %v2663
    %2665 = vmatmul.f32.gmra.mxu0 %v151
    %v2666 = vpop.f32.mrf.mxu0
    %v2667 = vadd.f32 %v2602, %v2666
    %2668 = vmatmul.f32.gmra.mxu0 %v154
    %v2669 = vpop.f32.mrf.mxu0
    %v2670 = vadd.f32 %v2605, %v2669
    %2671 = vmatmul.f32.gmra.mxu0 %v157
    %v2672 = vpop.f32.mrf.mxu0
    %v2673 = vadd.f32 %v2608, %v2672
    %2674 = vdwg.mxu0
    %2675 = vmatpush.msra.mxu0 %v2544
    %2676 = vmatpush.msra.mxu0 %v2543
    %2677 = vmatpush.msra.mxu0 %v2542
    %2678 = vmatpush.msra.mxu0 %v2541
    %2679 = vmatpush.msra.mxu0 %v2540
    %2680 = vmatpush.msra.mxu0 %v2539
    %2681 = vmatpush.msra.mxu0 %v2538
    %2682 = vmatpush.msra.mxu0 %v2537
    %2683 = vmatpush.msra.mxu0 %v2536
    %2684 = vmatpush.msra.mxu0 %v2535
    %2685 = vmatpush.msra.mxu0 %v2534
    %2686 = vmatpush.msra.mxu0 %v2533
    %2687 = vmatpush.msra.mxu0 %v2532
    %2688 = vmatpush.msra.mxu0 %v2531
    %2689 = vmatpush.msra.mxu0 %v2530
    %2690 = vmatpush.msra.mxu0 %v2529
    %2691 = vmatmul.f32.gmra.mxu0 %v113
    %v2692 = vpop.f32.mrf.mxu0
    %v2693 = vadd.f32 %v2628, %v2692
    %2694 = vmatmul.f32.gmra.mxu0 %v116
    %v2695 = vpop.f32.mrf.mxu0
    %v2696 = vadd.f32 %v2631, %v2695
    %2697 = vmatmul.f32.gmra.mxu0 %v119
    %v2698 = vpop.f32.mrf.mxu0
    %v2699 = vadd.f32 %v2634, %v2698
    %2700 = vmatmul.f32.gmra.mxu0 %v122
    %v2701 = vpop.f32.mrf.mxu0
    %v2702 = vadd.f32 %v2637, %v2701
    %2703 = vmatmul.f32.gmra.mxu0 %v125
    %v2704 = vpop.f32.mrf.mxu0
    %v2705 = vadd.f32 %v2640, %v2704
    %2706 = vmatmul.f32.gmra.mxu0 %v128
    %v2707 = vpop.f32.mrf.mxu0
    %v2708 = vadd.f32 %v2643, %v2707
    %2709 = vmatmul.f32.gmra.mxu0 %v131
    %v2710 = vpop.f32.mrf.mxu0
    %v2711 = vadd.f32 %v2646, %v2710
    %2712 = vmatmul.f32.gmra.mxu0 %v134
    %v2713 = vpop.f32.mrf.mxu0
    %v2714 = vadd.f32 %v2649, %v2713
    %2715 = vmatmul.f32.gmra.mxu0 %v137
    %v2716 = vpop.f32.mrf.mxu0
    %v2717 = vadd.f32 %v2652, %v2716
    %2718 = vmatmul.f32.gmra.mxu0 %v140
    %v2719 = vpop.f32.mrf.mxu0
    %v2720 = vadd.f32 %v2655, %v2719
    %2721 = vmatmul.f32.gmra.mxu0 %v143
    %v2722 = vpop.f32.mrf.mxu0
    %v2723 = vadd.f32 %v2658, %v2722
    %2724 = vmatmul.f32.gmra.mxu0 %v146
    %v2725 = vpop.f32.mrf.mxu0
    %v2726 = vadd.f32 %v2661, %v2725
    %2727 = vmatmul.f32.gmra.mxu0 %v149
    %v2728 = vpop.f32.mrf.mxu0
    %v2729 = vadd.f32 %v2664, %v2728
    %2730 = vmatmul.f32.gmra.mxu0 %v152
    %v2731 = vpop.f32.mrf.mxu0
    %v2732 = vadd.f32 %v2667, %v2731
    %2733 = vmatmul.f32.gmra.mxu0 %v155
    %v2734 = vpop.f32.mrf.mxu0
    %v2735 = vadd.f32 %v2670, %v2734
    %2736 = vmatmul.f32.gmra.mxu0 %v158
    %v2737 = vpop.f32.mrf.mxu0
    %v2738 = vadd.f32 %v2673, %v2737
    %2739 = vdwg.mxu0
    %2740 = vst [vmem:[#allocation2] sm:$0xff] %v2693
    %2741 = vst [vmem:[#allocation2 + $0x8] sm:$0xff] %v2696
    %2742 = vst [vmem:[#allocation2 + $0x10] sm:$0xff] %v2699
    %2743 = vst [vmem:[#allocation2 + $0x18] sm:$0xff] %v2702
    %2744 = vst [vmem:[#allocation2 + $0x20] sm:$0xff] %v2705
    %2745 = vst [vmem:[#allocation2 + $0x28] sm:$0xff] %v2708
    %2746 = vst [vmem:[#allocation2 + $0x30] sm:$0xff] %v2711
    %2747 = vst [vmem:[#allocation2 + $0x38] sm:$0xff] %v2714
    %2748 = vst [vmem:[#allocation2 + $0x40] sm:$0xff] %v2717
    %2749 = vst [vmem:[#allocation2 + $0x48] sm:$0xff] %v2720
    %2750 = vst [vmem:[#allocation2 + $0x50] sm:$0xff] %v2723
    %2751 = vst [vmem:[#allocation2 + $0x58] sm:$0xff] %v2726
    %2752 = vst [vmem:[#allocation2 + $0x60] sm:$0xff] %v2729
    %2753 = vst [vmem:[#allocation2 + $0x68] sm:$0xff] %v2732
    %2754 = vst [vmem:[#allocation2 + $0x70] sm:$0xff] %v2735
    %2755 = vst [vmem:[#allocation2 + $0x78] sm:$0xff] %v2738
    %2756 = vadd.xlane.f32.xlu0 %v2693
    %v2757 = vpop.xlane.xlu0 %2756
    %2758 = vadd.xlane.f32.xlu0 %v2696
    %v2759 = vpop.xlane.xlu0 %2758
    %2760 = vadd.xlane.f32.xlu0 %v2699
    %v2761 = vpop.xlane.xlu0 %2760
    %2762 = vadd.xlane.f32.xlu0 %v2702
    %v2763 = vpop.xlane.xlu0 %2762
    %2764 = vadd.xlane.f32.xlu0 %v2705
    %v2765 = vpop.xlane.xlu0 %2764
    %2766 = vadd.xlane.f32.xlu0 %v2708
    %v2767 = vpop.xlane.xlu0 %2766
    %2768 = vadd.xlane.f32.xlu0 %v2711
    %v2769 = vpop.xlane.xlu0 %2768
    %2770 = vadd.xlane.f32.xlu0 %v2714
    %v2771 = vpop.xlane.xlu0 %2770
    %2772 = vadd.xlane.f32.xlu0 %v2717
    %v2773 = vpop.xlane.xlu0 %2772
    %2774 = vadd.xlane.f32.xlu0 %v2720
    %v2775 = vpop.xlane.xlu0 %2774
    %2776 = vadd.xlane.f32.xlu0 %v2723
    %v2777 = vpop.xlane.xlu0 %2776
    %2778 = vadd.xlane.f32.xlu0 %v2726
    %v2779 = vpop.xlane.xlu0 %2778
    %2780 = vadd.xlane.f32.xlu0 %v2729
    %v2781 = vpop.xlane.xlu0 %2780
    %2782 = vadd.xlane.f32.xlu0 %v2732
    %v2783 = vpop.xlane.xlu0 %2782
    %2784 = vadd.xlane.f32.xlu0 %v2735
    %v2785 = vpop.xlane.xlu0 %2784
    %2786 = vadd.xlane.f32.xlu0 %v2738
    %v2787 = vpop.xlane.xlu0 %2786
    %v2788 = vadd.f32 %v2757, 0.0
    %v2789 = vadd.f32 %v2759, 0.0
    %v2790 = vadd.f32 %v2761, 0.0
    %v2791 = vadd.f32 %v2763, 0.0
    %v2792 = vadd.f32 %v2765, 0.0
    %v2793 = vadd.f32 %v2767, 0.0
    %v2794 = vadd.f32 %v2769, 0.0
    %v2795 = vadd.f32 %v2771, 0.0
    %v2796 = vadd.f32 %v2773, 0.0
    %v2797 = vadd.f32 %v2775, 0.0
    %v2798 = vadd.f32 %v2777, 0.0
    %v2799 = vadd.f32 %v2779, 0.0
    %v2800 = vadd.f32 %v2781, 0.0
    %v2801 = vadd.f32 %v2783, 0.0
    %v2802 = vadd.f32 %v2785, 0.0
    %v2803 = vadd.f32 %v2787, 0.0
    %v2804 = vmul.f32 %v2693, %v2693
    %v2805 = vmul.f32 %v2696, %v2696
    %v2806 = vmul.f32 %v2699, %v2699
    %v2807 = vmul.f32 %v2702, %v2702
    %v2808 = vmul.f32 %v2705, %v2705
    %v2809 = vmul.f32 %v2708, %v2708
    %v2810 = vmul.f32 %v2711, %v2711
    %v2811 = vmul.f32 %v2714, %v2714
    %v2812 = vmul.f32 %v2717, %v2717
    %v2813 = vmul.f32 %v2720, %v2720
    %v2814 = vmul.f32 %v2723, %v2723
    %v2815 = vmul.f32 %v2726, %v2726
    %v2816 = vmul.f32 %v2729, %v2729
    %v2817 = vmul.f32 %v2732, %v2732
    %v2818 = vmul.f32 %v2735, %v2735
    %v2819 = vmul.f32 %v2738, %v2738
    %2820 = vadd.xlane.f32.xlu0 %v2804
    %v2821 = vpop.xlane.xlu0 %2820
    %2822 = vadd.xlane.f32.xlu0 %v2805
    %v2823 = vpop.xlane.xlu0 %2822
    %2824 = vadd.xlane.f32.xlu0 %v2806
    %v2825 = vpop.xlane.xlu0 %2824
    %2826 = vadd.xlane.f32.xlu0 %v2807
    %v2827 = vpop.xlane.xlu0 %2826
    %2828 = vadd.xlane.f32.xlu0 %v2808
    %v2829 = vpop.xlane.xlu0 %2828
    %2830 = vadd.xlane.f32.xlu0 %v2809
    %v2831 = vpop.xlane.xlu0 %2830
    %2832 = vadd.xlane.f32.xlu0 %v2810
    %v2833 = vpop.xlane.xlu0 %2832
    %2834 = vadd.xlane.f32.xlu0 %v2811
    %v2835 = vpop.xlane.xlu0 %2834
    %2836 = vadd.xlane.f32.xlu0 %v2812
    %v2837 = vpop.xlane.xlu0 %2836
    %2838 = vadd.xlane.f32.xlu0 %v2813
    %v2839 = vpop.xlane.xlu0 %2838
    %2840 = vadd.xlane.f32.xlu0 %v2814
    %v2841 = vpop.xlane.xlu0 %2840
    %2842 = vadd.xlane.f32.xlu0 %v2815
    %v2843 = vpop.xlane.xlu0 %2842
    %2844 = vadd.xlane.f32.xlu0 %v2816
    %v2845 = vpop.xlane.xlu0 %2844
    %2846 = vadd.xlane.f32.xlu0 %v2817
    %v2847 = vpop.xlane.xlu0 %2846
    %2848 = vadd.xlane.f32.xlu0 %v2818
    %v2849 = vpop.xlane.xlu0 %2848
    %2850 = vadd.xlane.f32.xlu0 %v2819
    %v2851 = vpop.xlane.xlu0 %2850
    %v2852 = vadd.f32 %v2821, 0.0
    %v2853 = vadd.f32 %v2823, 0.0
    %v2854 = vadd.f32 %v2825, 0.0
    %v2855 = vadd.f32 %v2827, 0.0
    %v2856 = vadd.f32 %v2829, 0.0
    %v2857 = vadd.f32 %v2831, 0.0
    %v2858 = vadd.f32 %v2833, 0.0
    %v2859 = vadd.f32 %v2835, 0.0
    %v2860 = vadd.f32 %v2837, 0.0
    %v2861 = vadd.f32 %v2839, 0.0
    %v2862 = vadd.f32 %v2841, 0.0
    %v2863 = vadd.f32 %v2843, 0.0
    %v2864 = vadd.f32 %v2845, 0.0
    %v2865 = vadd.f32 %v2847, 0.0
    %v2866 = vadd.f32 %v2849, 0.0
    %v2867 = vadd.f32 %v2851, 0.0
    %v2868 = vld [vmem:[%s902] sm:$0xff]
    %v2869 = vld [vmem:[%s902 + $0x8] sm:$0xff]
    %v2870 = vld [vmem:[%s902 + $0x10] sm:$0xff]
    %v2871 = vld [vmem:[%s902 + $0x18] sm:$0xff]
    %v2872 = vld [vmem:[%s902 + $0x20] sm:$0xff]
    %v2873 = vld [vmem:[%s902 + $0x28] sm:$0xff]
    %v2874 = vld [vmem:[%s902 + $0x30] sm:$0xff]
    %v2875 = vld [vmem:[%s902 + $0x38] sm:$0xff]
    %v2876 = vld [vmem:[%s902 + $0x40] sm:$0xff]
    %v2877 = vld [vmem:[%s902 + $0x48] sm:$0xff]
    %v2878 = vld [vmem:[%s902 + $0x50] sm:$0xff]
    %v2879 = vld [vmem:[%s902 + $0x58] sm:$0xff]
    %v2880 = vld [vmem:[%s902 + $0x60] sm:$0xff]
    %v2881 = vld [vmem:[%s902 + $0x68] sm:$0xff]
    %v2882 = vld [vmem:[%s902 + $0x70] sm:$0xff]
    %v2883 = vld [vmem:[%s902 + $0x78] sm:$0xff]
    %v2884 = vmul.f32 %v2868, %v2244
    %v2885 = vmul.f32 %v2869, %v2249
    %v2886 = vmul.f32 %v2870, %v2254
    %v2887 = vmul.f32 %v2871, %v2259
    %v2888 = vmul.f32 %v2872, %v2264
    %v2889 = vmul.f32 %v2873, %v2269
    %v2890 = vmul.f32 %v2874, %v2274
    %v2891 = vmul.f32 %v2875, %v2279
    %v2892 = vmul.f32 %v2876, %v2284
    %v2893 = vmul.f32 %v2877, %v2289
    %v2894 = vmul.f32 %v2878, %v2294
    %v2895 = vmul.f32 %v2879, %v2299
    %v2896 = vmul.f32 %v2880, %v2304
    %v2897 = vmul.f32 %v2881, %v2309
    %v2898 = vmul.f32 %v2882, %v2314
    %v2899 = vmul.f32 %v2883, %v2319
    %v2900 = vadd.f32 %v2884, %v2340
    %v2901 = vadd.f32 %v2885, %v2345
    %v2902 = vadd.f32 %v2886, %v2350
    %v2903 = vadd.f32 %v2887, %v2355
    %v2904 = vadd.f32 %v2888, %v2360
    %v2905 = vadd.f32 %v2889, %v2365
    %v2906 = vadd.f32 %v2890, %v2370
    %v2907 = vadd.f32 %v2891, %v2375
    %v2908 = vadd.f32 %v2892, %v2380
    %v2909 = vadd.f32 %v2893, %v2385
    %v2910 = vadd.f32 %v2894, %v2390
    %v2911 = vadd.f32 %v2895, %v2395
    %v2912 = vadd.f32 %v2896, %v2400
    %v2913 = vadd.f32 %v2897, %v2405
    %v2914 = vadd.f32 %v2898, %v2410
    %v2915 = vadd.f32 %v2899, %v2415
    %v2916 = vmax.f32 %v2900, 0.0
    %v2917 = vmax.f32 %v2901, 0.0
    %v2918 = vmax.f32 %v2902, 0.0
    %v2919 = vmax.f32 %v2903, 0.0
    %v2920 = vmax.f32 %v2904, 0.0
    %v2921 = vmax.f32 %v2905, 0.0
    %v2922 = vmax.f32 %v2906, 0.0
    %v2923 = vmax.f32 %v2907, 0.0
    %v2924 = vmax.f32 %v2908, 0.0
    %v2925 = vmax.f32 %v2909, 0.0
    %v2926 = vmax.f32 %v2910, 0.0
    %v2927 = vmax.f32 %v2911, 0.0
    %v2928 = vmax.f32 %v2912, 0.0
    %v2929 = vmax.f32 %v2913, 0.0
    %v2930 = vmax.f32 %v2914, 0.0
    %v2931 = vmax.f32 %v2915, 0.0
    %2932 = vrot.lane.b32.xlu0 %v2916, 1
    %v2933 = vpop.permute.xlu0 %2932
    %2934 = vrot.lane.b32.xlu0 %v2917, 1
    %v2935 = vpop.permute.xlu0 %2934
    %2936 = vrot.lane.b32.xlu0 %v2918, 1
    %v2937 = vpop.permute.xlu0 %2936
    %2938 = vrot.lane.b32.xlu0 %v2919, 1
    %v2939 = vpop.permute.xlu0 %2938
    %2940 = vrot.lane.b32.xlu0 %v2920, 1
    %v2941 = vpop.permute.xlu0 %2940
    %2942 = vrot.lane.b32.xlu0 %v2921, 1
    %v2943 = vpop.permute.xlu0 %2942
    %2944 = vrot.lane.b32.xlu0 %v2922, 1
    %v2945 = vpop.permute.xlu0 %2944
    %2946 = vrot.lane.b32.xlu0 %v2923, 1
    %v2947 = vpop.permute.xlu0 %2946
    %2948 = vrot.lane.b32.xlu0 %v2924, 1
    %v2949 = vpop.permute.xlu0 %2948
    %2950 = vrot.lane.b32.xlu0 %v2925, 1
    %v2951 = vpop.permute.xlu0 %2950
    %2952 = vrot.lane.b32.xlu0 %v2926, 1
    %v2953 = vpop.permute.xlu0 %2952
    %2954 = vrot.lane.b32.xlu0 %v2927, 1
    %v2955 = vpop.permute.xlu0 %2954
    %2956 = vrot.lane.b32.xlu0 %v2928, 1
    %v2957 = vpop.permute.xlu0 %2956
    %2958 = vrot.lane.b32.xlu0 %v2929, 1
    %v2959 = vpop.permute.xlu0 %2958
    %2960 = vrot.lane.b32.xlu0 %v2930, 1
    %v2961 = vpop.permute.xlu0 %2960
    %2962 = vrot.lane.b32.xlu0 %v2931, 1
    %v2963 = vpop.permute.xlu0 %2962
    %v2964 = vsel %vm61, %v2933, 0.0
    %v2965 = vsel %vm61, %v2935, 0.0
    %v2966 = vsel %vm61, %v2937, 0.0
    %v2967 = vsel %vm61, %v2939, 0.0
    %v2968 = vsel %vm61, %v2941, 0.0
    %v2969 = vsel %vm61, %v2943, 0.0
    %v2970 = vsel %vm61, %v2945, 0.0
    %v2971 = vsel %vm61, %v2947, 0.0
    %v2972 = vsel %vm61, %v2949, 0.0
    %v2973 = vsel %vm61, %v2951, 0.0
    %v2974 = vsel %vm61, %v2953, 0.0
    %v2975 = vsel %vm61, %v2955, 0.0
    %v2976 = vsel %vm61, %v2957, 0.0
    %v2977 = vsel %vm61, %v2959, 0.0
    %v2978 = vsel %vm61, %v2961, 0.0
    %v2979 = vsel %vm61, %v2963, 0.0
    %2980 = vrot.lane.b32.xlu0 %v2916, 127
    %v2981 = vpop.permute.xlu0 %2980
    %2982 = vrot.lane.b32.xlu0 %v2917, 127
    %v2983 = vpop.permute.xlu0 %2982
    %2984 = vrot.lane.b32.xlu0 %v2918, 127
    %v2985 = vpop.permute.xlu0 %2984
    %2986 = vrot.lane.b32.xlu0 %v2919, 127
    %v2987 = vpop.permute.xlu0 %2986
    %2988 = vrot.lane.b32.xlu0 %v2920, 127
    %v2989 = vpop.permute.xlu0 %2988
    %2990 = vrot.lane.b32.xlu0 %v2921, 127
    %v2991 = vpop.permute.xlu0 %2990
    %2992 = vrot.lane.b32.xlu0 %v2922, 127
    %v2993 = vpop.permute.xlu0 %2992
    %2994 = vrot.lane.b32.xlu0 %v2923, 127
    %v2995 = vpop.permute.xlu0 %2994
    %2996 = vrot.lane.b32.xlu0 %v2924, 127
    %v2997 = vpop.permute.xlu0 %2996
    %2998 = vrot.lane.b32.xlu0 %v2925, 127
    %v2999 = vpop.permute.xlu0 %2998
    %3000 = vrot.lane.b32.xlu0 %v2926, 127
    %v3001 = vpop.permute.xlu0 %3000
    %3002 = vrot.lane.b32.xlu0 %v2927, 127
    %v3003 = vpop.permute.xlu0 %3002
    %3004 = vrot.lane.b32.xlu0 %v2928, 127
    %v3005 = vpop.permute.xlu0 %3004
    %3006 = vrot.lane.b32.xlu0 %v2929, 127
    %v3007 = vpop.permute.xlu0 %3006
    %3008 = vrot.lane.b32.xlu0 %v2930, 127
    %v3009 = vpop.permute.xlu0 %3008
    %3010 = vrot.lane.b32.xlu0 %v2931, 127
    %v3011 = vpop.permute.xlu0 %3010
    %v3012 = vsel %vm62, %v2981, 0.0
    %v3013 = vsel %vm62, %v2983, 0.0
    %v3014 = vsel %vm62, %v2985, 0.0
    %v3015 = vsel %vm62, %v2987, 0.0
    %v3016 = vsel %vm62, %v2989, 0.0
    %v3017 = vsel %vm62, %v2991, 0.0
    %v3018 = vsel %vm62, %v2993, 0.0
    %v3019 = vsel %vm62, %v2995, 0.0
    %v3020 = vsel %vm62, %v2997, 0.0
    %v3021 = vsel %vm62, %v2999, 0.0
    %v3022 = vsel %vm62, %v3001, 0.0
    %v3023 = vsel %vm62, %v3003, 0.0
    %v3024 = vsel %vm62, %v3005, 0.0
    %v3025 = vsel %vm62, %v3007, 0.0
    %v3026 = vsel %vm62, %v3009, 0.0
    %v3027 = vsel %vm62, %v3011, 0.0
    %3028 = vmatpush.msra.mxu0 %v2979
    %3029 = vmatpush.msra.mxu0 %v2978
    %3030 = vmatpush.msra.mxu0 %v2977
    %3031 = vmatpush.msra.mxu0 %v2976
    %3032 = vmatpush.msra.mxu0 %v2975
    %3033 = vmatpush.msra.mxu0 %v2974
    %3034 = vmatpush.msra.mxu0 %v2973
    %3035 = vmatpush.msra.mxu0 %v2972
    %3036 = vmatpush.msra.mxu0 %v2971
    %3037 = vmatpush.msra.mxu0 %v2970
    %3038 = vmatpush.msra.mxu0 %v2969
    %3039 = vmatpush.msra.mxu0 %v2968
    %3040 = vmatpush.msra.mxu0 %v2967
    %3041 = vmatpush.msra.mxu0 %v2966
    %3042 = vmatpush.msra.mxu0 %v2965
    %3043 = vmatpush.msra.mxu0 %v2964
    %3044 = vmatmul.f32.gmra.mxu0 %v111
    %v3045 = vpop.f32.mrf.mxu0
    %v3046 = vadd.f32 0.0, %v3045
    %3047 = vmatmul.f32.gmra.mxu0 %v114
    %v3048 = vpop.f32.mrf.mxu0
    %v3049 = vadd.f32 0.0, %v3048
    %3050 = vmatmul.f32.gmra.mxu0 %v117
    %v3051 = vpop.f32.mrf.mxu0
    %v3052 = vadd.f32 0.0, %v3051
    %3053 = vmatmul.f32.gmra.mxu0 %v120
    %v3054 = vpop.f32.mrf.mxu0
    %v3055 = vadd.f32 0.0, %v3054
    %3056 = vmatmul.f32.gmra.mxu0 %v123
    %v3057 = vpop.f32.mrf.mxu0
    %v3058 = vadd.f32 0.0, %v3057
    %3059 = vmatmul.f32.gmra.mxu0 %v126
    %v3060 = vpop.f32.mrf.mxu0
    %v3061 = vadd.f32 0.0, %v3060
    %3062 = vmatmul.f32.gmra.mxu0 %v129
    %v3063 = vpop.f32.mrf.mxu0
    %v3064 = vadd.f32 0.0, %v3063
    %3065 = vmatmul.f32.gmra.mxu0 %v132
    %v3066 = vpop.f32.mrf.mxu0
    %v3067 = vadd.f32 0.0, %v3066
    %3068 = vmatmul.f32.gmra.mxu0 %v135
    %v3069 = vpop.f32.mrf.mxu0
    %v3070 = vadd.f32 0.0, %v3069
    %3071 = vmatmul.f32.gmra.mxu0 %v138
    %v3072 = vpop.f32.mrf.mxu0
    %v3073 = vadd.f32 0.0, %v3072
    %3074 = vmatmul.f32.gmra.mxu0 %v141
    %v3075 = vpop.f32.mrf.mxu0
    %v3076 = vadd.f32 0.0, %v3075
    %3077 = vmatmul.f32.gmra.mxu0 %v144
    %v3078 = vpop.f32.mrf.mxu0
    %v3079 = vadd.f32 0.0, %v3078
    %3080 = vmatmul.f32.gmra.mxu0 %v147
    %v3081 = vpop.f32.mrf.mxu0
    %v3082 = vadd.f32 0.0, %v3081
    %3083 = vmatmul.f32.gmra.mxu0 %v150
    %v3084 = vpop.f32.mrf.mxu0
    %v3085 = vadd.f32 0.0, %v3084
    %3086 = vmatmul.f32.gmra.mxu0 %v153
    %v3087 = vpop.f32.mrf.mxu0
    %v3088 = vadd.f32 0.0, %v3087
    %3089 = vmatmul.f32.gmra.mxu0 %v156
    %v3090 = vpop.f32.mrf.mxu0
    %v3091 = vadd.f32 0.0, %v3090
    %3092 = vdwg.mxu0
    %3093 = vmatpush.msra.mxu0 %v2931
    %3094 = vmatpush.msra.mxu0 %v2930
    %3095 = vmatpush.msra.mxu0 %v2929
    %3096 = vmatpush.msra.mxu0 %v2928
    %3097 = vmatpush.msra.mxu0 %v2927
    %3098 = vmatpush.msra.mxu0 %v2926
    %3099 = vmatpush.msra.mxu0 %v2925
    %3100 = vmatpush.msra.mxu0 %v2924
    %3101 = vmatpush.msra.mxu0 %v2923
    %3102 = vmatpush.msra.mxu0 %v2922
    %3103 = vmatpush.msra.mxu0 %v2921
    %3104 = vmatpush.msra.mxu0 %v2920
    %3105 = vmatpush.msra.mxu0 %v2919
    %3106 = vmatpush.msra.mxu0 %v2918
    %3107 = vmatpush.msra.mxu0 %v2917
    %3108 = vmatpush.msra.mxu0 %v2916
    %3109 = vmatmul.f32.gmra.mxu0 %v112
    %v3110 = vpop.f32.mrf.mxu0
    %v3111 = vadd.f32 %v3046, %v3110
    %3112 = vmatmul.f32.gmra.mxu0 %v115
    %v3113 = vpop.f32.mrf.mxu0
    %v3114 = vadd.f32 %v3049, %v3113
    %3115 = vmatmul.f32.gmra.mxu0 %v118
    %v3116 = vpop.f32.mrf.mxu0
    %v3117 = vadd.f32 %v3052, %v3116
    %3118 = vmatmul.f32.gmra.mxu0 %v121
    %v3119 = vpop.f32.mrf.mxu0
    %v3120 = vadd.f32 %v3055, %v3119
    %3121 = vmatmul.f32.gmra.mxu0 %v124
    %v3122 = vpop.f32.mrf.mxu0
    %v3123 = vadd.f32 %v3058, %v3122
    %3124 = vmatmul.f32.gmra.mxu0 %v127
    %v3125 = vpop.f32.mrf.mxu0
    %v3126 = vadd.f32 %v3061, %v3125
    %3127 = vmatmul.f32.gmra.mxu0 %v130
    %v3128 = vpop.f32.mrf.mxu0
    %v3129 = vadd.f32 %v3064, %v3128
    %3130 = vmatmul.f32.gmra.mxu0 %v133
    %v3131 = vpop.f32.mrf.mxu0
    %v3132 = vadd.f32 %v3067, %v3131
    %3133 = vmatmul.f32.gmra.mxu0 %v136
    %v3134 = vpop.f32.mrf.mxu0
    %v3135 = vadd.f32 %v3070, %v3134
    %3136 = vmatmul.f32.gmra.mxu0 %v139
    %v3137 = vpop.f32.mrf.mxu0
    %v3138 = vadd.f32 %v3073, %v3137
    %3139 = vmatmul.f32.gmra.mxu0 %v142
    %v3140 = vpop.f32.mrf.mxu0
    %v3141 = vadd.f32 %v3076, %v3140
    %3142 = vmatmul.f32.gmra.mxu0 %v145
    %v3143 = vpop.f32.mrf.mxu0
    %v3144 = vadd.f32 %v3079, %v3143
    %3145 = vmatmul.f32.gmra.mxu0 %v148
    %v3146 = vpop.f32.mrf.mxu0
    %v3147 = vadd.f32 %v3082, %v3146
    %3148 = vmatmul.f32.gmra.mxu0 %v151
    %v3149 = vpop.f32.mrf.mxu0
    %v3150 = vadd.f32 %v3085, %v3149
    %3151 = vmatmul.f32.gmra.mxu0 %v154
    %v3152 = vpop.f32.mrf.mxu0
    %v3153 = vadd.f32 %v3088, %v3152
    %3154 = vmatmul.f32.gmra.mxu0 %v157
    %v3155 = vpop.f32.mrf.mxu0
    %v3156 = vadd.f32 %v3091, %v3155
    %3157 = vdwg.mxu0
    %3158 = vmatpush.msra.mxu0 %v3027
    %3159 = vmatpush.msra.mxu0 %v3026
    %3160 = vmatpush.msra.mxu0 %v3025
    %3161 = vmatpush.msra.mxu0 %v3024
    %3162 = vmatpush.msra.mxu0 %v3023
    %3163 = vmatpush.msra.mxu0 %v3022
    %3164 = vmatpush.msra.mxu0 %v3021
    %3165 = vmatpush.msra.mxu0 %v3020
    %3166 = vmatpush.msra.mxu0 %v3019
    %3167 = vmatpush.msra.mxu0 %v3018
    %3168 = vmatpush.msra.mxu0 %v3017
    %3169 = vmatpush.msra.mxu0 %v3016
    %3170 = vmatpush.msra.mxu0 %v3015
    %3171 = vmatpush.msra.mxu0 %v3014
    %3172 = vmatpush.msra.mxu0 %v3013
    %3173 = vmatpush.msra.mxu0 %v3012
    %3174 = vmatmul.f32.gmra.mxu0 %v113
    %v3175 = vpop.f32.mrf.mxu0
    %v3176 = vadd.f32 %v3111, %v3175
    %3177 = vmatmul.f32.gmra.mxu0 %v116
    %v3178 = vpop.f32.mrf.mxu0
    %v3179 = vadd.f32 %v3114, %v3178
    %3180 = vmatmul.f32.gmra.mxu0 %v119
    %v3181 = vpop.f32.mrf.mxu0
    %v3182 = vadd.f32 %v3117, %v3181
    %3183 = vmatmul.f32.gmra.mxu0 %v122
    %v3184 = vpop.f32.mrf.mxu0
    %v3185 = vadd.f32 %v3120, %v3184
    %3186 = vmatmul.f32.gmra.mxu0 %v125
    %v3187 = vpop.f32.mrf.mxu0
    %v3188 = vadd.f32 %v3123, %v3187
    %3189 = vmatmul.f32.gmra.mxu0 %v128
    %v3190 = vpop.f32.mrf.mxu0
    %v3191 = vadd.f32 %v3126, %v3190
    %3192 = vmatmul.f32.gmra.mxu0 %v131
    %v3193 = vpop.f32.mrf.mxu0
    %v3194 = vadd.f32 %v3129, %v3193
    %3195 = vmatmul.f32.gmra.mxu0 %v134
    %v3196 = vpop.f32.mrf.mxu0
    %v3197 = vadd.f32 %v3132, %v3196
    %3198 = vmatmul.f32.gmra.mxu0 %v137
    %v3199 = vpop.f32.mrf.mxu0
    %v3200 = vadd.f32 %v3135, %v3199
    %3201 = vmatmul.f32.gmra.mxu0 %v140
    %v3202 = vpop.f32.mrf.mxu0
    %v3203 = vadd.f32 %v3138, %v3202
    %3204 = vmatmul.f32.gmra.mxu0 %v143
    %v3205 = vpop.f32.mrf.mxu0
    %v3206 = vadd.f32 %v3141, %v3205
    %3207 = vmatmul.f32.gmra.mxu0 %v146
    %v3208 = vpop.f32.mrf.mxu0
    %v3209 = vadd.f32 %v3144, %v3208
    %3210 = vmatmul.f32.gmra.mxu0 %v149
    %v3211 = vpop.f32.mrf.mxu0
    %v3212 = vadd.f32 %v3147, %v3211
    %3213 = vmatmul.f32.gmra.mxu0 %v152
    %v3214 = vpop.f32.mrf.mxu0
    %v3215 = vadd.f32 %v3150, %v3214
    %3216 = vmatmul.f32.gmra.mxu0 %v155
    %v3217 = vpop.f32.mrf.mxu0
    %v3218 = vadd.f32 %v3153, %v3217
    %3219 = vmatmul.f32.gmra.mxu0 %v158
    %v3220 = vpop.f32.mrf.mxu0
    %v3221 = vadd.f32 %v3156, %v3220
    %3222 = vdwg.mxu0
    %3223 = vst [vmem:[%s902] sm:$0xff] %v3176
    %3224 = vst [vmem:[%s902 + $0x8] sm:$0xff] %v3179
    %3225 = vst [vmem:[%s902 + $0x10] sm:$0xff] %v3182
    %3226 = vst [vmem:[%s902 + $0x18] sm:$0xff] %v3185
    %3227 = vst [vmem:[%s902 + $0x20] sm:$0xff] %v3188
    %3228 = vst [vmem:[%s902 + $0x28] sm:$0xff] %v3191
    %3229 = vst [vmem:[%s902 + $0x30] sm:$0xff] %v3194
    %3230 = vst [vmem:[%s902 + $0x38] sm:$0xff] %v3197
    %3231 = vst [vmem:[%s902 + $0x40] sm:$0xff] %v3200
    %3232 = vst [vmem:[%s902 + $0x48] sm:$0xff] %v3203
    %3233 = vst [vmem:[%s902 + $0x50] sm:$0xff] %v3206
    %3234 = vst [vmem:[%s902 + $0x58] sm:$0xff] %v3209
    %3235 = vst [vmem:[%s902 + $0x60] sm:$0xff] %v3212
    %3236 = vst [vmem:[%s902 + $0x68] sm:$0xff] %v3215
    %3237 = vst [vmem:[%s902 + $0x70] sm:$0xff] %v3218
    %3238 = vst [vmem:[%s902 + $0x78] sm:$0xff] %v3221
    %3239 = vadd.xlane.f32.xlu0 %v3176
    %v3240 = vpop.xlane.xlu0 %3239
    %3241 = vadd.xlane.f32.xlu0 %v3179
    %v3242 = vpop.xlane.xlu0 %3241
    %3243 = vadd.xlane.f32.xlu0 %v3182
    %v3244 = vpop.xlane.xlu0 %3243
    %3245 = vadd.xlane.f32.xlu0 %v3185
    %v3246 = vpop.xlane.xlu0 %3245
    %3247 = vadd.xlane.f32.xlu0 %v3188
    %v3248 = vpop.xlane.xlu0 %3247
    %3249 = vadd.xlane.f32.xlu0 %v3191
    %v3250 = vpop.xlane.xlu0 %3249
    %3251 = vadd.xlane.f32.xlu0 %v3194
    %v3252 = vpop.xlane.xlu0 %3251
    %3253 = vadd.xlane.f32.xlu0 %v3197
    %v3254 = vpop.xlane.xlu0 %3253
    %3255 = vadd.xlane.f32.xlu0 %v3200
    %v3256 = vpop.xlane.xlu0 %3255
    %3257 = vadd.xlane.f32.xlu0 %v3203
    %v3258 = vpop.xlane.xlu0 %3257
    %3259 = vadd.xlane.f32.xlu0 %v3206
    %v3260 = vpop.xlane.xlu0 %3259
    %3261 = vadd.xlane.f32.xlu0 %v3209
    %v3262 = vpop.xlane.xlu0 %3261
    %3263 = vadd.xlane.f32.xlu0 %v3212
    %v3264 = vpop.xlane.xlu0 %3263
    %3265 = vadd.xlane.f32.xlu0 %v3215
    %v3266 = vpop.xlane.xlu0 %3265
    %3267 = vadd.xlane.f32.xlu0 %v3218
    %v3268 = vpop.xlane.xlu0 %3267
    %3269 = vadd.xlane.f32.xlu0 %v3221
    %v3270 = vpop.xlane.xlu0 %3269
    %v3271 = vadd.f32 %v2788, %v3240
    %v3272 = vadd.f32 %v2789, %v3242
    %v3273 = vadd.f32 %v2790, %v3244
    %v3274 = vadd.f32 %v2791, %v3246
    %v3275 = vadd.f32 %v2792, %v3248
    %v3276 = vadd.f32 %v2793, %v3250
    %v3277 = vadd.f32 %v2794, %v3252
    %v3278 = vadd.f32 %v2795, %v3254
    %v3279 = vadd.f32 %v2796, %v3256
    %v3280 = vadd.f32 %v2797, %v3258
    %v3281 = vadd.f32 %v2798, %v3260
    %v3282 = vadd.f32 %v2799, %v3262
    %v3283 = vadd.f32 %v2800, %v3264
    %v3284 = vadd.f32 %v2801, %v3266
    %v3285 = vadd.f32 %v2802, %v3268
    %v3286 = vadd.f32 %v2803, %v3270
    %v3287 = vmul.f32 %v3176, %v3176
    %v3288 = vmul.f32 %v3179, %v3179
    %v3289 = vmul.f32 %v3182, %v3182
    %v3290 = vmul.f32 %v3185, %v3185
    %v3291 = vmul.f32 %v3188, %v3188
    %v3292 = vmul.f32 %v3191, %v3191
    %v3293 = vmul.f32 %v3194, %v3194
    %v3294 = vmul.f32 %v3197, %v3197
    %v3295 = vmul.f32 %v3200, %v3200
    %v3296 = vmul.f32 %v3203, %v3203
    %v3297 = vmul.f32 %v3206, %v3206
    %v3298 = vmul.f32 %v3209, %v3209
    %v3299 = vmul.f32 %v3212, %v3212
    %v3300 = vmul.f32 %v3215, %v3215
    %v3301 = vmul.f32 %v3218, %v3218
    %v3302 = vmul.f32 %v3221, %v3221
    %3303 = vadd.xlane.f32.xlu0 %v3287
    %v3304 = vpop.xlane.xlu0 %3303
    %3305 = vadd.xlane.f32.xlu0 %v3288
    %v3306 = vpop.xlane.xlu0 %3305
    %3307 = vadd.xlane.f32.xlu0 %v3289
    %v3308 = vpop.xlane.xlu0 %3307
    %3309 = vadd.xlane.f32.xlu0 %v3290
    %v3310 = vpop.xlane.xlu0 %3309
    %3311 = vadd.xlane.f32.xlu0 %v3291
    %v3312 = vpop.xlane.xlu0 %3311
    %3313 = vadd.xlane.f32.xlu0 %v3292
    %v3314 = vpop.xlane.xlu0 %3313
    %3315 = vadd.xlane.f32.xlu0 %v3293
    %v3316 = vpop.xlane.xlu0 %3315
    %3317 = vadd.xlane.f32.xlu0 %v3294
    %v3318 = vpop.xlane.xlu0 %3317
    %3319 = vadd.xlane.f32.xlu0 %v3295
    %v3320 = vpop.xlane.xlu0 %3319
    %3321 = vadd.xlane.f32.xlu0 %v3296
    %v3322 = vpop.xlane.xlu0 %3321
    %3323 = vadd.xlane.f32.xlu0 %v3297
    %v3324 = vpop.xlane.xlu0 %3323
    %3325 = vadd.xlane.f32.xlu0 %v3298
    %v3326 = vpop.xlane.xlu0 %3325
    %3327 = vadd.xlane.f32.xlu0 %v3299
    %v3328 = vpop.xlane.xlu0 %3327
    %3329 = vadd.xlane.f32.xlu0 %v3300
    %v3330 = vpop.xlane.xlu0 %3329
    %3331 = vadd.xlane.f32.xlu0 %v3301
    %v3332 = vpop.xlane.xlu0 %3331
    %3333 = vadd.xlane.f32.xlu0 %v3302
    %v3334 = vpop.xlane.xlu0 %3333
    %v3335 = vadd.f32 %v2852, %v3304
    %v3336 = vadd.f32 %v2853, %v3306
    %v3337 = vadd.f32 %v2854, %v3308
    %v3338 = vadd.f32 %v2855, %v3310
    %v3339 = vadd.f32 %v2856, %v3312
    %v3340 = vadd.f32 %v2857, %v3314
    %v3341 = vadd.f32 %v2858, %v3316
    %v3342 = vadd.f32 %v2859, %v3318
    %v3343 = vadd.f32 %v2860, %v3320
    %v3344 = vadd.f32 %v2861, %v3322
    %v3345 = vadd.f32 %v2862, %v3324
    %v3346 = vadd.f32 %v2863, %v3326
    %v3347 = vadd.f32 %v2864, %v3328
    %v3348 = vadd.f32 %v2865, %v3330
    %v3349 = vadd.f32 %v2866, %v3332
    %v3350 = vadd.f32 %v2867, %v3334
    %v3351 = vld [vmem:[%s1339] sm:$0xff]
    %v3352 = vld [vmem:[%s1339 + $0x8] sm:$0xff]
    %v3353 = vld [vmem:[%s1339 + $0x10] sm:$0xff]
    %v3354 = vld [vmem:[%s1339 + $0x18] sm:$0xff]
    %v3355 = vld [vmem:[%s1339 + $0x20] sm:$0xff]
    %v3356 = vld [vmem:[%s1339 + $0x28] sm:$0xff]
    %v3357 = vld [vmem:[%s1339 + $0x30] sm:$0xff]
    %v3358 = vld [vmem:[%s1339 + $0x38] sm:$0xff]
    %v3359 = vld [vmem:[%s1339 + $0x40] sm:$0xff]
    %v3360 = vld [vmem:[%s1339 + $0x48] sm:$0xff]
    %v3361 = vld [vmem:[%s1339 + $0x50] sm:$0xff]
    %v3362 = vld [vmem:[%s1339 + $0x58] sm:$0xff]
    %v3363 = vld [vmem:[%s1339 + $0x60] sm:$0xff]
    %v3364 = vld [vmem:[%s1339 + $0x68] sm:$0xff]
    %v3365 = vld [vmem:[%s1339 + $0x70] sm:$0xff]
    %v3366 = vld [vmem:[%s1339 + $0x78] sm:$0xff]
    %v3367 = vmul.f32 %v3351, %v2244
    %v3368 = vmul.f32 %v3352, %v2249
    %v3369 = vmul.f32 %v3353, %v2254
    %v3370 = vmul.f32 %v3354, %v2259
    %v3371 = vmul.f32 %v3355, %v2264
    %v3372 = vmul.f32 %v3356, %v2269
    %v3373 = vmul.f32 %v3357, %v2274
    %v3374 = vmul.f32 %v3358, %v2279
    %v3375 = vmul.f32 %v3359, %v2284
    %v3376 = vmul.f32 %v3360, %v2289
    %v3377 = vmul.f32 %v3361, %v2294
    %v3378 = vmul.f32 %v3362, %v2299
    %v3379 = vmul.f32 %v3363, %v2304
    %v3380 = vmul.f32 %v3364, %v2309
    %v3381 = vmul.f32 %v3365, %v2314
    %v3382 = vmul.f32 %v3366, %v2319
    %v3383 = vadd.f32 %v3367, %v2340
    %v3384 = vadd.f32 %v3368, %v2345
    %v3385 = vadd.f32 %v3369, %v2350
    %v3386 = vadd.f32 %v3370, %v2355
    %v3387 = vadd.f32 %v3371, %v2360
    %v3388 = vadd.f32 %v3372, %v2365
    %v3389 = vadd.f32 %v3373, %v2370
    %v3390 = vadd.f32 %v3374, %v2375
    %v3391 = vadd.f32 %v3375, %v2380
    %v3392 = vadd.f32 %v3376, %v2385
    %v3393 = vadd.f32 %v3377, %v2390
    %v3394 = vadd.f32 %v3378, %v2395
    %v3395 = vadd.f32 %v3379, %v2400
    %v3396 = vadd.f32 %v3380, %v2405
    %v3397 = vadd.f32 %v3381, %v2410
    %v3398 = vadd.f32 %v3382, %v2415
    %v3399 = vmax.f32 %v3383, 0.0
    %v3400 = vmax.f32 %v3384, 0.0
    %v3401 = vmax.f32 %v3385, 0.0
    %v3402 = vmax.f32 %v3386, 0.0
    %v3403 = vmax.f32 %v3387, 0.0
    %v3404 = vmax.f32 %v3388, 0.0
    %v3405 = vmax.f32 %v3389, 0.0
    %v3406 = vmax.f32 %v3390, 0.0
    %v3407 = vmax.f32 %v3391, 0.0
    %v3408 = vmax.f32 %v3392, 0.0
    %v3409 = vmax.f32 %v3393, 0.0
    %v3410 = vmax.f32 %v3394, 0.0
    %v3411 = vmax.f32 %v3395, 0.0
    %v3412 = vmax.f32 %v3396, 0.0
    %v3413 = vmax.f32 %v3397, 0.0
    %v3414 = vmax.f32 %v3398, 0.0
    %3415 = vrot.lane.b32.xlu0 %v3399, 1
    %v3416 = vpop.permute.xlu0 %3415
    %3417 = vrot.lane.b32.xlu0 %v3400, 1
    %v3418 = vpop.permute.xlu0 %3417
    %3419 = vrot.lane.b32.xlu0 %v3401, 1
    %v3420 = vpop.permute.xlu0 %3419
    %3421 = vrot.lane.b32.xlu0 %v3402, 1
    %v3422 = vpop.permute.xlu0 %3421
    %3423 = vrot.lane.b32.xlu0 %v3403, 1
    %v3424 = vpop.permute.xlu0 %3423
    %3425 = vrot.lane.b32.xlu0 %v3404, 1
    %v3426 = vpop.permute.xlu0 %3425
    %3427 = vrot.lane.b32.xlu0 %v3405, 1
    %v3428 = vpop.permute.xlu0 %3427
    %3429 = vrot.lane.b32.xlu0 %v3406, 1
    %v3430 = vpop.permute.xlu0 %3429
    %3431 = vrot.lane.b32.xlu0 %v3407, 1
    %v3432 = vpop.permute.xlu0 %3431
    %3433 = vrot.lane.b32.xlu0 %v3408, 1
    %v3434 = vpop.permute.xlu0 %3433
    %3435 = vrot.lane.b32.xlu0 %v3409, 1
    %v3436 = vpop.permute.xlu0 %3435
    %3437 = vrot.lane.b32.xlu0 %v3410, 1
    %v3438 = vpop.permute.xlu0 %3437
    %3439 = vrot.lane.b32.xlu0 %v3411, 1
    %v3440 = vpop.permute.xlu0 %3439
    %3441 = vrot.lane.b32.xlu0 %v3412, 1
    %v3442 = vpop.permute.xlu0 %3441
    %3443 = vrot.lane.b32.xlu0 %v3413, 1
    %v3444 = vpop.permute.xlu0 %3443
    %3445 = vrot.lane.b32.xlu0 %v3414, 1
    %v3446 = vpop.permute.xlu0 %3445
    %v3447 = vsel %vm61, %v3416, 0.0
    %v3448 = vsel %vm61, %v3418, 0.0
    %v3449 = vsel %vm61, %v3420, 0.0
    %v3450 = vsel %vm61, %v3422, 0.0
    %v3451 = vsel %vm61, %v3424, 0.0
    %v3452 = vsel %vm61, %v3426, 0.0
    %v3453 = vsel %vm61, %v3428, 0.0
    %v3454 = vsel %vm61, %v3430, 0.0
    %v3455 = vsel %vm61, %v3432, 0.0
    %v3456 = vsel %vm61, %v3434, 0.0
    %v3457 = vsel %vm61, %v3436, 0.0
    %v3458 = vsel %vm61, %v3438, 0.0
    %v3459 = vsel %vm61, %v3440, 0.0
    %v3460 = vsel %vm61, %v3442, 0.0
    %v3461 = vsel %vm61, %v3444, 0.0
    %v3462 = vsel %vm61, %v3446, 0.0
    %3463 = vrot.lane.b32.xlu0 %v3399, 127
    %v3464 = vpop.permute.xlu0 %3463
    %3465 = vrot.lane.b32.xlu0 %v3400, 127
    %v3466 = vpop.permute.xlu0 %3465
    %3467 = vrot.lane.b32.xlu0 %v3401, 127
    %v3468 = vpop.permute.xlu0 %3467
    %3469 = vrot.lane.b32.xlu0 %v3402, 127
    %v3470 = vpop.permute.xlu0 %3469
    %3471 = vrot.lane.b32.xlu0 %v3403, 127
    %v3472 = vpop.permute.xlu0 %3471
    %3473 = vrot.lane.b32.xlu0 %v3404, 127
    %v3474 = vpop.permute.xlu0 %3473
    %3475 = vrot.lane.b32.xlu0 %v3405, 127
    %v3476 = vpop.permute.xlu0 %3475
    %3477 = vrot.lane.b32.xlu0 %v3406, 127
    %v3478 = vpop.permute.xlu0 %3477
    %3479 = vrot.lane.b32.xlu0 %v3407, 127
    %v3480 = vpop.permute.xlu0 %3479
    %3481 = vrot.lane.b32.xlu0 %v3408, 127
    %v3482 = vpop.permute.xlu0 %3481
    %3483 = vrot.lane.b32.xlu0 %v3409, 127
    %v3484 = vpop.permute.xlu0 %3483
    %3485 = vrot.lane.b32.xlu0 %v3410, 127
    %v3486 = vpop.permute.xlu0 %3485
    %3487 = vrot.lane.b32.xlu0 %v3411, 127
    %v3488 = vpop.permute.xlu0 %3487
    %3489 = vrot.lane.b32.xlu0 %v3412, 127
    %v3490 = vpop.permute.xlu0 %3489
    %3491 = vrot.lane.b32.xlu0 %v3413, 127
    %v3492 = vpop.permute.xlu0 %3491
    %3493 = vrot.lane.b32.xlu0 %v3414, 127
    %v3494 = vpop.permute.xlu0 %3493
    %v3495 = vsel %vm62, %v3464, 0.0
    %v3496 = vsel %vm62, %v3466, 0.0
    %v3497 = vsel %vm62, %v3468, 0.0
    %v3498 = vsel %vm62, %v3470, 0.0
    %v3499 = vsel %vm62, %v3472, 0.0
    %v3500 = vsel %vm62, %v3474, 0.0
    %v3501 = vsel %vm62, %v3476, 0.0
    %v3502 = vsel %vm62, %v3478, 0.0
    %v3503 = vsel %vm62, %v3480, 0.0
    %v3504 = vsel %vm62, %v3482, 0.0
    %v3505 = vsel %vm62, %v3484, 0.0
    %v3506 = vsel %vm62, %v3486, 0.0
    %v3507 = vsel %vm62, %v3488, 0.0
    %v3508 = vsel %vm62, %v3490, 0.0
    %v3509 = vsel %vm62, %v3492, 0.0
    %v3510 = vsel %vm62, %v3494, 0.0
    %3511 = vmatpush.msra.mxu0 %v3462
    %3512 = vmatpush.msra.mxu0 %v3461
    %3513 = vmatpush.msra.mxu0 %v3460
    %3514 = vmatpush.msra.mxu0 %v3459
    %3515 = vmatpush.msra.mxu0 %v3458
    %3516 = vmatpush.msra.mxu0 %v3457
    %3517 = vmatpush.msra.mxu0 %v3456
    %3518 = vmatpush.msra.mxu0 %v3455
    %3519 = vmatpush.msra.mxu0 %v3454
    %3520 = vmatpush.msra.mxu0 %v3453
    %3521 = vmatpush.msra.mxu0 %v3452
    %3522 = vmatpush.msra.mxu0 %v3451
    %3523 = vmatpush.msra.mxu0 %v3450
    %3524 = vmatpush.msra.mxu0 %v3449
    %3525 = vmatpush.msra.mxu0 %v3448
    %3526 = vmatpush.msra.mxu0 %v3447
    %3527 = vmatmul.f32.gmra.mxu0 %v111
    %v3528 = vpop.f32.mrf.mxu0
    %v3529 = vadd.f32 0.0, %v3528
    %3530 = vmatmul.f32.gmra.mxu0 %v114
    %v3531 = vpop.f32.mrf.mxu0
    %v3532 = vadd.f32 0.0, %v3531
    %3533 = vmatmul.f32.gmra.mxu0 %v117
    %v3534 = vpop.f32.mrf.mxu0
    %v3535 = vadd.f32 0.0, %v3534
    %3536 = vmatmul.f32.gmra.mxu0 %v120
    %v3537 = vpop.f32.mrf.mxu0
    %v3538 = vadd.f32 0.0, %v3537
    %3539 = vmatmul.f32.gmra.mxu0 %v123
    %v3540 = vpop.f32.mrf.mxu0
    %v3541 = vadd.f32 0.0, %v3540
    %3542 = vmatmul.f32.gmra.mxu0 %v126
    %v3543 = vpop.f32.mrf.mxu0
    %v3544 = vadd.f32 0.0, %v3543
    %3545 = vmatmul.f32.gmra.mxu0 %v129
    %v3546 = vpop.f32.mrf.mxu0
    %v3547 = vadd.f32 0.0, %v3546
    %3548 = vmatmul.f32.gmra.mxu0 %v132
    %v3549 = vpop.f32.mrf.mxu0
    %v3550 = vadd.f32 0.0, %v3549
    %3551 = vmatmul.f32.gmra.mxu0 %v135
    %v3552 = vpop.f32.mrf.mxu0
    %v3553 = vadd.f32 0.0, %v3552
    %3554 = vmatmul.f32.gmra.mxu0 %v138
    %v3555 = vpop.f32.mrf.mxu0
    %v3556 = vadd.f32 0.0, %v3555
    %3557 = vmatmul.f32.gmra.mxu0 %v141
    %v3558 = vpop.f32.mrf.mxu0
    %v3559 = vadd.f32 0.0, %v3558
    %3560 = vmatmul.f32.gmra.mxu0 %v144
    %v3561 = vpop.f32.mrf.mxu0
    %v3562 = vadd.f32 0.0, %v3561
    %3563 = vmatmul.f32.gmra.mxu0 %v147
    %v3564 = vpop.f32.mrf.mxu0
    %v3565 = vadd.f32 0.0, %v3564
    %3566 = vmatmul.f32.gmra.mxu0 %v150
    %v3567 = vpop.f32.mrf.mxu0
    %v3568 = vadd.f32 0.0, %v3567
    %3569 = vmatmul.f32.gmra.mxu0 %v153
    %v3570 = vpop.f32.mrf.mxu0
    %v3571 = vadd.f32 0.0, %v3570
    %3572 = vmatmul.f32.gmra.mxu0 %v156
    %v3573 = vpop.f32.mrf.mxu0
    %v3574 = vadd.f32 0.0, %v3573
    %3575 = vdwg.mxu0
    %3576 = vmatpush.msra.mxu0 %v3414
    %3577 = vmatpush.msra.mxu0 %v3413
    %3578 = vmatpush.msra.mxu0 %v3412
    %3579 = vmatpush.msra.mxu0 %v3411
    %3580 = vmatpush.msra.mxu0 %v3410
    %3581 = vmatpush.msra.mxu0 %v3409
    %3582 = vmatpush.msra.mxu0 %v3408
    %3583 = vmatpush.msra.mxu0 %v3407
    %3584 = vmatpush.msra.mxu0 %v3406
    %3585 = vmatpush.msra.mxu0 %v3405
    %3586 = vmatpush.msra.mxu0 %v3404
    %3587 = vmatpush.msra.mxu0 %v3403
    %3588 = vmatpush.msra.mxu0 %v3402
    %3589 = vmatpush.msra.mxu0 %v3401
    %3590 = vmatpush.msra.mxu0 %v3400
    %3591 = vmatpush.msra.mxu0 %v3399
    %3592 = vmatmul.f32.gmra.mxu0 %v112
    %v3593 = vpop.f32.mrf.mxu0
    %v3594 = vadd.f32 %v3529, %v3593
    %3595 = vmatmul.f32.gmra.mxu0 %v115
    %v3596 = vpop.f32.mrf.mxu0
    %v3597 = vadd.f32 %v3532, %v3596
    %3598 = vmatmul.f32.gmra.mxu0 %v118
    %v3599 = vpop.f32.mrf.mxu0
    %v3600 = vadd.f32 %v3535, %v3599
    %3601 = vmatmul.f32.gmra.mxu0 %v121
    %v3602 = vpop.f32.mrf.mxu0
    %v3603 = vadd.f32 %v3538, %v3602
    %3604 = vmatmul.f32.gmra.mxu0 %v124
    %v3605 = vpop.f32.mrf.mxu0
    %v3606 = vadd.f32 %v3541, %v3605
    %3607 = vmatmul.f32.gmra.mxu0 %v127
    %v3608 = vpop.f32.mrf.mxu0
    %v3609 = vadd.f32 %v3544, %v3608
    %3610 = vmatmul.f32.gmra.mxu0 %v130
    %v3611 = vpop.f32.mrf.mxu0
    %v3612 = vadd.f32 %v3547, %v3611
    %3613 = vmatmul.f32.gmra.mxu0 %v133
    %v3614 = vpop.f32.mrf.mxu0
    %v3615 = vadd.f32 %v3550, %v3614
    %3616 = vmatmul.f32.gmra.mxu0 %v136
    %v3617 = vpop.f32.mrf.mxu0
    %v3618 = vadd.f32 %v3553, %v3617
    %3619 = vmatmul.f32.gmra.mxu0 %v139
    %v3620 = vpop.f32.mrf.mxu0
    %v3621 = vadd.f32 %v3556, %v3620
    %3622 = vmatmul.f32.gmra.mxu0 %v142
    %v3623 = vpop.f32.mrf.mxu0
    %v3624 = vadd.f32 %v3559, %v3623
    %3625 = vmatmul.f32.gmra.mxu0 %v145
    %v3626 = vpop.f32.mrf.mxu0
    %v3627 = vadd.f32 %v3562, %v3626
    %3628 = vmatmul.f32.gmra.mxu0 %v148
    %v3629 = vpop.f32.mrf.mxu0
    %v3630 = vadd.f32 %v3565, %v3629
    %3631 = vmatmul.f32.gmra.mxu0 %v151
    %v3632 = vpop.f32.mrf.mxu0
    %v3633 = vadd.f32 %v3568, %v3632
    %3634 = vmatmul.f32.gmra.mxu0 %v154
    %v3635 = vpop.f32.mrf.mxu0
    %v3636 = vadd.f32 %v3571, %v3635
    %3637 = vmatmul.f32.gmra.mxu0 %v157
    %v3638 = vpop.f32.mrf.mxu0
    %v3639 = vadd.f32 %v3574, %v3638
    %3640 = vdwg.mxu0
    %3641 = vmatpush.msra.mxu0 %v3510
    %3642 = vmatpush.msra.mxu0 %v3509
    %3643 = vmatpush.msra.mxu0 %v3508
    %3644 = vmatpush.msra.mxu0 %v3507
    %3645 = vmatpush.msra.mxu0 %v3506
    %3646 = vmatpush.msra.mxu0 %v3505
    %3647 = vmatpush.msra.mxu0 %v3504
    %3648 = vmatpush.msra.mxu0 %v3503
    %3649 = vmatpush.msra.mxu0 %v3502
    %3650 = vmatpush.msra.mxu0 %v3501
    %3651 = vmatpush.msra.mxu0 %v3500
    %3652 = vmatpush.msra.mxu0 %v3499
    %3653 = vmatpush.msra.mxu0 %v3498
    %3654 = vmatpush.msra.mxu0 %v3497
    %3655 = vmatpush.msra.mxu0 %v3496
    %3656 = vmatpush.msra.mxu0 %v3495
    %3657 = vmatmul.f32.gmra.mxu0 %v113
    %v3658 = vpop.f32.mrf.mxu0
    %v3659 = vadd.f32 %v3594, %v3658
    %3660 = vmatmul.f32.gmra.mxu0 %v116
    %v3661 = vpop.f32.mrf.mxu0
    %v3662 = vadd.f32 %v3597, %v3661
    %3663 = vmatmul.f32.gmra.mxu0 %v119
    %v3664 = vpop.f32.mrf.mxu0
    %v3665 = vadd.f32 %v3600, %v3664
    %3666 = vmatmul.f32.gmra.mxu0 %v122
    %v3667 = vpop.f32.mrf.mxu0
    %v3668 = vadd.f32 %v3603, %v3667
    %3669 = vmatmul.f32.gmra.mxu0 %v125
    %v3670 = vpop.f32.mrf.mxu0
    %v3671 = vadd.f32 %v3606, %v3670
    %3672 = vmatmul.f32.gmra.mxu0 %v128
    %v3673 = vpop.f32.mrf.mxu0
    %v3674 = vadd.f32 %v3609, %v3673
    %3675 = vmatmul.f32.gmra.mxu0 %v131
    %v3676 = vpop.f32.mrf.mxu0
    %v3677 = vadd.f32 %v3612, %v3676
    %3678 = vmatmul.f32.gmra.mxu0 %v134
    %v3679 = vpop.f32.mrf.mxu0
    %v3680 = vadd.f32 %v3615, %v3679
    %3681 = vmatmul.f32.gmra.mxu0 %v137
    %v3682 = vpop.f32.mrf.mxu0
    %v3683 = vadd.f32 %v3618, %v3682
    %3684 = vmatmul.f32.gmra.mxu0 %v140
    %v3685 = vpop.f32.mrf.mxu0
    %v3686 = vadd.f32 %v3621, %v3685
    %3687 = vmatmul.f32.gmra.mxu0 %v143
    %v3688 = vpop.f32.mrf.mxu0
    %v3689 = vadd.f32 %v3624, %v3688
    %3690 = vmatmul.f32.gmra.mxu0 %v146
    %v3691 = vpop.f32.mrf.mxu0
    %v3692 = vadd.f32 %v3627, %v3691
    %3693 = vmatmul.f32.gmra.mxu0 %v149
    %v3694 = vpop.f32.mrf.mxu0
    %v3695 = vadd.f32 %v3630, %v3694
    %3696 = vmatmul.f32.gmra.mxu0 %v152
    %v3697 = vpop.f32.mrf.mxu0
    %v3698 = vadd.f32 %v3633, %v3697
    %3699 = vmatmul.f32.gmra.mxu0 %v155
    %v3700 = vpop.f32.mrf.mxu0
    %v3701 = vadd.f32 %v3636, %v3700
    %3702 = vmatmul.f32.gmra.mxu0 %v158
    %v3703 = vpop.f32.mrf.mxu0
    %v3704 = vadd.f32 %v3639, %v3703
    %3705 = vdwg.mxu0
    %3706 = vst [vmem:[%s1339] sm:$0xff] %v3659
    %3707 = vst [vmem:[%s1339 + $0x8] sm:$0xff] %v3662
    %3708 = vst [vmem:[%s1339 + $0x10] sm:$0xff] %v3665
    %3709 = vst [vmem:[%s1339 + $0x18] sm:$0xff] %v3668
    %3710 = vst [vmem:[%s1339 + $0x20] sm:$0xff] %v3671
    %3711 = vst [vmem:[%s1339 + $0x28] sm:$0xff] %v3674
    %3712 = vst [vmem:[%s1339 + $0x30] sm:$0xff] %v3677
    %3713 = vst [vmem:[%s1339 + $0x38] sm:$0xff] %v3680
    %3714 = vst [vmem:[%s1339 + $0x40] sm:$0xff] %v3683
    %3715 = vst [vmem:[%s1339 + $0x48] sm:$0xff] %v3686
    %3716 = vst [vmem:[%s1339 + $0x50] sm:$0xff] %v3689
    %3717 = vst [vmem:[%s1339 + $0x58] sm:$0xff] %v3692
    %3718 = vst [vmem:[%s1339 + $0x60] sm:$0xff] %v3695
    %3719 = vst [vmem:[%s1339 + $0x68] sm:$0xff] %v3698
    %3720 = vst [vmem:[%s1339 + $0x70] sm:$0xff] %v3701
    %3721 = vst [vmem:[%s1339 + $0x78] sm:$0xff] %v3704
    %3722 = vadd.xlane.f32.xlu0 %v3659
    %v3723 = vpop.xlane.xlu0 %3722
    %3724 = vadd.xlane.f32.xlu0 %v3662
    %v3725 = vpop.xlane.xlu0 %3724
    %3726 = vadd.xlane.f32.xlu0 %v3665
    %v3727 = vpop.xlane.xlu0 %3726
    %3728 = vadd.xlane.f32.xlu0 %v3668
    %v3729 = vpop.xlane.xlu0 %3728
    %3730 = vadd.xlane.f32.xlu0 %v3671
    %v3731 = vpop.xlane.xlu0 %3730
    %3732 = vadd.xlane.f32.xlu0 %v3674
    %v3733 = vpop.xlane.xlu0 %3732
    %3734 = vadd.xlane.f32.xlu0 %v3677
    %v3735 = vpop.xlane.xlu0 %3734
    %3736 = vadd.xlane.f32.xlu0 %v3680
    %v3737 = vpop.xlane.xlu0 %3736
    %3738 = vadd.xlane.f32.xlu0 %v3683
    %v3739 = vpop.xlane.xlu0 %3738
    %3740 = vadd.xlane.f32.xlu0 %v3686
    %v3741 = vpop.xlane.xlu0 %3740
    %3742 = vadd.xlane.f32.xlu0 %v3689
    %v3743 = vpop.xlane.xlu0 %3742
    %3744 = vadd.xlane.f32.xlu0 %v3692
    %v3745 = vpop.xlane.xlu0 %3744
    %3746 = vadd.xlane.f32.xlu0 %v3695
    %v3747 = vpop.xlane.xlu0 %3746
    %3748 = vadd.xlane.f32.xlu0 %v3698
    %v3749 = vpop.xlane.xlu0 %3748
    %3750 = vadd.xlane.f32.xlu0 %v3701
    %v3751 = vpop.xlane.xlu0 %3750
    %3752 = vadd.xlane.f32.xlu0 %v3704
    %v3753 = vpop.xlane.xlu0 %3752
    %v3754 = vadd.f32 %v3271, %v3723
    %v3755 = vadd.f32 %v3272, %v3725
    %v3756 = vadd.f32 %v3273, %v3727
    %v3757 = vadd.f32 %v3274, %v3729
    %v3758 = vadd.f32 %v3275, %v3731
    %v3759 = vadd.f32 %v3276, %v3733
    %v3760 = vadd.f32 %v3277, %v3735
    %v3761 = vadd.f32 %v3278, %v3737
    %v3762 = vadd.f32 %v3279, %v3739
    %v3763 = vadd.f32 %v3280, %v3741
    %v3764 = vadd.f32 %v3281, %v3743
    %v3765 = vadd.f32 %v3282, %v3745
    %v3766 = vadd.f32 %v3283, %v3747
    %v3767 = vadd.f32 %v3284, %v3749
    %v3768 = vadd.f32 %v3285, %v3751
    %v3769 = vadd.f32 %v3286, %v3753
    %v3770 = vmul.f32 %v3659, %v3659
    %v3771 = vmul.f32 %v3662, %v3662
    %v3772 = vmul.f32 %v3665, %v3665
    %v3773 = vmul.f32 %v3668, %v3668
    %v3774 = vmul.f32 %v3671, %v3671
    %v3775 = vmul.f32 %v3674, %v3674
    %v3776 = vmul.f32 %v3677, %v3677
    %v3777 = vmul.f32 %v3680, %v3680
    %v3778 = vmul.f32 %v3683, %v3683
    %v3779 = vmul.f32 %v3686, %v3686
    %v3780 = vmul.f32 %v3689, %v3689
    %v3781 = vmul.f32 %v3692, %v3692
    %v3782 = vmul.f32 %v3695, %v3695
    %v3783 = vmul.f32 %v3698, %v3698
    %v3784 = vmul.f32 %v3701, %v3701
    %v3785 = vmul.f32 %v3704, %v3704
    %3786 = vadd.xlane.f32.xlu0 %v3770
    %v3787 = vpop.xlane.xlu0 %3786
    %3788 = vadd.xlane.f32.xlu0 %v3771
    %v3789 = vpop.xlane.xlu0 %3788
    %3790 = vadd.xlane.f32.xlu0 %v3772
    %v3791 = vpop.xlane.xlu0 %3790
    %3792 = vadd.xlane.f32.xlu0 %v3773
    %v3793 = vpop.xlane.xlu0 %3792
    %3794 = vadd.xlane.f32.xlu0 %v3774
    %v3795 = vpop.xlane.xlu0 %3794
    %3796 = vadd.xlane.f32.xlu0 %v3775
    %v3797 = vpop.xlane.xlu0 %3796
    %3798 = vadd.xlane.f32.xlu0 %v3776
    %v3799 = vpop.xlane.xlu0 %3798
    %3800 = vadd.xlane.f32.xlu0 %v3777
    %v3801 = vpop.xlane.xlu0 %3800
    %3802 = vadd.xlane.f32.xlu0 %v3778
    %v3803 = vpop.xlane.xlu0 %3802
    %3804 = vadd.xlane.f32.xlu0 %v3779
    %v3805 = vpop.xlane.xlu0 %3804
    %3806 = vadd.xlane.f32.xlu0 %v3780
    %v3807 = vpop.xlane.xlu0 %3806
    %3808 = vadd.xlane.f32.xlu0 %v3781
    %v3809 = vpop.xlane.xlu0 %3808
    %3810 = vadd.xlane.f32.xlu0 %v3782
    %v3811 = vpop.xlane.xlu0 %3810
    %3812 = vadd.xlane.f32.xlu0 %v3783
    %v3813 = vpop.xlane.xlu0 %3812
    %3814 = vadd.xlane.f32.xlu0 %v3784
    %v3815 = vpop.xlane.xlu0 %3814
    %3816 = vadd.xlane.f32.xlu0 %v3785
    %v3817 = vpop.xlane.xlu0 %3816
    %v3818 = vadd.f32 %v3335, %v3787
    %v3819 = vadd.f32 %v3336, %v3789
    %v3820 = vadd.f32 %v3337, %v3791
    %v3821 = vadd.f32 %v3338, %v3793
    %v3822 = vadd.f32 %v3339, %v3795
    %v3823 = vadd.f32 %v3340, %v3797
    %v3824 = vadd.f32 %v3341, %v3799
    %v3825 = vadd.f32 %v3342, %v3801
    %v3826 = vadd.f32 %v3343, %v3803
    %v3827 = vadd.f32 %v3344, %v3805
    %v3828 = vadd.f32 %v3345, %v3807
    %v3829 = vadd.f32 %v3346, %v3809
    %v3830 = vadd.f32 %v3347, %v3811
    %v3831 = vadd.f32 %v3348, %v3813
    %v3832 = vadd.f32 %v3349, %v3815
    %v3833 = vadd.f32 %v3350, %v3817
    %v3834 = vld [vmem:[%s1776] sm:$0xff]
    %v3835 = vld [vmem:[%s1776 + $0x8] sm:$0xff]
    %v3836 = vld [vmem:[%s1776 + $0x10] sm:$0xff]
    %v3837 = vld [vmem:[%s1776 + $0x18] sm:$0xff]
    %v3838 = vld [vmem:[%s1776 + $0x20] sm:$0xff]
    %v3839 = vld [vmem:[%s1776 + $0x28] sm:$0xff]
    %v3840 = vld [vmem:[%s1776 + $0x30] sm:$0xff]
    %v3841 = vld [vmem:[%s1776 + $0x38] sm:$0xff]
    %v3842 = vld [vmem:[%s1776 + $0x40] sm:$0xff]
    %v3843 = vld [vmem:[%s1776 + $0x48] sm:$0xff]
    %v3844 = vld [vmem:[%s1776 + $0x50] sm:$0xff]
    %v3845 = vld [vmem:[%s1776 + $0x58] sm:$0xff]
    %v3846 = vld [vmem:[%s1776 + $0x60] sm:$0xff]
    %v3847 = vld [vmem:[%s1776 + $0x68] sm:$0xff]
    %v3848 = vld [vmem:[%s1776 + $0x70] sm:$0xff]
    %v3849 = vld [vmem:[%s1776 + $0x78] sm:$0xff]
    %v3850 = vmul.f32 %v3834, %v2244
    %v3851 = vmul.f32 %v3835, %v2249
    %v3852 = vmul.f32 %v3836, %v2254
    %v3853 = vmul.f32 %v3837, %v2259
    %v3854 = vmul.f32 %v3838, %v2264
    %v3855 = vmul.f32 %v3839, %v2269
    %v3856 = vmul.f32 %v3840, %v2274
    %v3857 = vmul.f32 %v3841, %v2279
    %v3858 = vmul.f32 %v3842, %v2284
    %v3859 = vmul.f32 %v3843, %v2289
    %v3860 = vmul.f32 %v3844, %v2294
    %v3861 = vmul.f32 %v3845, %v2299
    %v3862 = vmul.f32 %v3846, %v2304
    %v3863 = vmul.f32 %v3847, %v2309
    %v3864 = vmul.f32 %v3848, %v2314
    %v3865 = vmul.f32 %v3849, %v2319
    %v3866 = vadd.f32 %v3850, %v2340
    %v3867 = vadd.f32 %v3851, %v2345
    %v3868 = vadd.f32 %v3852, %v2350
    %v3869 = vadd.f32 %v3853, %v2355
    %v3870 = vadd.f32 %v3854, %v2360
    %v3871 = vadd.f32 %v3855, %v2365
    %v3872 = vadd.f32 %v3856, %v2370
    %v3873 = vadd.f32 %v3857, %v2375
    %v3874 = vadd.f32 %v3858, %v2380
    %v3875 = vadd.f32 %v3859, %v2385
    %v3876 = vadd.f32 %v3860, %v2390
    %v3877 = vadd.f32 %v3861, %v2395
    %v3878 = vadd.f32 %v3862, %v2400
    %v3879 = vadd.f32 %v3863, %v2405
    %v3880 = vadd.f32 %v3864, %v2410
    %v3881 = vadd.f32 %v3865, %v2415
    %v3882 = vmax.f32 %v3866, 0.0
    %v3883 = vmax.f32 %v3867, 0.0
    %v3884 = vmax.f32 %v3868, 0.0
    %v3885 = vmax.f32 %v3869, 0.0
    %v3886 = vmax.f32 %v3870, 0.0
    %v3887 = vmax.f32 %v3871, 0.0
    %v3888 = vmax.f32 %v3872, 0.0
    %v3889 = vmax.f32 %v3873, 0.0
    %v3890 = vmax.f32 %v3874, 0.0
    %v3891 = vmax.f32 %v3875, 0.0
    %v3892 = vmax.f32 %v3876, 0.0
    %v3893 = vmax.f32 %v3877, 0.0
    %v3894 = vmax.f32 %v3878, 0.0
    %v3895 = vmax.f32 %v3879, 0.0
    %v3896 = vmax.f32 %v3880, 0.0
    %v3897 = vmax.f32 %v3881, 0.0
    %3898 = vrot.lane.b32.xlu0 %v3882, 1
    %v3899 = vpop.permute.xlu0 %3898
    %3900 = vrot.lane.b32.xlu0 %v3883, 1
    %v3901 = vpop.permute.xlu0 %3900
    %3902 = vrot.lane.b32.xlu0 %v3884, 1
    %v3903 = vpop.permute.xlu0 %3902
    %3904 = vrot.lane.b32.xlu0 %v3885, 1
    %v3905 = vpop.permute.xlu0 %3904
    %3906 = vrot.lane.b32.xlu0 %v3886, 1
    %v3907 = vpop.permute.xlu0 %3906
    %3908 = vrot.lane.b32.xlu0 %v3887, 1
    %v3909 = vpop.permute.xlu0 %3908
    %3910 = vrot.lane.b32.xlu0 %v3888, 1
    %v3911 = vpop.permute.xlu0 %3910
    %3912 = vrot.lane.b32.xlu0 %v3889, 1
    %v3913 = vpop.permute.xlu0 %3912
    %3914 = vrot.lane.b32.xlu0 %v3890, 1
    %v3915 = vpop.permute.xlu0 %3914
    %3916 = vrot.lane.b32.xlu0 %v3891, 1
    %v3917 = vpop.permute.xlu0 %3916
    %3918 = vrot.lane.b32.xlu0 %v3892, 1
    %v3919 = vpop.permute.xlu0 %3918
    %3920 = vrot.lane.b32.xlu0 %v3893, 1
    %v3921 = vpop.permute.xlu0 %3920
    %3922 = vrot.lane.b32.xlu0 %v3894, 1
    %v3923 = vpop.permute.xlu0 %3922
    %3924 = vrot.lane.b32.xlu0 %v3895, 1
    %v3925 = vpop.permute.xlu0 %3924
    %3926 = vrot.lane.b32.xlu0 %v3896, 1
    %v3927 = vpop.permute.xlu0 %3926
    %3928 = vrot.lane.b32.xlu0 %v3897, 1
    %v3929 = vpop.permute.xlu0 %3928
    %v3930 = vsel %vm61, %v3899, 0.0
    %v3931 = vsel %vm61, %v3901, 0.0
    %v3932 = vsel %vm61, %v3903, 0.0
    %v3933 = vsel %vm61, %v3905, 0.0
    %v3934 = vsel %vm61, %v3907, 0.0
    %v3935 = vsel %vm61, %v3909, 0.0
    %v3936 = vsel %vm61, %v3911, 0.0
    %v3937 = vsel %vm61, %v3913, 0.0
    %v3938 = vsel %vm61, %v3915, 0.0
    %v3939 = vsel %vm61, %v3917, 0.0
    %v3940 = vsel %vm61, %v3919, 0.0
    %v3941 = vsel %vm61, %v3921, 0.0
    %v3942 = vsel %vm61, %v3923, 0.0
    %v3943 = vsel %vm61, %v3925, 0.0
    %v3944 = vsel %vm61, %v3927, 0.0
    %v3945 = vsel %vm61, %v3929, 0.0
    %3946 = vrot.lane.b32.xlu0 %v3882, 127
    %v3947 = vpop.permute.xlu0 %3946
    %3948 = vrot.lane.b32.xlu0 %v3883, 127
    %v3949 = vpop.permute.xlu0 %3948
    %3950 = vrot.lane.b32.xlu0 %v3884, 127
    %v3951 = vpop.permute.xlu0 %3950
    %3952 = vrot.lane.b32.xlu0 %v3885, 127
    %v3953 = vpop.permute.xlu0 %3952
    %3954 = vrot.lane.b32.xlu0 %v3886, 127
    %v3955 = vpop.permute.xlu0 %3954
    %3956 = vrot.lane.b32.xlu0 %v3887, 127
    %v3957 = vpop.permute.xlu0 %3956
    %3958 = vrot.lane.b32.xlu0 %v3888, 127
    %v3959 = vpop.permute.xlu0 %3958
    %3960 = vrot.lane.b32.xlu0 %v3889, 127
    %v3961 = vpop.permute.xlu0 %3960
    %3962 = vrot.lane.b32.xlu0 %v3890, 127
    %v3963 = vpop.permute.xlu0 %3962
    %3964 = vrot.lane.b32.xlu0 %v3891, 127
    %v3965 = vpop.permute.xlu0 %3964
    %3966 = vrot.lane.b32.xlu0 %v3892, 127
    %v3967 = vpop.permute.xlu0 %3966
    %3968 = vrot.lane.b32.xlu0 %v3893, 127
    %v3969 = vpop.permute.xlu0 %3968
    %3970 = vrot.lane.b32.xlu0 %v3894, 127
    %v3971 = vpop.permute.xlu0 %3970
    %3972 = vrot.lane.b32.xlu0 %v3895, 127
    %v3973 = vpop.permute.xlu0 %3972
    %3974 = vrot.lane.b32.xlu0 %v3896, 127
    %v3975 = vpop.permute.xlu0 %3974
    %3976 = vrot.lane.b32.xlu0 %v3897, 127
    %v3977 = vpop.permute.xlu0 %3976
    %v3978 = vsel %vm62, %v3947, 0.0
    %v3979 = vsel %vm62, %v3949, 0.0
    %v3980 = vsel %vm62, %v3951, 0.0
    %v3981 = vsel %vm62, %v3953, 0.0
    %v3982 = vsel %vm62, %v3955, 0.0
    %v3983 = vsel %vm62, %v3957, 0.0
    %v3984 = vsel %vm62, %v3959, 0.0
    %v3985 = vsel %vm62, %v3961, 0.0
    %v3986 = vsel %vm62, %v3963, 0.0
    %v3987 = vsel %vm62, %v3965, 0.0
    %v3988 = vsel %vm62, %v3967, 0.0
    %v3989 = vsel %vm62, %v3969, 0.0
    %v3990 = vsel %vm62, %v3971, 0.0
    %v3991 = vsel %vm62, %v3973, 0.0
    %v3992 = vsel %vm62, %v3975, 0.0
    %v3993 = vsel %vm62, %v3977, 0.0
    %3994 = vmatpush.msra.mxu0 %v3945
    %3995 = vmatpush.msra.mxu0 %v3944
    %3996 = vmatpush.msra.mxu0 %v3943
    %3997 = vmatpush.msra.mxu0 %v3942
    %3998 = vmatpush.msra.mxu0 %v3941
    %3999 = vmatpush.msra.mxu0 %v3940
    %4000 = vmatpush.msra.mxu0 %v3939
    %4001 = vmatpush.msra.mxu0 %v3938
    %4002 = vmatpush.msra.mxu0 %v3937
    %4003 = vmatpush.msra.mxu0 %v3936
    %4004 = vmatpush.msra.mxu0 %v3935
    %4005 = vmatpush.msra.mxu0 %v3934
    %4006 = vmatpush.msra.mxu0 %v3933
    %4007 = vmatpush.msra.mxu0 %v3932
    %4008 = vmatpush.msra.mxu0 %v3931
    %4009 = vmatpush.msra.mxu0 %v3930
    %4010 = vmatmul.f32.gmra.mxu0 %v111
    %v4011 = vpop.f32.mrf.mxu0
    %v4012 = vadd.f32 0.0, %v4011
    %4013 = vmatmul.f32.gmra.mxu0 %v114
    %v4014 = vpop.f32.mrf.mxu0
    %v4015 = vadd.f32 0.0, %v4014
    %4016 = vmatmul.f32.gmra.mxu0 %v117
    %v4017 = vpop.f32.mrf.mxu0
    %v4018 = vadd.f32 0.0, %v4017
    %4019 = vmatmul.f32.gmra.mxu0 %v120
    %v4020 = vpop.f32.mrf.mxu0
    %v4021 = vadd.f32 0.0, %v4020
    %4022 = vmatmul.f32.gmra.mxu0 %v123
    %v4023 = vpop.f32.mrf.mxu0
    %v4024 = vadd.f32 0.0, %v4023
    %4025 = vmatmul.f32.gmra.mxu0 %v126
    %v4026 = vpop.f32.mrf.mxu0
    %v4027 = vadd.f32 0.0, %v4026
    %4028 = vmatmul.f32.gmra.mxu0 %v129
    %v4029 = vpop.f32.mrf.mxu0
    %v4030 = vadd.f32 0.0, %v4029
    %4031 = vmatmul.f32.gmra.mxu0 %v132
    %v4032 = vpop.f32.mrf.mxu0
    %v4033 = vadd.f32 0.0, %v4032
    %4034 = vmatmul.f32.gmra.mxu0 %v135
    %v4035 = vpop.f32.mrf.mxu0
    %v4036 = vadd.f32 0.0, %v4035
    %4037 = vmatmul.f32.gmra.mxu0 %v138
    %v4038 = vpop.f32.mrf.mxu0
    %v4039 = vadd.f32 0.0, %v4038
    %4040 = vmatmul.f32.gmra.mxu0 %v141
    %v4041 = vpop.f32.mrf.mxu0
    %v4042 = vadd.f32 0.0, %v4041
    %4043 = vmatmul.f32.gmra.mxu0 %v144
    %v4044 = vpop.f32.mrf.mxu0
    %v4045 = vadd.f32 0.0, %v4044
    %4046 = vmatmul.f32.gmra.mxu0 %v147
    %v4047 = vpop.f32.mrf.mxu0
    %v4048 = vadd.f32 0.0, %v4047
    %4049 = vmatmul.f32.gmra.mxu0 %v150
    %v4050 = vpop.f32.mrf.mxu0
    %v4051 = vadd.f32 0.0, %v4050
    %4052 = vmatmul.f32.gmra.mxu0 %v153
    %v4053 = vpop.f32.mrf.mxu0
    %v4054 = vadd.f32 0.0, %v4053
    %4055 = vmatmul.f32.gmra.mxu0 %v156
    %v4056 = vpop.f32.mrf.mxu0
    %v4057 = vadd.f32 0.0, %v4056
    %4058 = vdwg.mxu0
    %4059 = vmatpush.msra.mxu0 %v3897
    %4060 = vmatpush.msra.mxu0 %v3896
    %4061 = vmatpush.msra.mxu0 %v3895
    %4062 = vmatpush.msra.mxu0 %v3894
    %4063 = vmatpush.msra.mxu0 %v3893
    %4064 = vmatpush.msra.mxu0 %v3892
    %4065 = vmatpush.msra.mxu0 %v3891
    %4066 = vmatpush.msra.mxu0 %v3890
    %4067 = vmatpush.msra.mxu0 %v3889
    %4068 = vmatpush.msra.mxu0 %v3888
    %4069 = vmatpush.msra.mxu0 %v3887
    %4070 = vmatpush.msra.mxu0 %v3886
    %4071 = vmatpush.msra.mxu0 %v3885
    %4072 = vmatpush.msra.mxu0 %v3884
    %4073 = vmatpush.msra.mxu0 %v3883
    %4074 = vmatpush.msra.mxu0 %v3882
    %4075 = vmatmul.f32.gmra.mxu0 %v112
    %v4076 = vpop.f32.mrf.mxu0
    %v4077 = vadd.f32 %v4012, %v4076
    %4078 = vmatmul.f32.gmra.mxu0 %v115
    %v4079 = vpop.f32.mrf.mxu0
    %v4080 = vadd.f32 %v4015, %v4079
    %4081 = vmatmul.f32.gmra.mxu0 %v118
    %v4082 = vpop.f32.mrf.mxu0
    %v4083 = vadd.f32 %v4018, %v4082
    %4084 = vmatmul.f32.gmra.mxu0 %v121
    %v4085 = vpop.f32.mrf.mxu0
    %v4086 = vadd.f32 %v4021, %v4085
    %4087 = vmatmul.f32.gmra.mxu0 %v124
    %v4088 = vpop.f32.mrf.mxu0
    %v4089 = vadd.f32 %v4024, %v4088
    %4090 = vmatmul.f32.gmra.mxu0 %v127
    %v4091 = vpop.f32.mrf.mxu0
    %v4092 = vadd.f32 %v4027, %v4091
    %4093 = vmatmul.f32.gmra.mxu0 %v130
    %v4094 = vpop.f32.mrf.mxu0
    %v4095 = vadd.f32 %v4030, %v4094
    %4096 = vmatmul.f32.gmra.mxu0 %v133
    %v4097 = vpop.f32.mrf.mxu0
    %v4098 = vadd.f32 %v4033, %v4097
    %4099 = vmatmul.f32.gmra.mxu0 %v136
    %v4100 = vpop.f32.mrf.mxu0
    %v4101 = vadd.f32 %v4036, %v4100
    %4102 = vmatmul.f32.gmra.mxu0 %v139
    %v4103 = vpop.f32.mrf.mxu0
    %v4104 = vadd.f32 %v4039, %v4103
    %4105 = vmatmul.f32.gmra.mxu0 %v142
    %v4106 = vpop.f32.mrf.mxu0
    %v4107 = vadd.f32 %v4042, %v4106
    %4108 = vmatmul.f32.gmra.mxu0 %v145
    %v4109 = vpop.f32.mrf.mxu0
    %v4110 = vadd.f32 %v4045, %v4109
    %4111 = vmatmul.f32.gmra.mxu0 %v148
    %v4112 = vpop.f32.mrf.mxu0
    %v4113 = vadd.f32 %v4048, %v4112
    %4114 = vmatmul.f32.gmra.mxu0 %v151
    %v4115 = vpop.f32.mrf.mxu0
    %v4116 = vadd.f32 %v4051, %v4115
    %4117 = vmatmul.f32.gmra.mxu0 %v154
    %v4118 = vpop.f32.mrf.mxu0
    %v4119 = vadd.f32 %v4054, %v4118
    %4120 = vmatmul.f32.gmra.mxu0 %v157
    %v4121 = vpop.f32.mrf.mxu0
    %v4122 = vadd.f32 %v4057, %v4121
    %4123 = vdwg.mxu0
    %4124 = vmatpush.msra.mxu0 %v3993
    %4125 = vmatpush.msra.mxu0 %v3992
    %4126 = vmatpush.msra.mxu0 %v3991
    %4127 = vmatpush.msra.mxu0 %v3990
    %4128 = vmatpush.msra.mxu0 %v3989
    %4129 = vmatpush.msra.mxu0 %v3988
    %4130 = vmatpush.msra.mxu0 %v3987
    %4131 = vmatpush.msra.mxu0 %v3986
    %4132 = vmatpush.msra.mxu0 %v3985
    %4133 = vmatpush.msra.mxu0 %v3984
    %4134 = vmatpush.msra.mxu0 %v3983
    %4135 = vmatpush.msra.mxu0 %v3982
    %4136 = vmatpush.msra.mxu0 %v3981
    %4137 = vmatpush.msra.mxu0 %v3980
    %4138 = vmatpush.msra.mxu0 %v3979
    %4139 = vmatpush.msra.mxu0 %v3978
    %4140 = vmatmul.f32.gmra.mxu0 %v113
    %v4141 = vpop.f32.mrf.mxu0
    %v4142 = vadd.f32 %v4077, %v4141
    %4143 = vmatmul.f32.gmra.mxu0 %v116
    %v4144 = vpop.f32.mrf.mxu0
    %v4145 = vadd.f32 %v4080, %v4144
    %4146 = vmatmul.f32.gmra.mxu0 %v119
    %v4147 = vpop.f32.mrf.mxu0
    %v4148 = vadd.f32 %v4083, %v4147
    %4149 = vmatmul.f32.gmra.mxu0 %v122
    %v4150 = vpop.f32.mrf.mxu0
    %v4151 = vadd.f32 %v4086, %v4150
    %4152 = vmatmul.f32.gmra.mxu0 %v125
    %v4153 = vpop.f32.mrf.mxu0
    %v4154 = vadd.f32 %v4089, %v4153
    %4155 = vmatmul.f32.gmra.mxu0 %v128
    %v4156 = vpop.f32.mrf.mxu0
    %v4157 = vadd.f32 %v4092, %v4156
    %4158 = vmatmul.f32.gmra.mxu0 %v131
    %v4159 = vpop.f32.mrf.mxu0
    %v4160 = vadd.f32 %v4095, %v4159
    %4161 = vmatmul.f32.gmra.mxu0 %v134
    %v4162 = vpop.f32.mrf.mxu0
    %v4163 = vadd.f32 %v4098, %v4162
    %4164 = vmatmul.f32.gmra.mxu0 %v137
    %v4165 = vpop.f32.mrf.mxu0
    %v4166 = vadd.f32 %v4101, %v4165
    %4167 = vmatmul.f32.gmra.mxu0 %v140
    %v4168 = vpop.f32.mrf.mxu0
    %v4169 = vadd.f32 %v4104, %v4168
    %4170 = vmatmul.f32.gmra.mxu0 %v143
    %v4171 = vpop.f32.mrf.mxu0
    %v4172 = vadd.f32 %v4107, %v4171
    %4173 = vmatmul.f32.gmra.mxu0 %v146
    %v4174 = vpop.f32.mrf.mxu0
    %v4175 = vadd.f32 %v4110, %v4174
    %4176 = vmatmul.f32.gmra.mxu0 %v149
    %v4177 = vpop.f32.mrf.mxu0
    %v4178 = vadd.f32 %v4113, %v4177
    %4179 = vmatmul.f32.gmra.mxu0 %v152
    %v4180 = vpop.f32.mrf.mxu0
    %v4181 = vadd.f32 %v4116, %v4180
    %4182 = vmatmul.f32.gmra.mxu0 %v155
    %v4183 = vpop.f32.mrf.mxu0
    %v4184 = vadd.f32 %v4119, %v4183
    %4185 = vmatmul.f32.gmra.mxu0 %v158
    %v4186 = vpop.f32.mrf.mxu0
    %v4187 = vadd.f32 %v4122, %v4186
    %4188 = vdwg.mxu0
    %4189 = vst [vmem:[%s1776] sm:$0xff] %v4142
    %4190 = vst [vmem:[%s1776 + $0x8] sm:$0xff] %v4145
    %4191 = vst [vmem:[%s1776 + $0x10] sm:$0xff] %v4148
    %4192 = vst [vmem:[%s1776 + $0x18] sm:$0xff] %v4151
    %4193 = vst [vmem:[%s1776 + $0x20] sm:$0xff] %v4154
    %4194 = vst [vmem:[%s1776 + $0x28] sm:$0xff] %v4157
    %4195 = vst [vmem:[%s1776 + $0x30] sm:$0xff] %v4160
    %4196 = vst [vmem:[%s1776 + $0x38] sm:$0xff] %v4163
    %4197 = vst [vmem:[%s1776 + $0x40] sm:$0xff] %v4166
    %4198 = vst [vmem:[%s1776 + $0x48] sm:$0xff] %v4169
    %4199 = vst [vmem:[%s1776 + $0x50] sm:$0xff] %v4172
    %4200 = vst [vmem:[%s1776 + $0x58] sm:$0xff] %v4175
    %4201 = vst [vmem:[%s1776 + $0x60] sm:$0xff] %v4178
    %4202 = vst [vmem:[%s1776 + $0x68] sm:$0xff] %v4181
    %4203 = vst [vmem:[%s1776 + $0x70] sm:$0xff] %v4184
    %4204 = vst [vmem:[%s1776 + $0x78] sm:$0xff] %v4187
    %4205 = vadd.xlane.f32.xlu0 %v4142
    %v4206 = vpop.xlane.xlu0 %4205
    %4207 = vadd.xlane.f32.xlu0 %v4145
    %v4208 = vpop.xlane.xlu0 %4207
    %4209 = vadd.xlane.f32.xlu0 %v4148
    %v4210 = vpop.xlane.xlu0 %4209
    %4211 = vadd.xlane.f32.xlu0 %v4151
    %v4212 = vpop.xlane.xlu0 %4211
    %4213 = vadd.xlane.f32.xlu0 %v4154
    %v4214 = vpop.xlane.xlu0 %4213
    %4215 = vadd.xlane.f32.xlu0 %v4157
    %v4216 = vpop.xlane.xlu0 %4215
    %4217 = vadd.xlane.f32.xlu0 %v4160
    %v4218 = vpop.xlane.xlu0 %4217
    %4219 = vadd.xlane.f32.xlu0 %v4163
    %v4220 = vpop.xlane.xlu0 %4219
    %4221 = vadd.xlane.f32.xlu0 %v4166
    %v4222 = vpop.xlane.xlu0 %4221
    %4223 = vadd.xlane.f32.xlu0 %v4169
    %v4224 = vpop.xlane.xlu0 %4223
    %4225 = vadd.xlane.f32.xlu0 %v4172
    %v4226 = vpop.xlane.xlu0 %4225
    %4227 = vadd.xlane.f32.xlu0 %v4175
    %v4228 = vpop.xlane.xlu0 %4227
    %4229 = vadd.xlane.f32.xlu0 %v4178
    %v4230 = vpop.xlane.xlu0 %4229
    %4231 = vadd.xlane.f32.xlu0 %v4181
    %v4232 = vpop.xlane.xlu0 %4231
    %4233 = vadd.xlane.f32.xlu0 %v4184
    %v4234 = vpop.xlane.xlu0 %4233
    %4235 = vadd.xlane.f32.xlu0 %v4187
    %v4236 = vpop.xlane.xlu0 %4235
    %v4237 = vadd.f32 %v3754, %v4206
    %v4238 = vadd.f32 %v3755, %v4208
    %v4239 = vadd.f32 %v3756, %v4210
    %v4240 = vadd.f32 %v3757, %v4212
    %v4241 = vadd.f32 %v3758, %v4214
    %v4242 = vadd.f32 %v3759, %v4216
    %v4243 = vadd.f32 %v3760, %v4218
    %v4244 = vadd.f32 %v3761, %v4220
    %v4245 = vadd.f32 %v3762, %v4222
    %v4246 = vadd.f32 %v3763, %v4224
    %v4247 = vadd.f32 %v3764, %v4226
    %v4248 = vadd.f32 %v3765, %v4228
    %v4249 = vadd.f32 %v3766, %v4230
    %v4250 = vadd.f32 %v3767, %v4232
    %v4251 = vadd.f32 %v3768, %v4234
    %v4252 = vadd.f32 %v3769, %v4236
    %v4253 = vmul.f32 %v4142, %v4142
    %v4254 = vmul.f32 %v4145, %v4145
    %v4255 = vmul.f32 %v4148, %v4148
    %v4256 = vmul.f32 %v4151, %v4151
    %v4257 = vmul.f32 %v4154, %v4154
    %v4258 = vmul.f32 %v4157, %v4157
    %v4259 = vmul.f32 %v4160, %v4160
    %v4260 = vmul.f32 %v4163, %v4163
    %v4261 = vmul.f32 %v4166, %v4166
    %v4262 = vmul.f32 %v4169, %v4169
    %v4263 = vmul.f32 %v4172, %v4172
    %v4264 = vmul.f32 %v4175, %v4175
    %v4265 = vmul.f32 %v4178, %v4178
    %v4266 = vmul.f32 %v4181, %v4181
    %v4267 = vmul.f32 %v4184, %v4184
    %v4268 = vmul.f32 %v4187, %v4187
    %4269 = vadd.xlane.f32.xlu0 %v4253
    %v4270 = vpop.xlane.xlu0 %4269
    %4271 = vadd.xlane.f32.xlu0 %v4254
    %v4272 = vpop.xlane.xlu0 %4271
    %4273 = vadd.xlane.f32.xlu0 %v4255
    %v4274 = vpop.xlane.xlu0 %4273
    %4275 = vadd.xlane.f32.xlu0 %v4256
    %v4276 = vpop.xlane.xlu0 %4275
    %4277 = vadd.xlane.f32.xlu0 %v4257
    %v4278 = vpop.xlane.xlu0 %4277
    %4279 = vadd.xlane.f32.xlu0 %v4258
    %v4280 = vpop.xlane.xlu0 %4279
    %4281 = vadd.xlane.f32.xlu0 %v4259
    %v4282 = vpop.xlane.xlu0 %4281
    %4283 = vadd.xlane.f32.xlu0 %v4260
    %v4284 = vpop.xlane.xlu0 %4283
    %4285 = vadd.xlane.f32.xlu0 %v4261
    %v4286 = vpop.xlane.xlu0 %4285
    %4287 = vadd.xlane.f32.xlu0 %v4262
    %v4288 = vpop.xlane.xlu0 %4287
    %4289 = vadd.xlane.f32.xlu0 %v4263
    %v4290 = vpop.xlane.xlu0 %4289
    %4291 = vadd.xlane.f32.xlu0 %v4264
    %v4292 = vpop.xlane.xlu0 %4291
    %4293 = vadd.xlane.f32.xlu0 %v4265
    %v4294 = vpop.xlane.xlu0 %4293
    %4295 = vadd.xlane.f32.xlu0 %v4266
    %v4296 = vpop.xlane.xlu0 %4295
    %4297 = vadd.xlane.f32.xlu0 %v4267
    %v4298 = vpop.xlane.xlu0 %4297
    %4299 = vadd.xlane.f32.xlu0 %v4268
    %v4300 = vpop.xlane.xlu0 %4299
    %v4301 = vadd.f32 %v3818, %v4270
    %v4302 = vadd.f32 %v3819, %v4272
    %v4303 = vadd.f32 %v3820, %v4274
    %v4304 = vadd.f32 %v3821, %v4276
    %v4305 = vadd.f32 %v3822, %v4278
    %v4306 = vadd.f32 %v3823, %v4280
    %v4307 = vadd.f32 %v3824, %v4282
    %v4308 = vadd.f32 %v3825, %v4284
    %v4309 = vadd.f32 %v3826, %v4286
    %v4310 = vadd.f32 %v3827, %v4288
    %v4311 = vadd.f32 %v3828, %v4290
    %v4312 = vadd.f32 %v3829, %v4292
    %v4313 = vadd.f32 %v3830, %v4294
    %v4314 = vadd.f32 %v3831, %v4296
    %v4315 = vadd.f32 %v3832, %v4298
    %v4316 = vadd.f32 %v3833, %v4300
    %v4317 = vmul.f32 %v4237, 0.001953125
    %v4318 = vmul.f32 %v4238, 0.001953125
    %v4319 = vmul.f32 %v4239, 0.001953125
    %v4320 = vmul.f32 %v4240, 0.001953125
    %v4321 = vmul.f32 %v4241, 0.001953125
    %v4322 = vmul.f32 %v4242, 0.001953125
    %v4323 = vmul.f32 %v4243, 0.001953125
    %v4324 = vmul.f32 %v4244, 0.001953125
    %v4325 = vmul.f32 %v4245, 0.001953125
    %v4326 = vmul.f32 %v4246, 0.001953125
    %v4327 = vmul.f32 %v4247, 0.001953125
    %v4328 = vmul.f32 %v4248, 0.001953125
    %v4329 = vmul.f32 %v4249, 0.001953125
    %v4330 = vmul.f32 %v4250, 0.001953125
    %v4331 = vmul.f32 %v4251, 0.001953125
    %v4332 = vmul.f32 %v4252, 0.001953125
    %v4333 = vmul.f32 %v4301, 0.001953125
    %v4334 = vmul.f32 %v4302, 0.001953125
    %v4335 = vmul.f32 %v4303, 0.001953125
    %v4336 = vmul.f32 %v4304, 0.001953125
    %v4337 = vmul.f32 %v4305, 0.001953125
    %v4338 = vmul.f32 %v4306, 0.001953125
    %v4339 = vmul.f32 %v4307, 0.001953125
    %v4340 = vmul.f32 %v4308, 0.001953125
    %v4341 = vmul.f32 %v4309, 0.001953125
    %v4342 = vmul.f32 %v4310, 0.001953125
    %v4343 = vmul.f32 %v4311, 0.001953125
    %v4344 = vmul.f32 %v4312, 0.001953125
    %v4345 = vmul.f32 %v4313, 0.001953125
    %v4346 = vmul.f32 %v4314, 0.001953125
    %v4347 = vmul.f32 %v4315, 0.001953125
    %v4348 = vmul.f32 %v4316, 0.001953125
    %v4349 = vmul.f32 %v4317, %v4317
    %v4350 = vmul.f32 %v4318, %v4318
    %v4351 = vmul.f32 %v4319, %v4319
    %v4352 = vmul.f32 %v4320, %v4320
    %v4353 = vmul.f32 %v4321, %v4321
    %v4354 = vmul.f32 %v4322, %v4322
    %v4355 = vmul.f32 %v4323, %v4323
    %v4356 = vmul.f32 %v4324, %v4324
    %v4357 = vmul.f32 %v4325, %v4325
    %v4358 = vmul.f32 %v4326, %v4326
    %v4359 = vmul.f32 %v4327, %v4327
    %v4360 = vmul.f32 %v4328, %v4328
    %v4361 = vmul.f32 %v4329, %v4329
    %v4362 = vmul.f32 %v4330, %v4330
    %v4363 = vmul.f32 %v4331, %v4331
    %v4364 = vmul.f32 %v4332, %v4332
    %v4365 = vsub.f32 %v4333, %v4349
    %v4366 = vsub.f32 %v4334, %v4350
    %v4367 = vsub.f32 %v4335, %v4351
    %v4368 = vsub.f32 %v4336, %v4352
    %v4369 = vsub.f32 %v4337, %v4353
    %v4370 = vsub.f32 %v4338, %v4354
    %v4371 = vsub.f32 %v4339, %v4355
    %v4372 = vsub.f32 %v4340, %v4356
    %v4373 = vsub.f32 %v4341, %v4357
    %v4374 = vsub.f32 %v4342, %v4358
    %v4375 = vsub.f32 %v4343, %v4359
    %v4376 = vsub.f32 %v4344, %v4360
    %v4377 = vsub.f32 %v4345, %v4361
    %v4378 = vsub.f32 %v4346, %v4362
    %v4379 = vsub.f32 %v4347, %v4363
    %v4380 = vsub.f32 %v4348, %v4364
    %v4381 = vld [vmem:[%s5] sm:$0xff]
    %v4382 = vld [vmem:[%s5 + $0x8] sm:$0xff]
    %v4383 = vld [vmem:[%s5 + $0x10] sm:$0xff]
    %v4384 = vld [vmem:[%s5 + $0x18] sm:$0xff]
    %v4385 = vld [vmem:[%s5 + $0x20] sm:$0xff]
    %v4386 = vld [vmem:[%s5 + $0x28] sm:$0xff]
    %v4387 = vld [vmem:[%s5 + $0x30] sm:$0xff]
    %v4388 = vld [vmem:[%s5 + $0x38] sm:$0xff]
    %v4389 = vld [vmem:[%s5 + $0x40] sm:$0xff]
    %v4390 = vld [vmem:[%s5 + $0x48] sm:$0xff]
    %v4391 = vld [vmem:[%s5 + $0x50] sm:$0xff]
    %v4392 = vld [vmem:[%s5 + $0x58] sm:$0xff]
    %v4393 = vld [vmem:[%s5 + $0x60] sm:$0xff]
    %v4394 = vld [vmem:[%s5 + $0x68] sm:$0xff]
    %v4395 = vld [vmem:[%s5 + $0x70] sm:$0xff]
    %v4396 = vld [vmem:[%s5 + $0x78] sm:$0xff]
    %v4397 = vadd.f32 %v4365, 1e-05
    %v4398 = vadd.f32 %v4366, 1e-05
    %v4399 = vadd.f32 %v4367, 1e-05
    %v4400 = vadd.f32 %v4368, 1e-05
    %v4401 = vadd.f32 %v4369, 1e-05
    %v4402 = vadd.f32 %v4370, 1e-05
    %v4403 = vadd.f32 %v4371, 1e-05
    %v4404 = vadd.f32 %v4372, 1e-05
    %v4405 = vadd.f32 %v4373, 1e-05
    %v4406 = vadd.f32 %v4374, 1e-05
    %v4407 = vadd.f32 %v4375, 1e-05
    %v4408 = vadd.f32 %v4376, 1e-05
    %v4409 = vadd.f32 %v4377, 1e-05
    %v4410 = vadd.f32 %v4378, 1e-05
    %v4411 = vadd.f32 %v4379, 1e-05
    %v4412 = vadd.f32 %v4380, 1e-05
    %v4413 = vrsqrt.pop %v4397
    %v4414 = vmul.f32 %v4413, %v4397
    %v4415 = vmul.f32 %v4414, %v4413
    %v4416 = vmul.f32 0.5, %v4415
    %v4417 = vsub.f32 1.5, %v4416
    %v4418 = vmul.f32 %v4413, %v4417
    %vm4419 = vweird.f32 %v4397
    %vm4420 = vweird.f32 %v4413
    %vm4421 = vmor %vm4419, %vm4420
    %v4422 = vsel %vm4421, %v4413, %v4418
    %v4423 = vrsqrt.pop %v4398
    %v4424 = vmul.f32 %v4423, %v4398
    %v4425 = vmul.f32 %v4424, %v4423
    %v4426 = vmul.f32 0.5, %v4425
    %v4427 = vsub.f32 1.5, %v4426
    %v4428 = vmul.f32 %v4423, %v4427
    %vm4429 = vweird.f32 %v4398
    %vm4430 = vweird.f32 %v4423
    %vm4431 = vmor %vm4429, %vm4430
    %v4432 = vsel %vm4431, %v4423, %v4428
    %v4433 = vrsqrt.pop %v4399
    %v4434 = vmul.f32 %v4433, %v4399
    %v4435 = vmul.f32 %v4434, %v4433
    %v4436 = vmul.f32 0.5, %v4435
    %v4437 = vsub.f32 1.5, %v4436
    %v4438 = vmul.f32 %v4433, %v4437
    %vm4439 = vweird.f32 %v4399
    %vm4440 = vweird.f32 %v4433
    %vm4441 = vmor %vm4439, %vm4440
    %v4442 = vsel %vm4441, %v4433, %v4438
    %v4443 = vrsqrt.pop %v4400
    %v4444 = vmul.f32 %v4443, %v4400
    %v4445 = vmul.f32 %v4444, %v4443
    %v4446 = vmul.f32 0.5, %v4445
    %v4447 = vsub.f32 1.5, %v4446
    %v4448 = vmul.f32 %v4443, %v4447
    %vm4449 = vweird.f32 %v4400
    %vm4450 = vweird.f32 %v4443
    %vm4451 = vmor %vm4449, %vm4450
    %v4452 = vsel %vm4451, %v4443, %v4448
    %v4453 = vrsqrt.pop %v4401
    %v4454 = vmul.f32 %v4453, %v4401
    %v4455 = vmul.f32 %v4454, %v4453
    %v4456 = vmul.f32 0.5, %v4455
    %v4457 = vsub.f32 1.5, %v4456
    %v4458 = vmul.f32 %v4453, %v4457
    %vm4459 = vweird.f32 %v4401
    %vm4460 = vweird.f32 %v4453
    %vm4461 = vmor %vm4459, %vm4460
    %v4462 = vsel %vm4461, %v4453, %v4458
    %v4463 = vrsqrt.pop %v4402
    %v4464 = vmul.f32 %v4463, %v4402
    %v4465 = vmul.f32 %v4464, %v4463
    %v4466 = vmul.f32 0.5, %v4465
    %v4467 = vsub.f32 1.5, %v4466
    %v4468 = vmul.f32 %v4463, %v4467
    %vm4469 = vweird.f32 %v4402
    %vm4470 = vweird.f32 %v4463
    %vm4471 = vmor %vm4469, %vm4470
    %v4472 = vsel %vm4471, %v4463, %v4468
    %v4473 = vrsqrt.pop %v4403
    %v4474 = vmul.f32 %v4473, %v4403
    %v4475 = vmul.f32 %v4474, %v4473
    %v4476 = vmul.f32 0.5, %v4475
    %v4477 = vsub.f32 1.5, %v4476
    %v4478 = vmul.f32 %v4473, %v4477
    %vm4479 = vweird.f32 %v4403
    %vm4480 = vweird.f32 %v4473
    %vm4481 = vmor %vm4479, %vm4480
    %v4482 = vsel %vm4481, %v4473, %v4478
    %v4483 = vrsqrt.pop %v4404
    %v4484 = vmul.f32 %v4483, %v4404
    %v4485 = vmul.f32 %v4484, %v4483
    %v4486 = vmul.f32 0.5, %v4485
    %v4487 = vsub.f32 1.5, %v4486
    %v4488 = vmul.f32 %v4483, %v4487
    %vm4489 = vweird.f32 %v4404
    %vm4490 = vweird.f32 %v4483
    %vm4491 = vmor %vm4489, %vm4490
    %v4492 = vsel %vm4491, %v4483, %v4488
    %v4493 = vrsqrt.pop %v4405
    %v4494 = vmul.f32 %v4493, %v4405
    %v4495 = vmul.f32 %v4494, %v4493
    %v4496 = vmul.f32 0.5, %v4495
    %v4497 = vsub.f32 1.5, %v4496
    %v4498 = vmul.f32 %v4493, %v4497
    %vm4499 = vweird.f32 %v4405
    %vm4500 = vweird.f32 %v4493
    %vm4501 = vmor %vm4499, %vm4500
    %v4502 = vsel %vm4501, %v4493, %v4498
    %v4503 = vrsqrt.pop %v4406
    %v4504 = vmul.f32 %v4503, %v4406
    %v4505 = vmul.f32 %v4504, %v4503
    %v4506 = vmul.f32 0.5, %v4505
    %v4507 = vsub.f32 1.5, %v4506
    %v4508 = vmul.f32 %v4503, %v4507
    %vm4509 = vweird.f32 %v4406
    %vm4510 = vweird.f32 %v4503
    %vm4511 = vmor %vm4509, %vm4510
    %v4512 = vsel %vm4511, %v4503, %v4508
    %v4513 = vrsqrt.pop %v4407
    %v4514 = vmul.f32 %v4513, %v4407
    %v4515 = vmul.f32 %v4514, %v4513
    %v4516 = vmul.f32 0.5, %v4515
    %v4517 = vsub.f32 1.5, %v4516
    %v4518 = vmul.f32 %v4513, %v4517
    %vm4519 = vweird.f32 %v4407
    %vm4520 = vweird.f32 %v4513
    %vm4521 = vmor %vm4519, %vm4520
    %v4522 = vsel %vm4521, %v4513, %v4518
    %v4523 = vrsqrt.pop %v4408
    %v4524 = vmul.f32 %v4523, %v4408
    %v4525 = vmul.f32 %v4524, %v4523
    %v4526 = vmul.f32 0.5, %v4525
    %v4527 = vsub.f32 1.5, %v4526
    %v4528 = vmul.f32 %v4523, %v4527
    %vm4529 = vweird.f32 %v4408
    %vm4530 = vweird.f32 %v4523
    %vm4531 = vmor %vm4529, %vm4530
    %v4532 = vsel %vm4531, %v4523, %v4528
    %v4533 = vrsqrt.pop %v4409
    %v4534 = vmul.f32 %v4533, %v4409
    %v4535 = vmul.f32 %v4534, %v4533
    %v4536 = vmul.f32 0.5, %v4535
    %v4537 = vsub.f32 1.5, %v4536
    %v4538 = vmul.f32 %v4533, %v4537
    %vm4539 = vweird.f32 %v4409
    %vm4540 = vweird.f32 %v4533
    %vm4541 = vmor %vm4539, %vm4540
    %v4542 = vsel %vm4541, %v4533, %v4538
    %v4543 = vrsqrt.pop %v4410
    %v4544 = vmul.f32 %v4543, %v4410
    %v4545 = vmul.f32 %v4544, %v4543
    %v4546 = vmul.f32 0.5, %v4545
    %v4547 = vsub.f32 1.5, %v4546
    %v4548 = vmul.f32 %v4543, %v4547
    %vm4549 = vweird.f32 %v4410
    %vm4550 = vweird.f32 %v4543
    %vm4551 = vmor %vm4549, %vm4550
    %v4552 = vsel %vm4551, %v4543, %v4548
    %v4553 = vrsqrt.pop %v4411
    %v4554 = vmul.f32 %v4553, %v4411
    %v4555 = vmul.f32 %v4554, %v4553
    %v4556 = vmul.f32 0.5, %v4555
    %v4557 = vsub.f32 1.5, %v4556
    %v4558 = vmul.f32 %v4553, %v4557
    %vm4559 = vweird.f32 %v4411
    %vm4560 = vweird.f32 %v4553
    %vm4561 = vmor %vm4559, %vm4560
    %v4562 = vsel %vm4561, %v4553, %v4558
    %v4563 = vrsqrt.pop %v4412
    %v4564 = vmul.f32 %v4563, %v4412
    %v4565 = vmul.f32 %v4564, %v4563
    %v4566 = vmul.f32 0.5, %v4565
    %v4567 = vsub.f32 1.5, %v4566
    %v4568 = vmul.f32 %v4563, %v4567
    %vm4569 = vweird.f32 %v4412
    %vm4570 = vweird.f32 %v4563
    %vm4571 = vmor %vm4569, %vm4570
    %v4572 = vsel %vm4571, %v4563, %v4568
    %v4573 = vmul.f32 %v4381, %v4422
    %v4574 = vmul.f32 %v4382, %v4432
    %v4575 = vmul.f32 %v4383, %v4442
    %v4576 = vmul.f32 %v4384, %v4452
    %v4577 = vmul.f32 %v4385, %v4462
    %v4578 = vmul.f32 %v4386, %v4472
    %v4579 = vmul.f32 %v4387, %v4482
    %v4580 = vmul.f32 %v4388, %v4492
    %v4581 = vmul.f32 %v4389, %v4502
    %v4582 = vmul.f32 %v4390, %v4512
    %v4583 = vmul.f32 %v4391, %v4522
    %v4584 = vmul.f32 %v4392, %v4532
    %v4585 = vmul.f32 %v4393, %v4542
    %v4586 = vmul.f32 %v4394, %v4552
    %v4587 = vmul.f32 %v4395, %v4562
    %v4588 = vmul.f32 %v4396, %v4572
    %v4589 = vld [vmem:[%s6] sm:$0xff]
    %v4590 = vld [vmem:[%s6 + $0x8] sm:$0xff]
    %v4591 = vld [vmem:[%s6 + $0x10] sm:$0xff]
    %v4592 = vld [vmem:[%s6 + $0x18] sm:$0xff]
    %v4593 = vld [vmem:[%s6 + $0x20] sm:$0xff]
    %v4594 = vld [vmem:[%s6 + $0x28] sm:$0xff]
    %v4595 = vld [vmem:[%s6 + $0x30] sm:$0xff]
    %v4596 = vld [vmem:[%s6 + $0x38] sm:$0xff]
    %v4597 = vld [vmem:[%s6 + $0x40] sm:$0xff]
    %v4598 = vld [vmem:[%s6 + $0x48] sm:$0xff]
    %v4599 = vld [vmem:[%s6 + $0x50] sm:$0xff]
    %v4600 = vld [vmem:[%s6 + $0x58] sm:$0xff]
    %v4601 = vld [vmem:[%s6 + $0x60] sm:$0xff]
    %v4602 = vld [vmem:[%s6 + $0x68] sm:$0xff]
    %v4603 = vld [vmem:[%s6 + $0x70] sm:$0xff]
    %v4604 = vld [vmem:[%s6 + $0x78] sm:$0xff]
    %v4605 = vmul.f32 %v4317, %v4573
    %v4606 = vmul.f32 %v4318, %v4574
    %v4607 = vmul.f32 %v4319, %v4575
    %v4608 = vmul.f32 %v4320, %v4576
    %v4609 = vmul.f32 %v4321, %v4577
    %v4610 = vmul.f32 %v4322, %v4578
    %v4611 = vmul.f32 %v4323, %v4579
    %v4612 = vmul.f32 %v4324, %v4580
    %v4613 = vmul.f32 %v4325, %v4581
    %v4614 = vmul.f32 %v4326, %v4582
    %v4615 = vmul.f32 %v4327, %v4583
    %v4616 = vmul.f32 %v4328, %v4584
    %v4617 = vmul.f32 %v4329, %v4585
    %v4618 = vmul.f32 %v4330, %v4586
    %v4619 = vmul.f32 %v4331, %v4587
    %v4620 = vmul.f32 %v4332, %v4588
    %v4621 = vsub.f32 %v4589, %v4605
    %v4622 = vsub.f32 %v4590, %v4606
    %v4623 = vsub.f32 %v4591, %v4607
    %v4624 = vsub.f32 %v4592, %v4608
    %v4625 = vsub.f32 %v4593, %v4609
    %v4626 = vsub.f32 %v4594, %v4610
    %v4627 = vsub.f32 %v4595, %v4611
    %v4628 = vsub.f32 %v4596, %v4612
    %v4629 = vsub.f32 %v4597, %v4613
    %v4630 = vsub.f32 %v4598, %v4614
    %v4631 = vsub.f32 %v4599, %v4615
    %v4632 = vsub.f32 %v4600, %v4616
    %v4633 = vsub.f32 %v4601, %v4617
    %v4634 = vsub.f32 %v4602, %v4618
    %v4635 = vsub.f32 %v4603, %v4619
    %v4636 = vsub.f32 %v4604, %v4620
    %v4637 = vld [vmem:[#allocation2] sm:$0xff]
    %v4638 = vld [vmem:[#allocation2 + $0x8] sm:$0xff]
    %v4639 = vld [vmem:[#allocation2 + $0x10] sm:$0xff]
    %v4640 = vld [vmem:[#allocation2 + $0x18] sm:$0xff]
    %v4641 = vld [vmem:[#allocation2 + $0x20] sm:$0xff]
    %v4642 = vld [vmem:[#allocation2 + $0x28] sm:$0xff]
    %v4643 = vld [vmem:[#allocation2 + $0x30] sm:$0xff]
    %v4644 = vld [vmem:[#allocation2 + $0x38] sm:$0xff]
    %v4645 = vld [vmem:[#allocation2 + $0x40] sm:$0xff]
    %v4646 = vld [vmem:[#allocation2 + $0x48] sm:$0xff]
    %v4647 = vld [vmem:[#allocation2 + $0x50] sm:$0xff]
    %v4648 = vld [vmem:[#allocation2 + $0x58] sm:$0xff]
    %v4649 = vld [vmem:[#allocation2 + $0x60] sm:$0xff]
    %v4650 = vld [vmem:[#allocation2 + $0x68] sm:$0xff]
    %v4651 = vld [vmem:[#allocation2 + $0x70] sm:$0xff]
    %v4652 = vld [vmem:[#allocation2 + $0x78] sm:$0xff]
    %4654 = vset.pattern.permute.xlu0 0
    %4655 = vperm.xlu0 %4654, %v4573
    %v4656 = vpop.permute.xlu0 %4655
    %4659 = vset.pattern.permute.xlu0 0
    %4660 = vperm.xlu0 %4659, %v4574
    %v4661 = vpop.permute.xlu0 %4660
    %4664 = vset.pattern.permute.xlu0 0
    %4665 = vperm.xlu0 %4664, %v4575
    %v4666 = vpop.permute.xlu0 %4665
    %4669 = vset.pattern.permute.xlu0 0
    %4670 = vperm.xlu0 %4669, %v4576
    %v4671 = vpop.permute.xlu0 %4670
    %4674 = vset.pattern.permute.xlu0 0
    %4675 = vperm.xlu0 %4674, %v4577
    %v4676 = vpop.permute.xlu0 %4675
    %4679 = vset.pattern.permute.xlu0 0
    %4680 = vperm.xlu0 %4679, %v4578
    %v4681 = vpop.permute.xlu0 %4680
    %4684 = vset.pattern.permute.xlu0 0
    %4685 = vperm.xlu0 %4684, %v4579
    %v4686 = vpop.permute.xlu0 %4685
    %4689 = vset.pattern.permute.xlu0 0
    %4690 = vperm.xlu0 %4689, %v4580
    %v4691 = vpop.permute.xlu0 %4690
    %4694 = vset.pattern.permute.xlu0 0
    %4695 = vperm.xlu0 %4694, %v4581
    %v4696 = vpop.permute.xlu0 %4695
    %4699 = vset.pattern.permute.xlu0 0
    %4700 = vperm.xlu0 %4699, %v4582
    %v4701 = vpop.permute.xlu0 %4700
    %4704 = vset.pattern.permute.xlu0 0
    %4705 = vperm.xlu0 %4704, %v4583
    %v4706 = vpop.permute.xlu0 %4705
    %4709 = vset.pattern.permute.xlu0 0
    %4710 = vperm.xlu0 %4709, %v4584
    %v4711 = vpop.permute.xlu0 %4710
    %4714 = vset.pattern.permute.xlu0 0
    %4715 = vperm.xlu0 %4714, %v4585
    %v4716 = vpop.permute.xlu0 %4715
    %4719 = vset.pattern.permute.xlu0 0
    %4720 = vperm.xlu0 %4719, %v4586
    %v4721 = vpop.permute.xlu0 %4720
    %4724 = vset.pattern.permute.xlu0 0
    %4725 = vperm.xlu0 %4724, %v4587
    %v4726 = vpop.permute.xlu0 %4725
    %4729 = vset.pattern.permute.xlu0 0
    %4730 = vperm.xlu0 %4729, %v4588
    %v4731 = vpop.permute.xlu0 %4730
    %v4733 = vmul.f32 %v4637, %v4656
    %v4734 = vmul.f32 %v4638, %v4661
    %v4735 = vmul.f32 %v4639, %v4666
    %v4736 = vmul.f32 %v4640, %v4671
    %v4737 = vmul.f32 %v4641, %v4676
    %v4738 = vmul.f32 %v4642, %v4681
    %v4739 = vmul.f32 %v4643, %v4686
    %v4740 = vmul.f32 %v4644, %v4691
    %v4741 = vmul.f32 %v4645, %v4696
    %v4742 = vmul.f32 %v4646, %v4701
    %v4743 = vmul.f32 %v4647, %v4706
    %v4744 = vmul.f32 %v4648, %v4711
    %v4745 = vmul.f32 %v4649, %v4716
    %v4746 = vmul.f32 %v4650, %v4721
    %v4747 = vmul.f32 %v4651, %v4726
    %v4748 = vmul.f32 %v4652, %v4731
    %4750 = vset.pattern.permute.xlu0 0
    %4751 = vperm.xlu0 %4750, %v4621
    %v4752 = vpop.permute.xlu0 %4751
    %4755 = vset.pattern.permute.xlu0 0
    %4756 = vperm.xlu0 %4755, %v4622
    %v4757 = vpop.permute.xlu0 %4756
    %4760 = vset.pattern.permute.xlu0 0
    %4761 = vperm.xlu0 %4760, %v4623
    %v4762 = vpop.permute.xlu0 %4761
    %4765 = vset.pattern.permute.xlu0 0
    %4766 = vperm.xlu0 %4765, %v4624
    %v4767 = vpop.permute.xlu0 %4766
    %4770 = vset.pattern.permute.xlu0 0
    %4771 = vperm.xlu0 %4770, %v4625
    %v4772 = vpop.permute.xlu0 %4771
    %4775 = vset.pattern.permute.xlu0 0
    %4776 = vperm.xlu0 %4775, %v4626
    %v4777 = vpop.permute.xlu0 %4776
    %4780 = vset.pattern.permute.xlu0 0
    %4781 = vperm.xlu0 %4780, %v4627
    %v4782 = vpop.permute.xlu0 %4781
    %4785 = vset.pattern.permute.xlu0 0
    %4786 = vperm.xlu0 %4785, %v4628
    %v4787 = vpop.permute.xlu0 %4786
    %4790 = vset.pattern.permute.xlu0 0
    %4791 = vperm.xlu0 %4790, %v4629
    %v4792 = vpop.permute.xlu0 %4791
    %4795 = vset.pattern.permute.xlu0 0
    %4796 = vperm.xlu0 %4795, %v4630
    %v4797 = vpop.permute.xlu0 %4796
    %4800 = vset.pattern.permute.xlu0 0
    %4801 = vperm.xlu0 %4800, %v4631
    %v4802 = vpop.permute.xlu0 %4801
    %4805 = vset.pattern.permute.xlu0 0
    %4806 = vperm.xlu0 %4805, %v4632
    %v4807 = vpop.permute.xlu0 %4806
    %4810 = vset.pattern.permute.xlu0 0
    %4811 = vperm.xlu0 %4810, %v4633
    %v4812 = vpop.permute.xlu0 %4811
    %4815 = vset.pattern.permute.xlu0 0
    %4816 = vperm.xlu0 %4815, %v4634
    %v4817 = vpop.permute.xlu0 %4816
    %4820 = vset.pattern.permute.xlu0 0
    %4821 = vperm.xlu0 %4820, %v4635
    %v4822 = vpop.permute.xlu0 %4821
    %4825 = vset.pattern.permute.xlu0 0
    %4826 = vperm.xlu0 %4825, %v4636
    %v4827 = vpop.permute.xlu0 %4826
    %v4829 = vadd.f32 %v4733, %v4752
    %v4830 = vadd.f32 %v4734, %v4757
    %v4831 = vadd.f32 %v4735, %v4762
    %v4832 = vadd.f32 %v4736, %v4767
    %v4833 = vadd.f32 %v4737, %v4772
    %v4834 = vadd.f32 %v4738, %v4777
    %v4835 = vadd.f32 %v4739, %v4782
    %v4836 = vadd.f32 %v4740, %v4787
    %v4837 = vadd.f32 %v4741, %v4792
    %v4838 = vadd.f32 %v4742, %v4797
    %v4839 = vadd.f32 %v4743, %v4802
    %v4840 = vadd.f32 %v4744, %v4807
    %v4841 = vadd.f32 %v4745, %v4812
    %v4842 = vadd.f32 %v4746, %v4817
    %v4843 = vadd.f32 %v4747, %v4822
    %v4844 = vadd.f32 %v4748, %v4827
    %v4845 = vld [vmem:[%s0] sm:$0xff]
    %v4846 = vld [vmem:[%s0 + $0x8] sm:$0xff]
    %v4847 = vld [vmem:[%s0 + $0x10] sm:$0xff]
    %v4848 = vld [vmem:[%s0 + $0x18] sm:$0xff]
    %v4849 = vld [vmem:[%s0 + $0x20] sm:$0xff]
    %v4850 = vld [vmem:[%s0 + $0x28] sm:$0xff]
    %v4851 = vld [vmem:[%s0 + $0x30] sm:$0xff]
    %v4852 = vld [vmem:[%s0 + $0x38] sm:$0xff]
    %v4853 = vld [vmem:[%s0 + $0x40] sm:$0xff]
    %v4854 = vld [vmem:[%s0 + $0x48] sm:$0xff]
    %v4855 = vld [vmem:[%s0 + $0x50] sm:$0xff]
    %v4856 = vld [vmem:[%s0 + $0x58] sm:$0xff]
    %v4857 = vld [vmem:[%s0 + $0x60] sm:$0xff]
    %v4858 = vld [vmem:[%s0 + $0x68] sm:$0xff]
    %v4859 = vld [vmem:[%s0 + $0x70] sm:$0xff]
    %v4860 = vld [vmem:[%s0 + $0x78] sm:$0xff]
    %v4861 = vadd.f32 %v4829, %v4845
    %v4862 = vadd.f32 %v4830, %v4846
    %v4863 = vadd.f32 %v4831, %v4847
    %v4864 = vadd.f32 %v4832, %v4848
    %v4865 = vadd.f32 %v4833, %v4849
    %v4866 = vadd.f32 %v4834, %v4850
    %v4867 = vadd.f32 %v4835, %v4851
    %v4868 = vadd.f32 %v4836, %v4852
    %v4869 = vadd.f32 %v4837, %v4853
    %v4870 = vadd.f32 %v4838, %v4854
    %v4871 = vadd.f32 %v4839, %v4855
    %v4872 = vadd.f32 %v4840, %v4856
    %v4873 = vadd.f32 %v4841, %v4857
    %v4874 = vadd.f32 %v4842, %v4858
    %v4875 = vadd.f32 %v4843, %v4859
    %v4876 = vadd.f32 %v4844, %v4860
    %v4877 = vmax.f32 %v4861, 0.0
    %v4878 = vmax.f32 %v4862, 0.0
    %v4879 = vmax.f32 %v4863, 0.0
    %v4880 = vmax.f32 %v4864, 0.0
    %v4881 = vmax.f32 %v4865, 0.0
    %v4882 = vmax.f32 %v4866, 0.0
    %v4883 = vmax.f32 %v4867, 0.0
    %v4884 = vmax.f32 %v4868, 0.0
    %v4885 = vmax.f32 %v4869, 0.0
    %v4886 = vmax.f32 %v4870, 0.0
    %v4887 = vmax.f32 %v4871, 0.0
    %v4888 = vmax.f32 %v4872, 0.0
    %v4889 = vmax.f32 %v4873, 0.0
    %v4890 = vmax.f32 %v4874, 0.0
    %v4891 = vmax.f32 %v4875, 0.0
    %v4892 = vmax.f32 %v4876, 0.0
    %4893 = vst [vmem:[#allocation8] sm:$0xff] %v4877
    %4894 = vst [vmem:[#allocation8 + $0x8] sm:$0xff] %v4878
    %4895 = vst [vmem:[#allocation8 + $0x10] sm:$0xff] %v4879
    %4896 = vst [vmem:[#allocation8 + $0x18] sm:$0xff] %v4880
    %4897 = vst [vmem:[#allocation8 + $0x20] sm:$0xff] %v4881
    %4898 = vst [vmem:[#allocation8 + $0x28] sm:$0xff] %v4882
    %4899 = vst [vmem:[#allocation8 + $0x30] sm:$0xff] %v4883
    %4900 = vst [vmem:[#allocation8 + $0x38] sm:$0xff] %v4884
    %4901 = vst [vmem:[#allocation8 + $0x40] sm:$0xff] %v4885
    %4902 = vst [vmem:[#allocation8 + $0x48] sm:$0xff] %v4886
    %4903 = vst [vmem:[#allocation8 + $0x50] sm:$0xff] %v4887
    %4904 = vst [vmem:[#allocation8 + $0x58] sm:$0xff] %v4888
    %4905 = vst [vmem:[#allocation8 + $0x60] sm:$0xff] %v4889
    %4906 = vst [vmem:[#allocation8 + $0x68] sm:$0xff] %v4890
    %4907 = vst [vmem:[#allocation8 + $0x70] sm:$0xff] %v4891
    %4908 = vst [vmem:[#allocation8 + $0x78] sm:$0xff] %v4892
    %v4909 = vld [vmem:[%s902] sm:$0xff]
    %v4910 = vld [vmem:[%s902 + $0x8] sm:$0xff]
    %v4911 = vld [vmem:[%s902 + $0x10] sm:$0xff]
    %v4912 = vld [vmem:[%s902 + $0x18] sm:$0xff]
    %v4913 = vld [vmem:[%s902 + $0x20] sm:$0xff]
    %v4914 = vld [vmem:[%s902 + $0x28] sm:$0xff]
    %v4915 = vld [vmem:[%s902 + $0x30] sm:$0xff]
    %v4916 = vld [vmem:[%s902 + $0x38] sm:$0xff]
    %v4917 = vld [vmem:[%s902 + $0x40] sm:$0xff]
    %v4918 = vld [vmem:[%s902 + $0x48] sm:$0xff]
    %v4919 = vld [vmem:[%s902 + $0x50] sm:$0xff]
    %v4920 = vld [vmem:[%s902 + $0x58] sm:$0xff]
    %v4921 = vld [vmem:[%s902 + $0x60] sm:$0xff]
    %v4922 = vld [vmem:[%s902 + $0x68] sm:$0xff]
    %v4923 = vld [vmem:[%s902 + $0x70] sm:$0xff]
    %v4924 = vld [vmem:[%s902 + $0x78] sm:$0xff]
    %v4925 = vmul.f32 %v4909, %v4656
    %v4926 = vmul.f32 %v4910, %v4661
    %v4927 = vmul.f32 %v4911, %v4666
    %v4928 = vmul.f32 %v4912, %v4671
    %v4929 = vmul.f32 %v4913, %v4676
    %v4930 = vmul.f32 %v4914, %v4681
    %v4931 = vmul.f32 %v4915, %v4686
    %v4932 = vmul.f32 %v4916, %v4691
    %v4933 = vmul.f32 %v4917, %v4696
    %v4934 = vmul.f32 %v4918, %v4701
    %v4935 = vmul.f32 %v4919, %v4706
    %v4936 = vmul.f32 %v4920, %v4711
    %v4937 = vmul.f32 %v4921, %v4716
    %v4938 = vmul.f32 %v4922, %v4721
    %v4939 = vmul.f32 %v4923, %v4726
    %v4940 = vmul.f32 %v4924, %v4731
    %v4941 = vadd.f32 %v4925, %v4752
    %v4942 = vadd.f32 %v4926, %v4757
    %v4943 = vadd.f32 %v4927, %v4762
    %v4944 = vadd.f32 %v4928, %v4767
    %v4945 = vadd.f32 %v4929, %v4772
    %v4946 = vadd.f32 %v4930, %v4777
    %v4947 = vadd.f32 %v4931, %v4782
    %v4948 = vadd.f32 %v4932, %v4787
    %v4949 = vadd.f32 %v4933, %v4792
    %v4950 = vadd.f32 %v4934, %v4797
    %v4951 = vadd.f32 %v4935, %v4802
    %v4952 = vadd.f32 %v4936, %v4807
    %v4953 = vadd.f32 %v4937, %v4812
    %v4954 = vadd.f32 %v4938, %v4817
    %v4955 = vadd.f32 %v4939, %v4822
    %v4956 = vadd.f32 %v4940, %v4827
    %v4957 = vld [vmem:[%s594] sm:$0xff]
    %v4958 = vld [vmem:[%s594 + $0x8] sm:$0xff]
    %v4959 = vld [vmem:[%s594 + $0x10] sm:$0xff]
    %v4960 = vld [vmem:[%s594 + $0x18] sm:$0xff]
    %v4961 = vld [vmem:[%s594 + $0x20] sm:$0xff]
    %v4962 = vld [vmem:[%s594 + $0x28] sm:$0xff]
    %v4963 = vld [vmem:[%s594 + $0x30] sm:$0xff]
    %v4964 = vld [vmem:[%s594 + $0x38] sm:$0xff]
    %v4965 = vld [vmem:[%s594 + $0x40] sm:$0xff]
    %v4966 = vld [vmem:[%s594 + $0x48] sm:$0xff]
    %v4967 = vld [vmem:[%s594 + $0x50] sm:$0xff]
    %v4968 = vld [vmem:[%s594 + $0x58] sm:$0xff]
    %v4969 = vld [vmem:[%s594 + $0x60] sm:$0xff]
    %v4970 = vld [vmem:[%s594 + $0x68] sm:$0xff]
    %v4971 = vld [vmem:[%s594 + $0x70] sm:$0xff]
    %v4972 = vld [vmem:[%s594 + $0x78] sm:$0xff]
    %v4973 = vadd.f32 %v4941, %v4957
    %v4974 = vadd.f32 %v4942, %v4958
    %v4975 = vadd.f32 %v4943, %v4959
    %v4976 = vadd.f32 %v4944, %v4960
    %v4977 = vadd.f32 %v4945, %v4961
    %v4978 = vadd.f32 %v4946, %v4962
    %v4979 = vadd.f32 %v4947, %v4963
    %v4980 = vadd.f32 %v4948, %v4964
    %v4981 = vadd.f32 %v4949, %v4965
    %v4982 = vadd.f32 %v4950, %v4966
    %v4983 = vadd.f32 %v4951, %v4967
    %v4984 = vadd.f32 %v4952, %v4968
    %v4985 = vadd.f32 %v4953, %v4969
    %v4986 = vadd.f32 %v4954, %v4970
    %v4987 = vadd.f32 %v4955, %v4971
    %v4988 = vadd.f32 %v4956, %v4972
    %v4989 = vmax.f32 %v4973, 0.0
    %v4990 = vmax.f32 %v4974, 0.0
    %v4991 = vmax.f32 %v4975, 0.0
    %v4992 = vmax.f32 %v4976, 0.0
    %v4993 = vmax.f32 %v4977, 0.0
    %v4994 = vmax.f32 %v4978, 0.0
    %v4995 = vmax.f32 %v4979, 0.0
    %v4996 = vmax.f32 %v4980, 0.0
    %v4997 = vmax.f32 %v4981, 0.0
    %v4998 = vmax.f32 %v4982, 0.0
    %v4999 = vmax.f32 %v4983, 0.0
    %v5000 = vmax.f32 %v4984, 0.0
    %v5001 = vmax.f32 %v4985, 0.0
    %v5002 = vmax.f32 %v4986, 0.0
    %v5003 = vmax.f32 %v4987, 0.0
    %v5004 = vmax.f32 %v4988, 0.0
    %s5005 = scalar_lea.vmem [#allocation8], 128
    %5006 = vst [vmem:[%s5005] sm:$0xff] %v4989
    %5007 = vst [vmem:[%s5005 + $0x8] sm:$0xff] %v4990
    %5008 = vst [vmem:[%s5005 + $0x10] sm:$0xff] %v4991
    %5009 = vst [vmem:[%s5005 + $0x18] sm:$0xff] %v4992
    %5010 = vst [vmem:[%s5005 + $0x20] sm:$0xff] %v4993
    %5011 = vst [vmem:[%s5005 + $0x28] sm:$0xff] %v4994
    %5012 = vst [vmem:[%s5005 + $0x30] sm:$0xff] %v4995
    %5013 = vst [vmem:[%s5005 + $0x38] sm:$0xff] %v4996
    %5014 = vst [vmem:[%s5005 + $0x40] sm:$0xff] %v4997
    %5015 = vst [vmem:[%s5005 + $0x48] sm:$0xff] %v4998
    %5016 = vst [vmem:[%s5005 + $0x50] sm:$0xff] %v4999
    %5017 = vst [vmem:[%s5005 + $0x58] sm:$0xff] %v5000
    %5018 = vst [vmem:[%s5005 + $0x60] sm:$0xff] %v5001
    %5019 = vst [vmem:[%s5005 + $0x68] sm:$0xff] %v5002
    %5020 = vst [vmem:[%s5005 + $0x70] sm:$0xff] %v5003
    %5021 = vst [vmem:[%s5005 + $0x78] sm:$0xff] %v5004
    %v5022 = vld [vmem:[%s1339] sm:$0xff]
    %v5023 = vld [vmem:[%s1339 + $0x8] sm:$0xff]
    %v5024 = vld [vmem:[%s1339 + $0x10] sm:$0xff]
    %v5025 = vld [vmem:[%s1339 + $0x18] sm:$0xff]
    %v5026 = vld [vmem:[%s1339 + $0x20] sm:$0xff]
    %v5027 = vld [vmem:[%s1339 + $0x28] sm:$0xff]
    %v5028 = vld [vmem:[%s1339 + $0x30] sm:$0xff]
    %v5029 = vld [vmem:[%s1339 + $0x38] sm:$0xff]
    %v5030 = vld [vmem:[%s1339 + $0x40] sm:$0xff]
    %v5031 = vld [vmem:[%s1339 + $0x48] sm:$0xff]
    %v5032 = vld [vmem:[%s1339 + $0x50] sm:$0xff]
    %v5033 = vld [vmem:[%s1339 + $0x58] sm:$0xff]
    %v5034 = vld [vmem:[%s1339 + $0x60] sm:$0xff]
    %v5035 = vld [vmem:[%s1339 + $0x68] sm:$0xff]
    %v5036 = vld [vmem:[%s1339 + $0x70] sm:$0xff]
    %v5037 = vld [vmem:[%s1339 + $0x78] sm:$0xff]
    %v5038 = vmul.f32 %v5022, %v4656
    %v5039 = vmul.f32 %v5023, %v4661
    %v5040 = vmul.f32 %v5024, %v4666
    %v5041 = vmul.f32 %v5025, %v4671
    %v5042 = vmul.f32 %v5026, %v4676
    %v5043 = vmul.f32 %v5027, %v4681
    %v5044 = vmul.f32 %v5028, %v4686
    %v5045 = vmul.f32 %v5029, %v4691
    %v5046 = vmul.f32 %v5030, %v4696
    %v5047 = vmul.f32 %v5031, %v4701
    %v5048 = vmul.f32 %v5032, %v4706
    %v5049 = vmul.f32 %v5033, %v4711
    %v5050 = vmul.f32 %v5034, %v4716
    %v5051 = vmul.f32 %v5035, %v4721
    %v5052 = vmul.f32 %v5036, %v4726
    %v5053 = vmul.f32 %v5037, %v4731
    %v5054 = vadd.f32 %v5038, %v4752
    %v5055 = vadd.f32 %v5039, %v4757
    %v5056 = vadd.f32 %v5040, %v4762
    %v5057 = vadd.f32 %v5041, %v4767
    %v5058 = vadd.f32 %v5042, %v4772
    %v5059 = vadd.f32 %v5043, %v4777
    %v5060 = vadd.f32 %v5044, %v4782
    %v5061 = vadd.f32 %v5045, %v4787
    %v5062 = vadd.f32 %v5046, %v4792
    %v5063 = vadd.f32 %v5047, %v4797
    %v5064 = vadd.f32 %v5048, %v4802
    %v5065 = vadd.f32 %v5049, %v4807
    %v5066 = vadd.f32 %v5050, %v4812
    %v5067 = vadd.f32 %v5051, %v4817
    %v5068 = vadd.f32 %v5052, %v4822
    %v5069 = vadd.f32 %v5053, %v4827
    %v5070 = vld [vmem:[%s1031] sm:$0xff]
    %v5071 = vld [vmem:[%s1031 + $0x8] sm:$0xff]
    %v5072 = vld [vmem:[%s1031 + $0x10] sm:$0xff]
    %v5073 = vld [vmem:[%s1031 + $0x18] sm:$0xff]
    %v5074 = vld [vmem:[%s1031 + $0x20] sm:$0xff]
    %v5075 = vld [vmem:[%s1031 + $0x28] sm:$0xff]
    %v5076 = vld [vmem:[%s1031 + $0x30] sm:$0xff]
    %v5077 = vld [vmem:[%s1031 + $0x38] sm:$0xff]
    %v5078 = vld [vmem:[%s1031 + $0x40] sm:$0xff]
    %v5079 = vld [vmem:[%s1031 + $0x48] sm:$0xff]
    %v5080 = vld [vmem:[%s1031 + $0x50] sm:$0xff]
    %v5081 = vld [vmem:[%s1031 + $0x58] sm:$0xff]
    %v5082 = vld [vmem:[%s1031 + $0x60] sm:$0xff]
    %v5083 = vld [vmem:[%s1031 + $0x68] sm:$0xff]
    %v5084 = vld [vmem:[%s1031 + $0x70] sm:$0xff]
    %v5085 = vld [vmem:[%s1031 + $0x78] sm:$0xff]
    %v5086 = vadd.f32 %v5054, %v5070
    %v5087 = vadd.f32 %v5055, %v5071
    %v5088 = vadd.f32 %v5056, %v5072
    %v5089 = vadd.f32 %v5057, %v5073
    %v5090 = vadd.f32 %v5058, %v5074
    %v5091 = vadd.f32 %v5059, %v5075
    %v5092 = vadd.f32 %v5060, %v5076
    %v5093 = vadd.f32 %v5061, %v5077
    %v5094 = vadd.f32 %v5062, %v5078
    %v5095 = vadd.f32 %v5063, %v5079
    %v5096 = vadd.f32 %v5064, %v5080
    %v5097 = vadd.f32 %v5065, %v5081
    %v5098 = vadd.f32 %v5066, %v5082
    %v5099 = vadd.f32 %v5067, %v5083
    %v5100 = vadd.f32 %v5068, %v5084
    %v5101 = vadd.f32 %v5069, %v5085
    %v5102 = vmax.f32 %v5086, 0.0
    %v5103 = vmax.f32 %v5087, 0.0
    %v5104 = vmax.f32 %v5088, 0.0
    %v5105 = vmax.f32 %v5089, 0.0
    %v5106 = vmax.f32 %v5090, 0.0
    %v5107 = vmax.f32 %v5091, 0.0
    %v5108 = vmax.f32 %v5092, 0.0
    %v5109 = vmax.f32 %v5093, 0.0
    %v5110 = vmax.f32 %v5094, 0.0
    %v5111 = vmax.f32 %v5095, 0.0
    %v5112 = vmax.f32 %v5096, 0.0
    %v5113 = vmax.f32 %v5097, 0.0
    %v5114 = vmax.f32 %v5098, 0.0
    %v5115 = vmax.f32 %v5099, 0.0
    %v5116 = vmax.f32 %v5100, 0.0
    %v5117 = vmax.f32 %v5101, 0.0
    %s5118 = scalar_lea.vmem [#allocation8], 256
    %5119 = vst [vmem:[%s5118] sm:$0xff] %v5102
    %5120 = vst [vmem:[%s5118 + $0x8] sm:$0xff] %v5103
    %5121 = vst [vmem:[%s5118 + $0x10] sm:$0xff] %v5104
    %5122 = vst [vmem:[%s5118 + $0x18] sm:$0xff] %v5105
    %5123 = vst [vmem:[%s5118 + $0x20] sm:$0xff] %v5106
    %5124 = vst [vmem:[%s5118 + $0x28] sm:$0xff] %v5107
    %5125 = vst [vmem:[%s5118 + $0x30] sm:$0xff] %v5108
    %5126 = vst [vmem:[%s5118 + $0x38] sm:$0xff] %v5109
    %5127 = vst [vmem:[%s5118 + $0x40] sm:$0xff] %v5110
    %5128 = vst [vmem:[%s5118 + $0x48] sm:$0xff] %v5111
    %5129 = vst [vmem:[%s5118 + $0x50] sm:$0xff] %v5112
    %5130 = vst [vmem:[%s5118 + $0x58] sm:$0xff] %v5113
    %5131 = vst [vmem:[%s5118 + $0x60] sm:$0xff] %v5114
    %5132 = vst [vmem:[%s5118 + $0x68] sm:$0xff] %v5115
    %5133 = vst [vmem:[%s5118 + $0x70] sm:$0xff] %v5116
    %5134 = vst [vmem:[%s5118 + $0x78] sm:$0xff] %v5117
    %v5135 = vld [vmem:[%s1776] sm:$0xff]
    %v5136 = vld [vmem:[%s1776 + $0x8] sm:$0xff]
    %v5137 = vld [vmem:[%s1776 + $0x10] sm:$0xff]
    %v5138 = vld [vmem:[%s1776 + $0x18] sm:$0xff]
    %v5139 = vld [vmem:[%s1776 + $0x20] sm:$0xff]
    %v5140 = vld [vmem:[%s1776 + $0x28] sm:$0xff]
    %v5141 = vld [vmem:[%s1776 + $0x30] sm:$0xff]
    %v5142 = vld [vmem:[%s1776 + $0x38] sm:$0xff]
    %v5143 = vld [vmem:[%s1776 + $0x40] sm:$0xff]
    %v5144 = vld [vmem:[%s1776 + $0x48] sm:$0xff]
    %v5145 = vld [vmem:[%s1776 + $0x50] sm:$0xff]
    %v5146 = vld [vmem:[%s1776 + $0x58] sm:$0xff]
    %v5147 = vld [vmem:[%s1776 + $0x60] sm:$0xff]
    %v5148 = vld [vmem:[%s1776 + $0x68] sm:$0xff]
    %v5149 = vld [vmem:[%s1776 + $0x70] sm:$0xff]
    %v5150 = vld [vmem:[%s1776 + $0x78] sm:$0xff]
    %v5151 = vmul.f32 %v5135, %v4656
    %v5152 = vmul.f32 %v5136, %v4661
    %v5153 = vmul.f32 %v5137, %v4666
    %v5154 = vmul.f32 %v5138, %v4671
    %v5155 = vmul.f32 %v5139, %v4676
    %v5156 = vmul.f32 %v5140, %v4681
    %v5157 = vmul.f32 %v5141, %v4686
    %v5158 = vmul.f32 %v5142, %v4691
    %v5159 = vmul.f32 %v5143, %v4696
    %v5160 = vmul.f32 %v5144, %v4701
    %v5161 = vmul.f32 %v5145, %v4706
    %v5162 = vmul.f32 %v5146, %v4711
    %v5163 = vmul.f32 %v5147, %v4716
    %v5164 = vmul.f32 %v5148, %v4721
    %v5165 = vmul.f32 %v5149, %v4726
    %v5166 = vmul.f32 %v5150, %v4731
    %v5167 = vadd.f32 %v5151, %v4752
    %v5168 = vadd.f32 %v5152, %v4757
    %v5169 = vadd.f32 %v5153, %v4762
    %v5170 = vadd.f32 %v5154, %v4767
    %v5171 = vadd.f32 %v5155, %v4772
    %v5172 = vadd.f32 %v5156, %v4777
    %v5173 = vadd.f32 %v5157, %v4782
    %v5174 = vadd.f32 %v5158, %v4787
    %v5175 = vadd.f32 %v5159, %v4792
    %v5176 = vadd.f32 %v5160, %v4797
    %v5177 = vadd.f32 %v5161, %v4802
    %v5178 = vadd.f32 %v5162, %v4807
    %v5179 = vadd.f32 %v5163, %v4812
    %v5180 = vadd.f32 %v5164, %v4817
    %v5181 = vadd.f32 %v5165, %v4822
    %v5182 = vadd.f32 %v5166, %v4827
    %v5183 = vld [vmem:[%s1468] sm:$0xff]
    %v5184 = vld [vmem:[%s1468 + $0x8] sm:$0xff]
    %v5185 = vld [vmem:[%s1468 + $0x10] sm:$0xff]
    %v5186 = vld [vmem:[%s1468 + $0x18] sm:$0xff]
    %v5187 = vld [vmem:[%s1468 + $0x20] sm:$0xff]
    %v5188 = vld [vmem:[%s1468 + $0x28] sm:$0xff]
    %v5189 = vld [vmem:[%s1468 + $0x30] sm:$0xff]
    %v5190 = vld [vmem:[%s1468 + $0x38] sm:$0xff]
    %v5191 = vld [vmem:[%s1468 + $0x40] sm:$0xff]
    %v5192 = vld [vmem:[%s1468 + $0x48] sm:$0xff]
    %v5193 = vld [vmem:[%s1468 + $0x50] sm:$0xff]
    %v5194 = vld [vmem:[%s1468 + $0x58] sm:$0xff]
    %v5195 = vld [vmem:[%s1468 + $0x60] sm:$0xff]
    %v5196 = vld [vmem:[%s1468 + $0x68] sm:$0xff]
    %v5197 = vld [vmem:[%s1468 + $0x70] sm:$0xff]
    %v5198 = vld [vmem:[%s1468 + $0x78] sm:$0xff]
    %v5199 = vadd.f32 %v5167, %v5183
    %v5200 = vadd.f32 %v5168, %v5184
    %v5201 = vadd.f32 %v5169, %v5185
    %v5202 = vadd.f32 %v5170, %v5186
    %v5203 = vadd.f32 %v5171, %v5187
    %v5204 = vadd.f32 %v5172, %v5188
    %v5205 = vadd.f32 %v5173, %v5189
    %v5206 = vadd.f32 %v5174, %v5190
    %v5207 = vadd.f32 %v5175, %v5191
    %v5208 = vadd.f32 %v5176, %v5192
    %v5209 = vadd.f32 %v5177, %v5193
    %v5210 = vadd.f32 %v5178, %v5194
    %v5211 = vadd.f32 %v5179, %v5195
    %v5212 = vadd.f32 %v5180, %v5196
    %v5213 = vadd.f32 %v5181, %v5197
    %v5214 = vadd.f32 %v5182, %v5198
    %v5215 = vmax.f32 %v5199, 0.0
    %v5216 = vmax.f32 %v5200, 0.0
    %v5217 = vmax.f32 %v5201, 0.0
    %v5218 = vmax.f32 %v5202, 0.0
    %v5219 = vmax.f32 %v5203, 0.0
    %v5220 = vmax.f32 %v5204, 0.0
    %v5221 = vmax.f32 %v5205, 0.0
    %v5222 = vmax.f32 %v5206, 0.0
    %v5223 = vmax.f32 %v5207, 0.0
    %v5224 = vmax.f32 %v5208, 0.0
    %v5225 = vmax.f32 %v5209, 0.0
    %v5226 = vmax.f32 %v5210, 0.0
    %v5227 = vmax.f32 %v5211, 0.0
    %v5228 = vmax.f32 %v5212, 0.0
    %v5229 = vmax.f32 %v5213, 0.0
    %v5230 = vmax.f32 %v5214, 0.0
    %s5231 = scalar_lea.vmem [#allocation8], 384
    %5232 = vst [vmem:[%s5231] sm:$0xff] %v5215
    %5233 = vst [vmem:[%s5231 + $0x8] sm:$0xff] %v5216
    %5234 = vst [vmem:[%s5231 + $0x10] sm:$0xff] %v5217
    %5235 = vst [vmem:[%s5231 + $0x18] sm:$0xff] %v5218
    %5236 = vst [vmem:[%s5231 + $0x20] sm:$0xff] %v5219
    %5237 = vst [vmem:[%s5231 + $0x28] sm:$0xff] %v5220
    %5238 = vst [vmem:[%s5231 + $0x30] sm:$0xff] %v5221
    %5239 = vst [vmem:[%s5231 + $0x38] sm:$0xff] %v5222
    %5240 = vst [vmem:[%s5231 + $0x40] sm:$0xff] %v5223
    %5241 = vst [vmem:[%s5231 + $0x48] sm:$0xff] %v5224
    %5242 = vst [vmem:[%s5231 + $0x50] sm:$0xff] %v5225
    %5243 = vst [vmem:[%s5231 + $0x58] sm:$0xff] %v5226
    %5244 = vst [vmem:[%s5231 + $0x60] sm:$0xff] %v5227
    %5245 = vst [vmem:[%s5231 + $0x68] sm:$0xff] %v5228
    %5246 = vst [vmem:[%s5231 + $0x70] sm:$0xff] %v5229
    %5247 = vst [vmem:[%s5231 + $0x78] sm:$0xff] %v5230
    // Predicated region
    $region38: #{tpu_custom_call.1} parent=1 // pred_check
      _
    $region39: #{tpu_custom_call.1} parent=1 // pred_check_branch
      %5249 = sbr.rel (0) target = $region41
    $region40: #{tpu_custom_call.1} parent=1 // pred_region
      %5251 = vsyncadd [#allocation5], 0
      %s5252 = sshll.u32 [#allocation8], 4
      %s5253 = int_to_ptr.vmem [resolvable:$true] %s5252
      %s5254 = sshll.u32 %s7, 4
      %s5255 = int_to_ptr.hbm [resolvable:$true] %s5254
      %5260 = dma.vmem_to_hbm [thread:$0]  %s5253, 8192, %s5255, [#allocation5], 128, 128, 8
    $region41: #{tpu_custom_call.1} parent=1 // pred_fallthru
      _
    // Predicated region
    $region42: #{tpu_custom_call.1} parent=1 // pred_check
      _
    $region43: #{tpu_custom_call.1} parent=1 // pred_check_branch
      %5262 = sbr.rel (0) target = $region45
    $region44: #{tpu_custom_call.1} parent=1 // pred_region
      %5264 = dma.done [#allocation5], 8192
    $region45: #{tpu_custom_call.1} parent=1 // pred_fallthru
      _
    %5265 = vsyncpa [#allocation4], 1
    %5266 = vsyncpa [#allocation7], 1
    %5267 = vsyncpa [#allocation5], 1

</llo_original>
